<compile_context>
chip_gen: v6e
topology: v6e:2x2x1
jax: 0.10.0
libtpu: 0.0.40
codegen_flags: <defaults>
</compile_context>

<pallas_src>
import math

import jax
import jax.numpy as jnp
import numpy as np
from jax import lax
from jax.experimental import pallas as pl
from jax.experimental.pallas import tpu as pltpu

EPS = 1e-5


def _layer_norm(h, g, b):
    mu = jnp.mean(h, axis=-1, keepdims=True)
    var = jnp.mean((h - mu) ** 2, axis=-1, keepdims=True)
    return (h - mu) * lax.rsqrt(var + EPS) * g + b


# ----------------------------------------------------------------------------
# Single fused kernel: attention block + node post-block + edge post-block.
# Grid tiles the query-node axis "i"; K/V source rows and all weights stay
# resident (full blocks).
# ----------------------------------------------------------------------------
def _fused_layer_kernel(
        xt_ref, xf_ref, e_ref,
        wq_ref, bq_ref, wkv_ref, bkv_ref, we12_ref, be12_ref,
        weout_ref, beout_ref, wxout_ref, bxout_ref,
        xg1_ref, xbe1_ref, wx1_ref, bx1_ref, wx2_ref, bx2_ref, xg2_ref, xbe2_ref,
        eg1_ref, ebe1_ref, we1_ref, be1_ref, we2_ref, be2_ref, eg2_ref, ebe2_ref,
        xo_ref, eo_ref):
    xt = xt_ref[...]                      # (TI, xdim)   query rows of this step
    xf = xf_ref[...]                      # (N, xdim)    all rows (for K/V)
    et = e_ref[...]                       # (TI*N, edim) edge rows of this step
    TI, xdim = xt.shape
    N = xf.shape[0]

    # --- projections: Q on the tile; K|V fused into one matmul on full x ----
    Qt = jnp.dot(xt, wq_ref[...], preferred_element_type=jnp.float32) + bq_ref[...]
    kv = jnp.dot(xf, wkv_ref[...], preferred_element_type=jnp.float32) + bkv_ref[...]
    Ks = kv[:, :xdim]                     # K already pre-scaled by 1/sqrt(df)
    V = kv[:, xdim:]

    # --- edge conditioning: single matmul producing [E1+1 | E2] -------------
    e12 = jnp.dot(et, we12_ref[...], preferred_element_type=jnp.float32) + be12_ref[...]
    E1p = e12[:, :xdim]                   # E1 + 1  (the "+1" is folded into the bias)
    E2 = e12[:, xdim:]

    # per-head outer product == elementwise product over the flat channel axis
    Ybase = (Qt[:, None, :] * Ks[None, :, :]).reshape(TI * N, xdim)
    Y = Ybase * E1p + E2                  # (TI*N, xdim)

    newE = jnp.dot(Y, weout_ref[...], preferred_element_type=jnp.float32) + beout_ref[...]

    # --- softmax over the key-node axis j, independently per (i, channel) ---
    Y3 = Y.reshape(TI, N, xdim)
    m = jnp.max(Y3, axis=1, keepdims=True)
    p = jnp.exp(Y3 - m)
    denom = jnp.sum(p, axis=1)                            # (TI, xdim)
    wV = jnp.sum(p * V[None, :, :], axis=1) / denom       # divide on the small tensor
    newX = jnp.dot(wV, wxout_ref[...], preferred_element_type=jnp.float32) + bxout_ref[...]

    # --- node post-block: residual + LN + FFN(ReLU) + residual + LN ---------
    x1 = _layer_norm(xt + newX, xg1_ref[...], xbe1_ref[...])
    ffx = jnp.maximum(
        jnp.dot(x1, wx1_ref[...], preferred_element_type=jnp.float32) + bx1_ref[...], 0.0)
    ffx = jnp.dot(ffx, wx2_ref[...], preferred_element_type=jnp.float32) + bx2_ref[...]
    xo_ref[...] = _layer_norm(x1 + ffx, xg2_ref[...], xbe2_ref[...])

    # --- edge post-block ------------------------------------------------------
    e1 = _layer_norm(et + newE, eg1_ref[...], ebe1_ref[...])
    ffe = jnp.maximum(
        jnp.dot(e1, we1_ref[...], preferred_element_type=jnp.float32) + be1_ref[...], 0.0)
    ffe = jnp.dot(ffe, we2_ref[...], preferred_element_type=jnp.float32) + be2_ref[...]
    eo_ref[...] = _layer_norm(e1 + ffe, eg2_ref[...], ebe2_ref[...])


# ----------------------------------------------------------------------------
# Offline parameter fusion / constant folding (done once, not per forward).
# ----------------------------------------------------------------------------
def prepare_fused_params(params, n_head):
    xdim = params['wq'].shape[0]
    df = xdim // n_head
    scale = 1.0 / math.sqrt(df)
    fp = dict(params)
    # K|V merged; 1/sqrt(df) baked into the K half so the kernel drops "* scale"
    fp['w_kv'] = jnp.concatenate([params['wk'] * scale, params['wv']], axis=1)
    fp['b_kv'] = jnp.concatenate([params['bk'] * scale, params['bv']], axis=1)
    # e_mul|e_add merged; "+1" baked into the e_mul bias so "(E1 + 1)" disappears
    fp['w_e12'] = jnp.concatenate([params['w_emul'], params['w_eadd']], axis=1)
    fp['b_e12'] = jnp.concatenate([params['b_emul'] + 1.0, params['b_eadd']], axis=1)
    return fp


# ----------------------------------------------------------------------------
# Layer forward (single pallas_call).
# ----------------------------------------------------------------------------
def topo_graph_transformer_layer(x, e, adj, fused_params, n_head, num_tiles=2):
    del adj, n_head  # adj unused by the reference forward; scale already folded
    N, xdim = x.shape
    edim = e.shape[-1]
    p = fused_params

    assert N % num_tiles == 0, "query tiling must divide N exactly"
    ti = N // num_tiles
    assert ti == N or ti % 8 == 0, "query tile must respect (8,128) sublane tiling"

    e2d = e.reshape(N * N, edim)          # 2-D edge layout end-to-end
    dim_ffX = p['w_x1'].shape[1]
    dim_ffE = p['w_e1'].shape[1]          # == edim (linE2 typecheck quirk)

    full2 = lambda i: (0, 0)
    rows = lambda i: (i, 0)

    in_specs = [
        pl.BlockSpec((ti, xdim), rows),                                          # x tile
        pl.BlockSpec((N, xdim), full2),                                          # x full
        pl.BlockSpec((ti * N, edim), rows),                                      # e tile (2-D)
        pl.BlockSpec((xdim, xdim), full2), pl.BlockSpec((1, xdim), full2),       # q
        pl.BlockSpec((xdim, 2 * xdim), full2), pl.BlockSpec((1, 2 * xdim), full2),   # k|v
        pl.BlockSpec((edim, 2 * xdim), full2), pl.BlockSpec((1, 2 * xdim), full2),   # e_mul|e_add
        pl.BlockSpec((xdim, edim), full2), pl.BlockSpec((1, edim), full2),       # e_out
        pl.BlockSpec((xdim, xdim), full2), pl.BlockSpec((1, xdim), full2),       # x_out
        pl.BlockSpec((1, xdim), full2), pl.BlockSpec((1, xdim), full2),          # normX1
        pl.BlockSpec((xdim, dim_ffX), full2), pl.BlockSpec((1, dim_ffX), full2), # linX1
        pl.BlockSpec((dim_ffX, xdim), full2), pl.BlockSpec((1, xdim), full2),    # linX2
        pl.BlockSpec((1, xdim), full2), pl.BlockSpec((1, xdim), full2),          # normX2
        pl.BlockSpec((1, edim), full2), pl.BlockSpec((1, edim), full2),          # normE1
        pl.BlockSpec((edim, dim_ffE), full2), pl.BlockSpec((1, dim_ffE), full2), # linE1
        pl.BlockSpec((dim_ffE, edim), full2), pl.BlockSpec((1, edim), full2),    # linE2
        pl.BlockSpec((1, edim), full2), pl.BlockSpec((1, edim), full2),          # normE2
    ]
    out_specs = (pl.BlockSpec((ti, xdim), rows),
                 pl.BlockSpec((ti * N, edim), rows))
    out_shape = (jax.ShapeDtypeStruct((N, xdim), jnp.float32),
                 jax.ShapeDtypeStruct((N * N, edim), jnp.float32))

    X, E2d = pl.pallas_call(
        _fused_layer_kernel,
        out_shape=out_shape,
        grid=(num_tiles,),
        in_specs=in_specs,
        out_specs=out_specs,
        compiler_params=pltpu.CompilerParams(
            dimension_semantics=("parallel",)),   # 2 steps -> both TCs on v7x
    )(x, x, e2d,
      p['wq'], p['bq'], p['w_kv'], p['b_kv'], p['w_e12'], p['b_e12'],
      p['w_eout'], p['b_eout'], p['w_xout'], p['b_xout'],
      p['x_g1'], p['x_be1'], p['w_x1'], p['b_x1'], p['w_x2'], p['b_x2'],
      p['x_g2'], p['x_be2'],
      p['e_g1'], p['e_be1'], p['w_e1'], p['b_e1'], p['w_e2'], p['b_e2'],
      p['e_g2'], p['e_be2'])
    return X, E2d.reshape(N, N, edim)


# ----------------------------------------------------------------------------
# Pure-JAX reference (mirrors the PyTorch forward, eval mode) for validation.
# ----------------------------------------------------------------------------
def reference_forward(x, e, params, n_head):
    p = params
    N, xdim = x.shape
    edim = e.shape[-1]
    df = xdim // n_head

    Q = x @ p['wq'] + p['bq']
    K = x @ p['wk'] + p['bk']
    V = x @ p['wv'] + p['bv']
    Qh = Q.reshape(N, n_head, df)[:, None]
    Kh = K.reshape(N, n_head, df)[None]
    Y = Qh * Kh / math.sqrt(df)
    E1 = (e @ p['w_emul'] + p['b_emul']).reshape(N, N, n_head, df)
    E2 = (e @ p['w_eadd'] + p['b_eadd']).reshape(N, N, n_head, df)
    Y = Y * (E1 + 1.0) + E2
    newE = Y.reshape(N, N, xdim) @ p['w_eout'] + p['b_eout']
    attn = jax.nn.softmax(Y, axis=1)
    Vh = V.reshape(N, n_head, df)[None]
    wV = jnp.sum(attn * Vh, axis=1).reshape(N, xdim)
    newX = wV @ p['w_xout'] + p['b_xout']

    def ln(h, g, b):
        mu = jnp.mean(h, axis=-1, keepdims=True)
        var = jnp.mean((h - mu) ** 2, axis=-1, keepdims=True)
        return (h - mu) * jax.lax.rsqrt(var + EPS) * g + b

    x1 = ln(x + newX, p['x_g1'], p['x_be1'])
    ffx = jnp.maximum(x1 @ p['w_x1'] + p['b_x1'], 0.0) @ p['w_x2'] + p['b_x2']
    X = ln(x1 + ffx, p['x_g2'], p['x_be2'])

    e1 = ln(e + newE, p['e_g1'], p['e_be1'])
    ffe = jnp.maximum(e1 @ p['w_e1'] + p['b_e1'], 0.0) @ p['w_e2'] + p['b_e2']
    E = ln(e1 + ffe, p['e_g2'], p['e_be2'])
    return X, E


# ----------------------------------------------------------------------------
# Deterministic parameter construction (weights stored as (in, out)).
# ----------------------------------------------------------------------------
def init_params(key, xdim, edim, dim_ffX, dim_ffE):
    keys = jax.random.split(key, 32)
    it = iter(keys)

    def lin(din, dout):
        w = 0.1 * jax.random.normal(next(it), (din, dout), jnp.float32)
        b = 0.1 * jax.random.normal(next(it), (1, dout), jnp.float32)
        return w, b

    def lnp(d):
        g = 1.0 + 0.1 * jax.random.normal(next(it), (1, d), jnp.float32)
        b = 0.1 * jax.random.normal(next(it), (1, d), jnp.float32)
        return g, b

    p = {}
    p['wq'], p['bq'] = lin(xdim, xdim)
    p['wk'], p['bk'] = lin(xdim, xdim)
    p['wv'], p['bv'] = lin(xdim, xdim)
    p['w_emul'], p['b_emul'] = lin(edim, xdim)
    p['w_eadd'], p['b_eadd'] = lin(edim, xdim)
    p['w_eout'], p['b_eout'] = lin(xdim, edim)
    p['w_xout'], p['b_xout'] = lin(xdim, xdim)
    p['x_g1'], p['x_be1'] = lnp(xdim)
    p['x_g2'], p['x_be2'] = lnp(xdim)
    p['w_x1'], p['b_x1'] = lin(xdim, dim_ffX)
    p['w_x2'], p['b_x2'] = lin(dim_ffX, xdim)
    p['e_g1'], p['e_be1'] = lnp(edim)
    p['e_g2'], p['e_be2'] = lnp(edim)
    p['w_e1'], p['b_e1'] = lin(edim, dim_ffE)
    p['w_e2'], p['b_e2'] = lin(dim_ffE, edim)  # linE2 (requires dim_ffE == edim)
    return p


if __name__ == "__main__":
    # config: T_GTN_x_hiddim=32, T_GTN_e_hiddim=16, GTN_n_head=4,
    #         T_GTN_dim_ffX=64, T_GTN_dim_ffE=16 (== edim, see note above)
    N, xdim, edim, n_head = 16, 32, 16, 4
    dim_ffX, dim_ffE = 64, 16

    key = jax.random.PRNGKey(0)
    kx, ke, kp = jax.random.split(key, 3)
    x = jax.random.normal(kx, (N, xdim), jnp.float32)
    e = jax.random.normal(ke, (N, N, edim), jnp.float32)
    adj = jnp.ones((N, N), jnp.float32)  # unused by forward (matches PyTorch)

    params = init_params(kp, xdim, edim, dim_ffX, dim_ffE)
    fused_params = prepare_fused_params(params, n_head)   # offline constant folding

    # TODO(synk): Dropout layers are identity here (eval mode); training-mode
    # dropout is not implemented.
    X, E = topo_graph_transformer_layer(x, e, adj, fused_params, n_head, num_tiles=2)
    X = jax.block_until_ready(X)
    E = jax.block_until_ready(E)

    X_ref, E_ref = reference_forward(x, e, params, n_head)
    np.testing.assert_allclose(np.asarray(X), np.asarray(X_ref), rtol=1e-4, atol=1e-4)
    np.testing.assert_allclose(np.asarray(E), np.asarray(E_ref), rtol=1e-4, atol=1e-4)

    print("KERNEL_OK")
</pallas_src>

<mosaic_0001>
module attributes {stable_mosaic.version = 11 : i64} {
  func.func @_fused_layer_kernel(%arg0: i32, %arg1: memref<8x32xf32, #tpu.memory_space<vmem>>, %arg2: memref<16x32xf32, #tpu.memory_space<vmem>>, %arg3: memref<128x16xf32, #tpu.memory_space<vmem>>, %arg4: memref<32x32xf32, #tpu.memory_space<vmem>>, %arg5: memref<1x32xf32, #tpu.memory_space<vmem>>, %arg6: memref<32x64xf32, #tpu.memory_space<vmem>>, %arg7: memref<1x64xf32, #tpu.memory_space<vmem>>, %arg8: memref<16x64xf32, #tpu.memory_space<vmem>>, %arg9: memref<1x64xf32, #tpu.memory_space<vmem>>, %arg10: memref<32x16xf32, #tpu.memory_space<vmem>>, %arg11: memref<1x16xf32, #tpu.memory_space<vmem>>, %arg12: memref<32x32xf32, #tpu.memory_space<vmem>>, %arg13: memref<1x32xf32, #tpu.memory_space<vmem>>, %arg14: memref<1x32xf32, #tpu.memory_space<vmem>>, %arg15: memref<1x32xf32, #tpu.memory_space<vmem>>, %arg16: memref<32x64xf32, #tpu.memory_space<vmem>>, %arg17: memref<1x64xf32, #tpu.memory_space<vmem>>, %arg18: memref<64x32xf32, #tpu.memory_space<vmem>>, %arg19: memref<1x32xf32, #tpu.memory_space<vmem>>, %arg20: memref<1x32xf32, #tpu.memory_space<vmem>>, %arg21: memref<1x32xf32, #tpu.memory_space<vmem>>, %arg22: memref<1x16xf32, #tpu.memory_space<vmem>>, %arg23: memref<1x16xf32, #tpu.memory_space<vmem>>, %arg24: memref<16x16xf32, #tpu.memory_space<vmem>>, %arg25: memref<1x16xf32, #tpu.memory_space<vmem>>, %arg26: memref<16x16xf32, #tpu.memory_space<vmem>>, %arg27: memref<1x16xf32, #tpu.memory_space<vmem>>, %arg28: memref<1x16xf32, #tpu.memory_space<vmem>>, %arg29: memref<1x16xf32, #tpu.memory_space<vmem>>, %arg30: memref<8x32xf32, #tpu.memory_space<vmem>>, %arg31: memref<128x16xf32, #tpu.memory_space<vmem>>) attributes {dimension_semantics = [#tpu.dimension_semantics<parallel>], iteration_bounds = array<i64: 2>, scalar_prefetch = 0 : i64, scratch_operands = 0 : i64, tpu.core_type = #tpu.core_type<tc>, window_params = [{transform_indices = @transform_0, window_bounds = array<i64: 8, 32>}, {pipeline_mode = #tpu.pipeline_mode<synchronous>, transform_indices = @transform_1, window_bounds = array<i64: 16, 32>}, {transform_indices = @transform_2, window_bounds = array<i64: 128, 16>}, {pipeline_mode = #tpu.pipeline_mode<synchronous>, transform_indices = @transform_3, window_bounds = array<i64: 32, 32>}, {pipeline_mode = #tpu.pipeline_mode<synchronous>, transform_indices = @transform_4, window_bounds = array<i64: 1, 32>}, {pipeline_mode = #tpu.pipeline_mode<synchronous>, transform_indices = @transform_5, window_bounds = array<i64: 32, 64>}, {pipeline_mode = #tpu.pipeline_mode<synchronous>, transform_indices = @transform_6, window_bounds = array<i64: 1, 64>}, {pipeline_mode = #tpu.pipeline_mode<synchronous>, transform_indices = @transform_7, window_bounds = array<i64: 16, 64>}, {pipeline_mode = #tpu.pipeline_mode<synchronous>, transform_indices = @transform_8, window_bounds = array<i64: 1, 64>}, {pipeline_mode = #tpu.pipeline_mode<synchronous>, transform_indices = @transform_9, window_bounds = array<i64: 32, 16>}, {pipeline_mode = #tpu.pipeline_mode<synchronous>, transform_indices = @transform_10, window_bounds = array<i64: 1, 16>}, {pipeline_mode = #tpu.pipeline_mode<synchronous>, transform_indices = @transform_11, window_bounds = array<i64: 32, 32>}, {pipeline_mode = #tpu.pipeline_mode<synchronous>, transform_indices = @transform_12, window_bounds = array<i64: 1, 32>}, {pipeline_mode = #tpu.pipeline_mode<synchronous>, transform_indices = @transform_13, window_bounds = array<i64: 1, 32>}, {pipeline_mode = #tpu.pipeline_mode<synchronous>, transform_indices = @transform_14, window_bounds = array<i64: 1, 32>}, {pipeline_mode = #tpu.pipeline_mode<synchronous>, transform_indices = @transform_15, window_bounds = array<i64: 32, 64>}, {pipeline_mode = #tpu.pipeline_mode<synchronous>, transform_indices = @transform_16, window_bounds = array<i64: 1, 64>}, {pipeline_mode = #tpu.pipeline_mode<synchronous>, transform_indices = @transform_17, window_bounds = array<i64: 64, 32>}, {pipeline_mode = #tpu.pipeline_mode<synchronous>, transform_indices = @transform_18, window_bounds = array<i64: 1, 32>}, {pipeline_mode = #tpu.pipeline_mode<synchronous>, transform_indices = @transform_19, window_bounds = array<i64: 1, 32>}, {pipeline_mode = #tpu.pipeline_mode<synchronous>, transform_indices = @transform_20, window_bounds = array<i64: 1, 32>}, {pipeline_mode = #tpu.pipeline_mode<synchronous>, transform_indices = @transform_21, window_bounds = array<i64: 1, 16>}, {pipeline_mode = #tpu.pipeline_mode<synchronous>, transform_indices = @transform_22, window_bounds = array<i64: 1, 16>}, {pipeline_mode = #tpu.pipeline_mode<synchronous>, transform_indices = @transform_23, window_bounds = array<i64: 16, 16>}, {pipeline_mode = #tpu.pipeline_mode<synchronous>, transform_indices = @transform_24, window_bounds = array<i64: 1, 16>}, {pipeline_mode = #tpu.pipeline_mode<synchronous>, transform_indices = @transform_25, window_bounds = array<i64: 16, 16>}, {pipeline_mode = #tpu.pipeline_mode<synchronous>, transform_indices = @transform_26, window_bounds = array<i64: 1, 16>}, {pipeline_mode = #tpu.pipeline_mode<synchronous>, transform_indices = @transform_27, window_bounds = array<i64: 1, 16>}, {pipeline_mode = #tpu.pipeline_mode<synchronous>, transform_indices = @transform_28, window_bounds = array<i64: 1, 16>}, {transform_indices = @transform_29, window_bounds = array<i64: 8, 32>}, {transform_indices = @transform_30, window_bounds = array<i64: 128, 16>}]} {
    %c0 = arith.constant 0 : index
    %c0_0 = arith.constant 0 : index
    %0 = vector.load %arg1[%c0, %c0_0] : memref<8x32xf32, #tpu.memory_space<vmem>>, vector<8x32xf32>
    %c0_1 = arith.constant 0 : index
    %c0_2 = arith.constant 0 : index
    %1 = vector.load %arg2[%c0_1, %c0_2] : memref<16x32xf32, #tpu.memory_space<vmem>>, vector<16x32xf32>
    %c0_3 = arith.constant 0 : index
    %c0_4 = arith.constant 0 : index
    %2 = vector.load %arg3[%c0_3, %c0_4] : memref<128x16xf32, #tpu.memory_space<vmem>>, vector<128x16xf32>
    %c0_5 = arith.constant 0 : index
    %c0_6 = arith.constant 0 : index
    %3 = vector.load %arg4[%c0_5, %c0_6] : memref<32x32xf32, #tpu.memory_space<vmem>>, vector<32x32xf32>
    %cst = arith.constant dense<0.000000e+00> : vector<8x32xf32>
    %4 = tpu.matmul %0, %3, %cst {dimension_numbers = #tpu.dot_dimension_numbers<[1], [0], [0], [1], [0, 0, 1, 1], [], []>} : vector<8x32xf32>, vector<32x32xf32>, vector<8x32xf32> -> vector<8x32xf32>
    %c0_7 = arith.constant 0 : index
    %c0_8 = arith.constant 0 : index
    %5 = vector.load %arg5[%c0_7, %c0_8] : memref<1x32xf32, #tpu.memory_space<vmem>>, vector<1x32xf32>
    %6 = vector.broadcast %5 : vector<1x32xf32> to vector<8x32xf32>
    %7 = arith.addf %4, %6 : vector<8x32xf32>
    %c0_9 = arith.constant 0 : index
    %c0_10 = arith.constant 0 : index
    %8 = vector.load %arg6[%c0_9, %c0_10] : memref<32x64xf32, #tpu.memory_space<vmem>>, vector<32x64xf32>
    %cst_11 = arith.constant dense<0.000000e+00> : vector<16x64xf32>
    %9 = tpu.matmul %1, %8, %cst_11 {dimension_numbers = #tpu.dot_dimension_numbers<[1], [0], [0], [1], [0, 0, 1, 1], [], []>} : vector<16x32xf32>, vector<32x64xf32>, vector<16x64xf32> -> vector<16x64xf32>
    %c0_12 = arith.constant 0 : index
    %c0_13 = arith.constant 0 : index
    %10 = vector.load %arg7[%c0_12, %c0_13] : memref<1x64xf32, #tpu.memory_space<vmem>>, vector<1x64xf32>
    %11 = vector.broadcast %10 : vector<1x64xf32> to vector<16x64xf32>
    %12 = arith.addf %9, %11 : vector<16x64xf32>
    %13 = vector.extract_strided_slice %12 {offsets = [0, 0], sizes = [16, 32], strides = [1, 1]} : vector<16x64xf32> to vector<16x32xf32>
    %14 = vector.extract_strided_slice %12 {offsets = [0, 32], sizes = [16, 32], strides = [1, 1]} : vector<16x64xf32> to vector<16x32xf32>
    %c0_14 = arith.constant 0 : index
    %c0_15 = arith.constant 0 : index
    %15 = vector.load %arg8[%c0_14, %c0_15] : memref<16x64xf32, #tpu.memory_space<vmem>>, vector<16x64xf32>
    %cst_16 = arith.constant dense<0.000000e+00> : vector<128x64xf32>
    %16 = tpu.matmul %2, %15, %cst_16 {dimension_numbers = #tpu.dot_dimension_numbers<[1], [0], [0], [1], [0, 0, 1, 1], [], []>} : vector<128x16xf32>, vector<16x64xf32>, vector<128x64xf32> -> vector<128x64xf32>
    %c0_17 = arith.constant 0 : index
    %c0_18 = arith.constant 0 : index
    %17 = vector.load %arg9[%c0_17, %c0_18] : memref<1x64xf32, #tpu.memory_space<vmem>>, vector<1x64xf32>
    %18 = vector.broadcast %17 : vector<1x64xf32> to vector<128x64xf32>
    %19 = arith.addf %16, %18 : vector<128x64xf32>
    %20 = vector.extract_strided_slice %19 {offsets = [0, 0], sizes = [128, 32], strides = [1, 1]} : vector<128x64xf32> to vector<128x32xf32>
    %21 = vector.extract_strided_slice %19 {offsets = [0, 32], sizes = [128, 32], strides = [1, 1]} : vector<128x64xf32> to vector<128x32xf32>
    %22 = vector.shape_cast %7 : vector<8x32xf32> to vector<8x1x32xf32>
    %23 = vector.shape_cast %13 : vector<16x32xf32> to vector<1x16x32xf32>
    %24 = vector.broadcast %22 : vector<8x1x32xf32> to vector<8x16x32xf32>
    %25 = vector.broadcast %23 : vector<1x16x32xf32> to vector<8x16x32xf32>
    %26 = arith.mulf %24, %25 : vector<8x16x32xf32>
    %27 = vector.shape_cast %26 : vector<8x16x32xf32> to vector<128x32xf32>
    %28 = arith.mulf %27, %20 : vector<128x32xf32>
    %29 = arith.addf %28, %21 : vector<128x32xf32>
    %c0_19 = arith.constant 0 : index
    %c0_20 = arith.constant 0 : index
    %30 = vector.load %arg10[%c0_19, %c0_20] : memref<32x16xf32, #tpu.memory_space<vmem>>, vector<32x16xf32>
    %cst_21 = arith.constant dense<0.000000e+00> : vector<128x16xf32>
    %31 = tpu.matmul %29, %30, %cst_21 {dimension_numbers = #tpu.dot_dimension_numbers<[1], [0], [0], [1], [0, 0, 1, 1], [], []>} : vector<128x32xf32>, vector<32x16xf32>, vector<128x16xf32> -> vector<128x16xf32>
    %c0_22 = arith.constant 0 : index
    %c0_23 = arith.constant 0 : index
    %32 = vector.load %arg11[%c0_22, %c0_23] : memref<1x16xf32, #tpu.memory_space<vmem>>, vector<1x16xf32>
    %33 = vector.broadcast %32 : vector<1x16xf32> to vector<128x16xf32>
    %34 = arith.addf %31, %33 : vector<128x16xf32>
    %35 = vector.shape_cast %29 : vector<128x32xf32> to vector<8x16x32xf32>
    %cst_24 = arith.constant dense<0xFF800000> : vector<8x32xf32>
    %36 = vector.multi_reduction <maximumf>, %35, %cst_24 [1] : vector<8x16x32xf32> to vector<8x32xf32>
    %37 = vector.shape_cast %36 : vector<8x32xf32> to vector<8x1x32xf32>
    %38 = vector.broadcast %37 : vector<8x1x32xf32> to vector<8x16x32xf32>
    %39 = arith.subf %35, %38 : vector<8x16x32xf32>
    %40 = math.exp %39 : vector<8x16x32xf32>
    %cst_25 = arith.constant dense<0.000000e+00> : vector<8x32xf32>
    %41 = vector.multi_reduction <add>, %40, %cst_25 [1] : vector<8x16x32xf32> to vector<8x32xf32>
    %42 = vector.shape_cast %14 : vector<16x32xf32> to vector<1x16x32xf32>
    %43 = vector.broadcast %42 : vector<1x16x32xf32> to vector<8x16x32xf32>
    %44 = arith.mulf %40, %43 : vector<8x16x32xf32>
    %cst_26 = arith.constant dense<0.000000e+00> : vector<8x32xf32>
    %45 = vector.multi_reduction <add>, %44, %cst_26 [1] : vector<8x16x32xf32> to vector<8x32xf32>
    %46 = arith.divf %45, %41 : vector<8x32xf32>
    %c0_27 = arith.constant 0 : index
    %c0_28 = arith.constant 0 : index
    %47 = vector.load %arg12[%c0_27, %c0_28] : memref<32x32xf32, #tpu.memory_space<vmem>>, vector<32x32xf32>
    %cst_29 = arith.constant dense<0.000000e+00> : vector<8x32xf32>
    %48 = tpu.matmul %46, %47, %cst_29 {dimension_numbers = #tpu.dot_dimension_numbers<[1], [0], [0], [1], [0, 0, 1, 1], [], []>} : vector<8x32xf32>, vector<32x32xf32>, vector<8x32xf32> -> vector<8x32xf32>
    %c0_30 = arith.constant 0 : index
    %c0_31 = arith.constant 0 : index
    %49 = vector.load %arg13[%c0_30, %c0_31] : memref<1x32xf32, #tpu.memory_space<vmem>>, vector<1x32xf32>
    %50 = vector.broadcast %49 : vector<1x32xf32> to vector<8x32xf32>
    %51 = arith.addf %48, %50 : vector<8x32xf32>
    %52 = arith.addf %0, %51 : vector<8x32xf32>
    %c0_32 = arith.constant 0 : index
    %c0_33 = arith.constant 0 : index
    %53 = vector.load %arg14[%c0_32, %c0_33] : memref<1x32xf32, #tpu.memory_space<vmem>>, vector<1x32xf32>
    %c0_34 = arith.constant 0 : index
    %c0_35 = arith.constant 0 : index
    %54 = vector.load %arg15[%c0_34, %c0_35] : memref<1x32xf32, #tpu.memory_space<vmem>>, vector<1x32xf32>
    %cst_36 = arith.constant dense<0.000000e+00> : vector<8xf32>
    %55 = vector.multi_reduction <add>, %52, %cst_36 [1] : vector<8x32xf32> to vector<8xf32>
    %56 = vector.shape_cast %55 : vector<8xf32> to vector<8x1xf32>
    %cst_37 = arith.constant 3.200000e+01 : f32
    %57 = vector.broadcast %cst_37 : f32 to vector<8x1xf32>
    %58 = arith.divf %56, %57 : vector<8x1xf32>
    %59 = vector.broadcast %58 : vector<8x1xf32> to vector<8x32xf32>
    %60 = arith.subf %52, %59 : vector<8x32xf32>
    %61 = arith.mulf %60, %60 : vector<8x32xf32>
    %cst_38 = arith.constant dense<0.000000e+00> : vector<8xf32>
    %62 = vector.multi_reduction <add>, %61, %cst_38 [1] : vector<8x32xf32> to vector<8xf32>
    %63 = vector.shape_cast %62 : vector<8xf32> to vector<8x1xf32>
    %cst_39 = arith.constant 3.200000e+01 : f32
    %64 = vector.broadcast %cst_39 : f32 to vector<8x1xf32>
    %65 = arith.divf %63, %64 : vector<8x1xf32>
    %66 = vector.broadcast %58 : vector<8x1xf32> to vector<8x32xf32>
    %67 = arith.subf %52, %66 : vector<8x32xf32>
    %cst_40 = arith.constant 9.99999974E-6 : f32
    %68 = vector.broadcast %cst_40 : f32 to vector<8x1xf32>
    %69 = arith.addf %65, %68 : vector<8x1xf32>
    %70 = math.rsqrt %69 : vector<8x1xf32>
    %71 = vector.broadcast %70 : vector<8x1xf32> to vector<8x32xf32>
    %72 = arith.mulf %67, %71 : vector<8x32xf32>
    %73 = vector.broadcast %53 : vector<1x32xf32> to vector<8x32xf32>
    %74 = arith.mulf %72, %73 : vector<8x32xf32>
    %75 = vector.broadcast %54 : vector<1x32xf32> to vector<8x32xf32>
    %76 = arith.addf %74, %75 : vector<8x32xf32>
    %c0_41 = arith.constant 0 : index
    %c0_42 = arith.constant 0 : index
    %77 = vector.load %arg16[%c0_41, %c0_42] : memref<32x64xf32, #tpu.memory_space<vmem>>, vector<32x64xf32>
    %cst_43 = arith.constant dense<0.000000e+00> : vector<8x64xf32>
    %78 = tpu.matmul %76, %77, %cst_43 {dimension_numbers = #tpu.dot_dimension_numbers<[1], [0], [0], [1], [0, 0, 1, 1], [], []>} : vector<8x32xf32>, vector<32x64xf32>, vector<8x64xf32> -> vector<8x64xf32>
    %c0_44 = arith.constant 0 : index
    %c0_45 = arith.constant 0 : index
    %79 = vector.load %arg17[%c0_44, %c0_45] : memref<1x64xf32, #tpu.memory_space<vmem>>, vector<1x64xf32>
    %80 = vector.broadcast %79 : vector<1x64xf32> to vector<8x64xf32>
    %81 = arith.addf %78, %80 : vector<8x64xf32>
    %cst_46 = arith.constant 0.000000e+00 : f32
    %82 = vector.broadcast %cst_46 : f32 to vector<8x64xf32>
    %83 = arith.maximumf %81, %82 : vector<8x64xf32>
    %c0_47 = arith.constant 0 : index
    %c0_48 = arith.constant 0 : index
    %84 = vector.load %arg18[%c0_47, %c0_48] : memref<64x32xf32, #tpu.memory_space<vmem>>, vector<64x32xf32>
    %cst_49 = arith.constant dense<0.000000e+00> : vector<8x32xf32>
    %85 = tpu.matmul %83, %84, %cst_49 {dimension_numbers = #tpu.dot_dimension_numbers<[1], [0], [0], [1], [0, 0, 1, 1], [], []>} : vector<8x64xf32>, vector<64x32xf32>, vector<8x32xf32> -> vector<8x32xf32>
    %c0_50 = arith.constant 0 : index
    %c0_51 = arith.constant 0 : index
    %86 = vector.load %arg19[%c0_50, %c0_51] : memref<1x32xf32, #tpu.memory_space<vmem>>, vector<1x32xf32>
    %87 = vector.broadcast %86 : vector<1x32xf32> to vector<8x32xf32>
    %88 = arith.addf %85, %87 : vector<8x32xf32>
    %89 = arith.addf %76, %88 : vector<8x32xf32>
    %c0_52 = arith.constant 0 : index
    %c0_53 = arith.constant 0 : index
    %90 = vector.load %arg20[%c0_52, %c0_53] : memref<1x32xf32, #tpu.memory_space<vmem>>, vector<1x32xf32>
    %c0_54 = arith.constant 0 : index
    %c0_55 = arith.constant 0 : index
    %91 = vector.load %arg21[%c0_54, %c0_55] : memref<1x32xf32, #tpu.memory_space<vmem>>, vector<1x32xf32>
    %cst_56 = arith.constant dense<0.000000e+00> : vector<8xf32>
    %92 = vector.multi_reduction <add>, %89, %cst_56 [1] : vector<8x32xf32> to vector<8xf32>
    %93 = vector.shape_cast %92 : vector<8xf32> to vector<8x1xf32>
    %cst_57 = arith.constant 3.200000e+01 : f32
    %94 = vector.broadcast %cst_57 : f32 to vector<8x1xf32>
    %95 = arith.divf %93, %94 : vector<8x1xf32>
    %96 = vector.broadcast %95 : vector<8x1xf32> to vector<8x32xf32>
    %97 = arith.subf %89, %96 : vector<8x32xf32>
    %98 = arith.mulf %97, %97 : vector<8x32xf32>
    %cst_58 = arith.constant dense<0.000000e+00> : vector<8xf32>
    %99 = vector.multi_reduction <add>, %98, %cst_58 [1] : vector<8x32xf32> to vector<8xf32>
    %100 = vector.shape_cast %99 : vector<8xf32> to vector<8x1xf32>
    %cst_59 = arith.constant 3.200000e+01 : f32
    %101 = vector.broadcast %cst_59 : f32 to vector<8x1xf32>
    %102 = arith.divf %100, %101 : vector<8x1xf32>
    %103 = vector.broadcast %95 : vector<8x1xf32> to vector<8x32xf32>
    %104 = arith.subf %89, %103 : vector<8x32xf32>
    %cst_60 = arith.constant 9.99999974E-6 : f32
    %105 = vector.broadcast %cst_60 : f32 to vector<8x1xf32>
    %106 = arith.addf %102, %105 : vector<8x1xf32>
    %107 = math.rsqrt %106 : vector<8x1xf32>
    %108 = vector.broadcast %107 : vector<8x1xf32> to vector<8x32xf32>
    %109 = arith.mulf %104, %108 : vector<8x32xf32>
    %110 = vector.broadcast %90 : vector<1x32xf32> to vector<8x32xf32>
    %111 = arith.mulf %109, %110 : vector<8x32xf32>
    %112 = vector.broadcast %91 : vector<1x32xf32> to vector<8x32xf32>
    %113 = arith.addf %111, %112 : vector<8x32xf32>
    %c0_61 = arith.constant 0 : index
    %c0_62 = arith.constant 0 : index
    %114 = vector.load %arg30[%c0_61, %c0_62] : memref<8x32xf32, #tpu.memory_space<vmem>>, vector<8x32xf32>
    tpu.vector_store %arg30[%c0_61, %c0_62], %113 {strides = array<i32>} : memref<8x32xf32, #tpu.memory_space<vmem>>, vector<8x32xf32>,
    %115 = arith.addf %2, %34 : vector<128x16xf32>
    %c0_63 = arith.constant 0 : index
    %c0_64 = arith.constant 0 : index
    %116 = vector.load %arg22[%c0_63, %c0_64] : memref<1x16xf32, #tpu.memory_space<vmem>>, vector<1x16xf32>
    %c0_65 = arith.constant 0 : index
    %c0_66 = arith.constant 0 : index
    %117 = vector.load %arg23[%c0_65, %c0_66] : memref<1x16xf32, #tpu.memory_space<vmem>>, vector<1x16xf32>
    %cst_67 = arith.constant dense<0.000000e+00> : vector<128xf32>
    %118 = vector.multi_reduction <add>, %115, %cst_67 [1] : vector<128x16xf32> to vector<128xf32>
    %119 = vector.shape_cast %118 : vector<128xf32> to vector<128x1xf32>
    %cst_68 = arith.constant 1.600000e+01 : f32
    %120 = vector.broadcast %cst_68 : f32 to vector<128x1xf32>
    %121 = arith.divf %119, %120 : vector<128x1xf32>
    %122 = vector.broadcast %121 : vector<128x1xf32> to vector<128x16xf32>
    %123 = arith.subf %115, %122 : vector<128x16xf32>
    %124 = arith.mulf %123, %123 : vector<128x16xf32>
    %cst_69 = arith.constant dense<0.000000e+00> : vector<128xf32>
    %125 = vector.multi_reduction <add>, %124, %cst_69 [1] : vector<128x16xf32> to vector<128xf32>
    %126 = vector.shape_cast %125 : vector<128xf32> to vector<128x1xf32>
    %cst_70 = arith.constant 1.600000e+01 : f32
    %127 = vector.broadcast %cst_70 : f32 to vector<128x1xf32>
    %128 = arith.divf %126, %127 : vector<128x1xf32>
    %129 = vector.broadcast %121 : vector<128x1xf32> to vector<128x16xf32>
    %130 = arith.subf %115, %129 : vector<128x16xf32>
    %cst_71 = arith.constant 9.99999974E-6 : f32
    %131 = vector.broadcast %cst_71 : f32 to vector<128x1xf32>
    %132 = arith.addf %128, %131 : vector<128x1xf32>
    %133 = math.rsqrt %132 : vector<128x1xf32>
    %134 = vector.broadcast %133 : vector<128x1xf32> to vector<128x16xf32>
    %135 = arith.mulf %130, %134 : vector<128x16xf32>
    %136 = vector.broadcast %116 : vector<1x16xf32> to vector<128x16xf32>
    %137 = arith.mulf %135, %136 : vector<128x16xf32>
    %138 = vector.broadcast %117 : vector<1x16xf32> to vector<128x16xf32>
    %139 = arith.addf %137, %138 : vector<128x16xf32>
    %c0_72 = arith.constant 0 : index
    %c0_73 = arith.constant 0 : index
    %140 = vector.load %arg24[%c0_72, %c0_73] : memref<16x16xf32, #tpu.memory_space<vmem>>, vector<16x16xf32>
    %cst_74 = arith.constant dense<0.000000e+00> : vector<128x16xf32>
    %141 = tpu.matmul %139, %140, %cst_74 {dimension_numbers = #tpu.dot_dimension_numbers<[1], [0], [0], [1], [0, 0, 1, 1], [], []>} : vector<128x16xf32>, vector<16x16xf32>, vector<128x16xf32> -> vector<128x16xf32>
    %c0_75 = arith.constant 0 : index
    %c0_76 = arith.constant 0 : index
    %142 = vector.load %arg25[%c0_75, %c0_76] : memref<1x16xf32, #tpu.memory_space<vmem>>, vector<1x16xf32>
    %143 = vector.broadcast %142 : vector<1x16xf32> to vector<128x16xf32>
    %144 = arith.addf %141, %143 : vector<128x16xf32>
    %cst_77 = arith.constant 0.000000e+00 : f32
    %145 = vector.broadcast %cst_77 : f32 to vector<128x16xf32>
    %146 = arith.maximumf %144, %145 : vector<128x16xf32>
    %c0_78 = arith.constant 0 : index
    %c0_79 = arith.constant 0 : index
    %147 = vector.load %arg26[%c0_78, %c0_79] : memref<16x16xf32, #tpu.memory_space<vmem>>, vector<16x16xf32>
    %cst_80 = arith.constant dense<0.000000e+00> : vector<128x16xf32>
    %148 = tpu.matmul %146, %147, %cst_80 {dimension_numbers = #tpu.dot_dimension_numbers<[1], [0], [0], [1], [0, 0, 1, 1], [], []>} : vector<128x16xf32>, vector<16x16xf32>, vector<128x16xf32> -> vector<128x16xf32>
    %c0_81 = arith.constant 0 : index
    %c0_82 = arith.constant 0 : index
    %149 = vector.load %arg27[%c0_81, %c0_82] : memref<1x16xf32, #tpu.memory_space<vmem>>, vector<1x16xf32>
    %150 = vector.broadcast %149 : vector<1x16xf32> to vector<128x16xf32>
    %151 = arith.addf %148, %150 : vector<128x16xf32>
    %152 = arith.addf %139, %151 : vector<128x16xf32>
    %c0_83 = arith.constant 0 : index
    %c0_84 = arith.constant 0 : index
    %153 = vector.load %arg28[%c0_83, %c0_84] : memref<1x16xf32, #tpu.memory_space<vmem>>, vector<1x16xf32>
    %c0_85 = arith.constant 0 : index
    %c0_86 = arith.constant 0 : index
    %154 = vector.load %arg29[%c0_85, %c0_86] : memref<1x16xf32, #tpu.memory_space<vmem>>, vector<1x16xf32>
    %cst_87 = arith.constant dense<0.000000e+00> : vector<128xf32>
    %155 = vector.multi_reduction <add>, %152, %cst_87 [1] : vector<128x16xf32> to vector<128xf32>
    %156 = vector.shape_cast %155 : vector<128xf32> to vector<128x1xf32>
    %cst_88 = arith.constant 1.600000e+01 : f32
    %157 = vector.broadcast %cst_88 : f32 to vector<128x1xf32>
    %158 = arith.divf %156, %157 : vector<128x1xf32>
    %159 = vector.broadcast %158 : vector<128x1xf32> to vector<128x16xf32>
    %160 = arith.subf %152, %159 : vector<128x16xf32>
    %161 = arith.mulf %160, %160 : vector<128x16xf32>
    %cst_89 = arith.constant dense<0.000000e+00> : vector<128xf32>
    %162 = vector.multi_reduction <add>, %161, %cst_89 [1] : vector<128x16xf32> to vector<128xf32>
    %163 = vector.shape_cast %162 : vector<128xf32> to vector<128x1xf32>
    %cst_90 = arith.constant 1.600000e+01 : f32
    %164 = vector.broadcast %cst_90 : f32 to vector<128x1xf32>
    %165 = arith.divf %163, %164 : vector<128x1xf32>
    %166 = vector.broadcast %158 : vector<128x1xf32> to vector<128x16xf32>
    %167 = arith.subf %152, %166 : vector<128x16xf32>
    %cst_91 = arith.constant 9.99999974E-6 : f32
    %168 = vector.broadcast %cst_91 : f32 to vector<128x1xf32>
    %169 = arith.addf %165, %168 : vector<128x1xf32>
    %170 = math.rsqrt %169 : vector<128x1xf32>
    %171 = vector.broadcast %170 : vector<128x1xf32> to vector<128x16xf32>
    %172 = arith.mulf %167, %171 : vector<128x16xf32>
    %173 = vector.broadcast %153 : vector<1x16xf32> to vector<128x16xf32>
    %174 = arith.mulf %172, %173 : vector<128x16xf32>
    %175 = vector.broadcast %154 : vector<1x16xf32> to vector<128x16xf32>
    %176 = arith.addf %174, %175 : vector<128x16xf32>
    %c0_92 = arith.constant 0 : index
    %c0_93 = arith.constant 0 : index
    %177 = vector.load %arg31[%c0_92, %c0_93] : memref<128x16xf32, #tpu.memory_space<vmem>>, vector<128x16xf32>
    tpu.vector_store %arg31[%c0_92, %c0_93], %176 {strides = array<i32>} : memref<128x16xf32, #tpu.memory_space<vmem>>, vector<128x16xf32>,
    return
  }
  func.func @transform_0(%arg0: i32) -> (i32, i32) {
    %c0_i32 = arith.constant 0 : i32
    %c0_i32_0 = arith.constant 0 : i32
    return %arg0, %c0_i32 : i32, i32
  }
  func.func @transform_1(%arg0: i32) -> (i32, i32) {
    %c0_i32 = arith.constant 0 : i32
    %c0_i32_0 = arith.constant 0 : i32
    %c0_i32_1 = arith.constant 0 : i32
    return %c0_i32, %c0_i32_0 : i32, i32
  }
  func.func @transform_2(%arg0: i32) -> (i32, i32) {
    %c0_i32 = arith.constant 0 : i32
    %c0_i32_0 = arith.constant 0 : i32
    return %arg0, %c0_i32 : i32, i32
  }
  func.func @transform_3(%arg0: i32) -> (i32, i32) {
    %c0_i32 = arith.constant 0 : i32
    %c0_i32_0 = arith.constant 0 : i32
    %c0_i32_1 = arith.constant 0 : i32
    return %c0_i32, %c0_i32_0 : i32, i32
  }
  func.func @transform_4(%arg0: i32) -> (i32, i32) {
    %c0_i32 = arith.constant 0 : i32
    %c0_i32_0 = arith.constant 0 : i32
    %c0_i32_1 = arith.constant 0 : i32
    return %c0_i32, %c0_i32_0 : i32, i32
  }
  func.func @transform_5(%arg0: i32) -> (i32, i32) {
    %c0_i32 = arith.constant 0 : i32
    %c0_i32_0 = arith.constant 0 : i32
    %c0_i32_1 = arith.constant 0 : i32
    return %c0_i32, %c0_i32_0 : i32, i32
  }
  func.func @transform_6(%arg0: i32) -> (i32, i32) {
    %c0_i32 = arith.constant 0 : i32
    %c0_i32_0 = arith.constant 0 : i32
    %c0_i32_1 = arith.constant 0 : i32
    return %c0_i32, %c0_i32_0 : i32, i32
  }
  func.func @transform_7(%arg0: i32) -> (i32, i32) {
    %c0_i32 = arith.constant 0 : i32
    %c0_i32_0 = arith.constant 0 : i32
    %c0_i32_1 = arith.constant 0 : i32
    return %c0_i32, %c0_i32_0 : i32, i32
  }
  func.func @transform_8(%arg0: i32) -> (i32, i32) {
    %c0_i32 = arith.constant 0 : i32
    %c0_i32_0 = arith.constant 0 : i32
    %c0_i32_1 = arith.constant 0 : i32
    return %c0_i32, %c0_i32_0 : i32, i32
  }
  func.func @transform_9(%arg0: i32) -> (i32, i32) {
    %c0_i32 = arith.constant 0 : i32
    %c0_i32_0 = arith.constant 0 : i32
    %c0_i32_1 = arith.constant 0 : i32
    return %c0_i32, %c0_i32_0 : i32, i32
  }
  func.func @transform_10(%arg0: i32) -> (i32, i32) {
    %c0_i32 = arith.constant 0 : i32
    %c0_i32_0 = arith.constant 0 : i32
    %c0_i32_1 = arith.constant 0 : i32
    return %c0_i32, %c0_i32_0 : i32, i32
  }
  func.func @transform_11(%arg0: i32) -> (i32, i32) {
    %c0_i32 = arith.constant 0 : i32
    %c0_i32_0 = arith.constant 0 : i32
    %c0_i32_1 = arith.constant 0 : i32
    return %c0_i32, %c0_i32_0 : i32, i32
  }
  func.func @transform_12(%arg0: i32) -> (i32, i32) {
    %c0_i32 = arith.constant 0 : i32
    %c0_i32_0 = arith.constant 0 : i32
    %c0_i32_1 = arith.constant 0 : i32
    return %c0_i32, %c0_i32_0 : i32, i32
  }
  func.func @transform_13(%arg0: i32) -> (i32, i32) {
    %c0_i32 = arith.constant 0 : i32
    %c0_i32_0 = arith.constant 0 : i32
    %c0_i32_1 = arith.constant 0 : i32
    return %c0_i32, %c0_i32_0 : i32, i32
  }
  func.func @transform_14(%arg0: i32) -> (i32, i32) {
    %c0_i32 = arith.constant 0 : i32
    %c0_i32_0 = arith.constant 0 : i32
    %c0_i32_1 = arith.constant 0 : i32
    return %c0_i32, %c0_i32_0 : i32, i32
  }
  func.func @transform_15(%arg0: i32) -> (i32, i32) {
    %c0_i32 = arith.constant 0 : i32
    %c0_i32_0 = arith.constant 0 : i32
    %c0_i32_1 = arith.constant 0 : i32
    return %c0_i32, %c0_i32_0 : i32, i32
  }
  func.func @transform_16(%arg0: i32) -> (i32, i32) {
    %c0_i32 = arith.constant 0 : i32
    %c0_i32_0 = arith.constant 0 : i32
    %c0_i32_1 = arith.constant 0 : i32
    return %c0_i32, %c0_i32_0 : i32, i32
  }
  func.func @transform_17(%arg0: i32) -> (i32, i32) {
    %c0_i32 = arith.constant 0 : i32
    %c0_i32_0 = arith.constant 0 : i32
    %c0_i32_1 = arith.constant 0 : i32
    return %c0_i32, %c0_i32_0 : i32, i32
  }
  func.func @transform_18(%arg0: i32) -> (i32, i32) {
    %c0_i32 = arith.constant 0 : i32
    %c0_i32_0 = arith.constant 0 : i32
    %c0_i32_1 = arith.constant 0 : i32
    return %c0_i32, %c0_i32_0 : i32, i32
  }
  func.func @transform_19(%arg0: i32) -> (i32, i32) {
    %c0_i32 = arith.constant 0 : i32
    %c0_i32_0 = arith.constant 0 : i32
    %c0_i32_1 = arith.constant 0 : i32
    return %c0_i32, %c0_i32_0 : i32, i32
  }
  func.func @transform_20(%arg0: i32) -> (i32, i32) {
    %c0_i32 = arith.constant 0 : i32
    %c0_i32_0 = arith.constant 0 : i32
    %c0_i32_1 = arith.constant 0 : i32
    return %c0_i32, %c0_i32_0 : i32, i32
  }
  func.func @transform_21(%arg0: i32) -> (i32, i32) {
    %c0_i32 = arith.constant 0 : i32
    %c0_i32_0 = arith.constant 0 : i32
    %c0_i32_1 = arith.constant 0 : i32
    return %c0_i32, %c0_i32_0 : i32, i32
  }
  func.func @transform_22(%arg0: i32) -> (i32, i32) {
    %c0_i32 = arith.constant 0 : i32
    %c0_i32_0 = arith.constant 0 : i32
    %c0_i32_1 = arith.constant 0 : i32
    return %c0_i32, %c0_i32_0 : i32, i32
  }
  func.func @transform_23(%arg0: i32) -> (i32, i32) {
    %c0_i32 = arith.constant 0 : i32
    %c0_i32_0 = arith.constant 0 : i32
    %c0_i32_1 = arith.constant 0 : i32
    return %c0_i32, %c0_i32_0 : i32, i32
  }
  func.func @transform_24(%arg0: i32) -> (i32, i32) {
    %c0_i32 = arith.constant 0 : i32
    %c0_i32_0 = arith.constant 0 : i32
    %c0_i32_1 = arith.constant 0 : i32
    return %c0_i32, %c0_i32_0 : i32, i32
  }
  func.func @transform_25(%arg0: i32) -> (i32, i32) {
    %c0_i32 = arith.constant 0 : i32
    %c0_i32_0 = arith.constant 0 : i32
    %c0_i32_1 = arith.constant 0 : i32
    return %c0_i32, %c0_i32_0 : i32, i32
  }
  func.func @transform_26(%arg0: i32) -> (i32, i32) {
    %c0_i32 = arith.constant 0 : i32
    %c0_i32_0 = arith.constant 0 : i32
    %c0_i32_1 = arith.constant 0 : i32
    return %c0_i32, %c0_i32_0 : i32, i32
  }
  func.func @transform_27(%arg0: i32) -> (i32, i32) {
    %c0_i32 = arith.constant 0 : i32
    %c0_i32_0 = arith.constant 0 : i32
    %c0_i32_1 = arith.constant 0 : i32
    return %c0_i32, %c0_i32_0 : i32, i32
  }
  func.func @transform_28(%arg0: i32) -> (i32, i32) {
    %c0_i32 = arith.constant 0 : i32
    %c0_i32_0 = arith.constant 0 : i32
    %c0_i32_1 = arith.constant 0 : i32
    return %c0_i32, %c0_i32_0 : i32, i32
  }
  func.func @transform_29(%arg0: i32) -> (i32, i32) {
    %c0_i32 = arith.constant 0 : i32
    %c0_i32_0 = arith.constant 0 : i32
    return %arg0, %c0_i32 : i32, i32
  }
  func.func @transform_30(%arg0: i32) -> (i32, i32) {
    %c0_i32 = arith.constant 0 : i32
    %c0_i32_0 = arith.constant 0 : i32
    return %arg0, %c0_i32 : i32, i32
  }
}

</mosaic_0001>

<llo_original>
// kernel: tpu_custom_call.1
$region0: #{tpu_custom_call.1}
  #allocation0 [shape = 'u32[]', space=smem, size = 0x4, offset = 0x4, fixed_abs, tag = 'smem constant byte address 0x4 - core index']
  #allocation1 [shape = 'u32[144,128]{1,0:T(1,128)}', space=vmem, size = 0x12000, scoped, tag = 'internal scratch']
  %s0 = inlined_call_operand.smem [shape: u32[31], index: -1, kind: input, shape index: {}]
  %s1 = sld [smem:[%s0]]
  %s2 = scalar_lea.smem %s0, 1
  %s3 = sld [smem:[%s2]]
  %s4 = scalar_lea.smem %s0, 2
  %s5 = sld [smem:[%s4]]
  %s6 = scalar_lea.smem %s0, 3
  %s7 = sld [smem:[%s6]]
  %s8 = scalar_lea.smem %s0, 4
  %s9 = sld [smem:[%s8]]
  %s10 = scalar_lea.smem %s0, 5
  %s11 = sld [smem:[%s10]]
  %s12 = scalar_lea.smem %s0, 6
  %s13 = sld [smem:[%s12]]
  %s14 = scalar_lea.smem %s0, 7
  %s15 = sld [smem:[%s14]]
  %s16 = scalar_lea.smem %s0, 8
  %s17 = sld [smem:[%s16]]
  %s18 = scalar_lea.smem %s0, 9
  %s19 = sld [smem:[%s18]]
  %s20 = scalar_lea.smem %s0, 10
  %s21 = sld [smem:[%s20]]
  %s22 = scalar_lea.smem %s0, 11
  %s23 = sld [smem:[%s22]]
  %s24 = scalar_lea.smem %s0, 12
  %s25 = sld [smem:[%s24]]
  %s26 = scalar_lea.smem %s0, 13
  %s27 = sld [smem:[%s26]]
  %s28 = scalar_lea.smem %s0, 14
  %s29 = sld [smem:[%s28]]
  %s30 = scalar_lea.smem %s0, 15
  %s31 = sld [smem:[%s30]]
  %s32 = scalar_lea.smem %s0, 16
  %s33 = sld [smem:[%s32]]
  %s34 = scalar_lea.smem %s0, 17
  %s35 = sld [smem:[%s34]]
  %s36 = scalar_lea.smem %s0, 18
  %s37 = sld [smem:[%s36]]
  %s38 = scalar_lea.smem %s0, 19
  %s39 = sld [smem:[%s38]]
  %s40 = scalar_lea.smem %s0, 20
  %s41 = sld [smem:[%s40]]
  %s42 = scalar_lea.smem %s0, 21
  %s43 = sld [smem:[%s42]]
  %s44 = scalar_lea.smem %s0, 22
  %s45 = sld [smem:[%s44]]
  %s46 = scalar_lea.smem %s0, 23
  %s47 = sld [smem:[%s46]]
  %s48 = scalar_lea.smem %s0, 24
  %s49 = sld [smem:[%s48]]
  %s50 = scalar_lea.smem %s0, 25
  %s51 = sld [smem:[%s50]]
  %s52 = scalar_lea.smem %s0, 26
  %s53 = sld [smem:[%s52]]
  %s54 = scalar_lea.smem %s0, 27
  %s55 = sld [smem:[%s54]]
  %s56 = scalar_lea.smem %s0, 28
  %s57 = sld [smem:[%s56]]
  %s58 = scalar_lea.smem %s0, 29
  %s59 = sld [smem:[%s58]]
  %s60 = scalar_lea.smem %s0, 30
  %s61 = sld [smem:[%s60]]
  %62 = xla_tuple %s59, %s61
  %s63 = sld [smem:[#allocation0]]
  $region157: #{tpu_custom_call.1} parent=0
    _
  %s65 = ssub.s32 1, %s63
  %s66 = scalar_select 0, %s65, %s63
  $region1: #{tpu_custom_call.1} parent=0
    #allocation2 [shape = 'u8[8192]{0}', space=vmem, size = 0x2000, scoped, tag = 'output window, operand 0']
    #allocation3 [shape = 's32[2]{0}', space=sflag, size = 0x8, scoped, tag = 'scoped memory for tpu_custom_call.1']
    %67 = vsyncpa [#allocation3], 0
    %s68 = scalar_lea.sflag [#allocation3], 1
    %69 = vsyncpa %s68, 0
    loop: start=0, step=1, limit=4
    $region2: #{tpu_custom_call.1} parent=1 // loop_pre_header
      _
    $region3: #{tpu_custom_call.1} parent=1 // loop_header
      %s71 = sphi 0, %s75
      %p72 = scmp.ge.s32.totalorder %s71, 4
      %s81 = sphi 0, %s83
      %s84 = sphi 0, %s81
      %s85 = sphi 0, %s84
      %s101 = sphi 0, %s85
      %s105 = sphi 0, %s105
      %s107 = sphi 0, %s105
      %s108 = sphi 0, %s107
      %s122 = sphi 0, %s108
      %s128 = sphi 0, %s130
      %s131 = sphi 0, %s128
      %s132 = sphi 0, %s131
      %s148 = sphi 0, %s132
      %s152 = sphi 0, %s152
      %s154 = sphi 0, %s152
      %s155 = sphi 0, %s154
      %s169 = sphi 0, %s155
      %s173 = sphi 0, %s173
      %s175 = sphi 0, %s173
      %s176 = sphi 0, %s175
      %s190 = sphi 0, %s176
      %s194 = sphi 0, %s194
      %s196 = sphi 0, %s194
      %s197 = sphi 0, %s196
      %s211 = sphi 0, %s197
      %s215 = sphi 0, %s215
      %s217 = sphi 0, %s215
      %s218 = sphi 0, %s217
      %s232 = sphi 0, %s218
      %s236 = sphi 0, %s236
      %s238 = sphi 0, %s236
      %s239 = sphi 0, %s238
      %s253 = sphi 0, %s239
      %s257 = sphi 0, %s257
      %s259 = sphi 0, %s257
      %s260 = sphi 0, %s259
      %s274 = sphi 0, %s260
      %s278 = sphi 0, %s278
      %s280 = sphi 0, %s278
      %s281 = sphi 0, %s280
      %s295 = sphi 0, %s281
      %s299 = sphi 0, %s299
      %s301 = sphi 0, %s299
      %s302 = sphi 0, %s301
      %s316 = sphi 0, %s302
      %s320 = sphi 0, %s320
      %s322 = sphi 0, %s320
      %s323 = sphi 0, %s322
      %s337 = sphi 0, %s323
      %s341 = sphi 0, %s341
      %s343 = sphi 0, %s341
      %s344 = sphi 0, %s343
      %s358 = sphi 0, %s344
      %s362 = sphi 0, %s362
      %s364 = sphi 0, %s362
      %s365 = sphi 0, %s364
      %s379 = sphi 0, %s365
      %s383 = sphi 0, %s383
      %s385 = sphi 0, %s383
      %s386 = sphi 0, %s385
      %s400 = sphi 0, %s386
      %s404 = sphi 0, %s404
      %s406 = sphi 0, %s404
      %s407 = sphi 0, %s406
      %s421 = sphi 0, %s407
      %s425 = sphi 0, %s425
      %s427 = sphi 0, %s425
      %s428 = sphi 0, %s427
      %s442 = sphi 0, %s428
      %s446 = sphi 0, %s446
      %s448 = sphi 0, %s446
      %s449 = sphi 0, %s448
      %s463 = sphi 0, %s449
      %s467 = sphi 0, %s467
      %s469 = sphi 0, %s467
      %s470 = sphi 0, %s469
      %s484 = sphi 0, %s470
      %s488 = sphi 0, %s488
      %s490 = sphi 0, %s488
      %s491 = sphi 0, %s490
      %s505 = sphi 0, %s491
      %s509 = sphi 0, %s509
      %s511 = sphi 0, %s509
      %s512 = sphi 0, %s511
      %s526 = sphi 0, %s512
      %s530 = sphi 0, %s530
      %s532 = sphi 0, %s530
      %s533 = sphi 0, %s532
      %s547 = sphi 0, %s533
      %s551 = sphi 0, %s551
      %s553 = sphi 0, %s551
      %s554 = sphi 0, %s553
      %s568 = sphi 0, %s554
      %s572 = sphi 0, %s572
      %s574 = sphi 0, %s572
      %s575 = sphi 0, %s574
      %s589 = sphi 0, %s575
      %s593 = sphi 0, %s593
      %s595 = sphi 0, %s593
      %s596 = sphi 0, %s595
      %s610 = sphi 0, %s596
      %s614 = sphi 0, %s614
      %s616 = sphi 0, %s614
      %s617 = sphi 0, %s616
      %s631 = sphi 0, %s617
      %s635 = sphi 0, %s635
      %s637 = sphi 0, %s635
      %s638 = sphi 0, %s637
      %s652 = sphi 0, %s638
      %s656 = sphi 0, %s656
      %s658 = sphi 0, %s656
      %s659 = sphi 0, %s658
      %s673 = sphi 0, %s659
      %s677 = sphi 0, %s677
      %s679 = sphi 0, %s677
      %s680 = sphi 0, %s679
      %s694 = sphi 0, %s680
      %s700 = sphi 0, %s702
      %s703 = sphi 0, %s700
      %s704 = sphi 0, %s703
      %s720 = sphi 0, %s704
      %s726 = sphi 0, %s728
      %s729 = sphi 0, %s726
      %s730 = sphi 0, %s729
      %s746 = sphi 0, %s730
    $region4: #{tpu_custom_call.1} parent=1 // loop_header_branch
      %74 = sbr.rel (%p72) target = $region8
    $region5: #{tpu_custom_call.1} parent=1 // loop_body
      %s76 = ssub.s32 %s71, 1
      %s77 = ssub.s32 %s71, 2
      %s78 = sadd.s32 %s71, 1
      %s79 = ssub.s32 %s71, %s78
      %p80 = scmp.eq.s32.totalorder %s79, 0
      %s82 = sadd.s32 %s81, 1
      %s83 = scalar_select %p80, %s81, %s82
      %p86 = pneg %p80
      %p87 = scmp.eq.s32.totalorder %s71, 1
      %p88 = por %p86, %p87
      %p89 = scmp.ne.s32.totalorder %s81, %s84
      %p90 = scmp.eq.s32.totalorder %s71, 0
      %p91 = por %p89, %p90
      %p92 = scmp.ne.s32.totalorder %s81, %s84
      %p93 = scmp.eq.s32.totalorder %s76, 1
      %p94 = por %p92, %p93
      %p95 = scmp.ne.s32.totalorder %s84, %s85
      %p96 = scmp.eq.s32.totalorder %s76, 0
      %p97 = por %p95, %p96
      %p98 = scmp.ne.s32.totalorder %s84, %s85
      %p99 = scmp.eq.s32.totalorder %s77, 1
      %p100 = por %p98, %p99
      %p102 = scmp.ne.s32.totalorder %s85, %s101
      %p103 = scmp.eq.s32.totalorder %s77, 0
      %p104 = por %p102, %p103
      %s106 = sadd.s32 %s105, 1
      %p109 = scmp.eq.s32.totalorder %s71, 1
      %p110 = scmp.ne.s32.totalorder %s105, %s107
      %p111 = scmp.eq.s32.totalorder %s71, 0
      %p112 = por %p110, %p111
      %p113 = scmp.ne.s32.totalorder %s105, %s107
      %p114 = scmp.eq.s32.totalorder %s76, 1
      %p115 = por %p113, %p114
      %p116 = scmp.ne.s32.totalorder %s107, %s108
      %p117 = scmp.eq.s32.totalorder %s76, 0
      %p118 = por %p116, %p117
      %p119 = scmp.ne.s32.totalorder %s107, %s108
      %p120 = scmp.eq.s32.totalorder %s77, 1
      %p121 = por %p119, %p120
      %p123 = scmp.ne.s32.totalorder %s108, %s122
      %p124 = scmp.eq.s32.totalorder %s77, 0
      %p125 = por %p123, %p124
      %s126 = ssub.s32 %s71, %s78
      %p127 = scmp.eq.s32.totalorder %s126, 0
      %s129 = sadd.s32 %s128, 1
      %s130 = scalar_select %p127, %s128, %s129
      %p133 = pneg %p127
      %p134 = scmp.eq.s32.totalorder %s71, 1
      %p135 = por %p133, %p134
      %p136 = scmp.ne.s32.totalorder %s128, %s131
      %p137 = scmp.eq.s32.totalorder %s71, 0
      %p138 = por %p136, %p137
      %p139 = scmp.ne.s32.totalorder %s128, %s131
      %p140 = scmp.eq.s32.totalorder %s76, 1
      %p141 = por %p139, %p140
      %p142 = scmp.ne.s32.totalorder %s131, %s132
      %p143 = scmp.eq.s32.totalorder %s76, 0
      %p144 = por %p142, %p143
      %p145 = scmp.ne.s32.totalorder %s131, %s132
      %p146 = scmp.eq.s32.totalorder %s77, 1
      %p147 = por %p145, %p146
      %p149 = scmp.ne.s32.totalorder %s132, %s148
      %p150 = scmp.eq.s32.totalorder %s77, 0
      %p151 = por %p149, %p150
      %s153 = sadd.s32 %s152, 1
      %p156 = scmp.eq.s32.totalorder %s71, 1
      %p157 = scmp.ne.s32.totalorder %s152, %s154
      %p158 = scmp.eq.s32.totalorder %s71, 0
      %p159 = por %p157, %p158
      %p160 = scmp.ne.s32.totalorder %s152, %s154
      %p161 = scmp.eq.s32.totalorder %s76, 1
      %p162 = por %p160, %p161
      %p163 = scmp.ne.s32.totalorder %s154, %s155
      %p164 = scmp.eq.s32.totalorder %s76, 0
      %p165 = por %p163, %p164
      %p166 = scmp.ne.s32.totalorder %s154, %s155
      %p167 = scmp.eq.s32.totalorder %s77, 1
      %p168 = por %p166, %p167
      %p170 = scmp.ne.s32.totalorder %s155, %s169
      %p171 = scmp.eq.s32.totalorder %s77, 0
      %p172 = por %p170, %p171
      %s174 = sadd.s32 %s173, 1
      %p177 = scmp.eq.s32.totalorder %s71, 1
      %p178 = scmp.ne.s32.totalorder %s173, %s175
      %p179 = scmp.eq.s32.totalorder %s71, 0
      %p180 = por %p178, %p179
      %p181 = scmp.ne.s32.totalorder %s173, %s175
      %p182 = scmp.eq.s32.totalorder %s76, 1
      %p183 = por %p181, %p182
      %p184 = scmp.ne.s32.totalorder %s175, %s176
      %p185 = scmp.eq.s32.totalorder %s76, 0
      %p186 = por %p184, %p185
      %p187 = scmp.ne.s32.totalorder %s175, %s176
      %p188 = scmp.eq.s32.totalorder %s77, 1
      %p189 = por %p187, %p188
      %p191 = scmp.ne.s32.totalorder %s176, %s190
      %p192 = scmp.eq.s32.totalorder %s77, 0
      %p193 = por %p191, %p192
      %s195 = sadd.s32 %s194, 1
      %p198 = scmp.eq.s32.totalorder %s71, 1
      %p199 = scmp.ne.s32.totalorder %s194, %s196
      %p200 = scmp.eq.s32.totalorder %s71, 0
      %p201 = por %p199, %p200
      %p202 = scmp.ne.s32.totalorder %s194, %s196
      %p203 = scmp.eq.s32.totalorder %s76, 1
      %p204 = por %p202, %p203
      %p205 = scmp.ne.s32.totalorder %s196, %s197
      %p206 = scmp.eq.s32.totalorder %s76, 0
      %p207 = por %p205, %p206
      %p208 = scmp.ne.s32.totalorder %s196, %s197
      %p209 = scmp.eq.s32.totalorder %s77, 1
      %p210 = por %p208, %p209
      %p212 = scmp.ne.s32.totalorder %s197, %s211
      %p213 = scmp.eq.s32.totalorder %s77, 0
      %p214 = por %p212, %p213
      %s216 = sadd.s32 %s215, 1
      %p219 = scmp.eq.s32.totalorder %s71, 1
      %p220 = scmp.ne.s32.totalorder %s215, %s217
      %p221 = scmp.eq.s32.totalorder %s71, 0
      %p222 = por %p220, %p221
      %p223 = scmp.ne.s32.totalorder %s215, %s217
      %p224 = scmp.eq.s32.totalorder %s76, 1
      %p225 = por %p223, %p224
      %p226 = scmp.ne.s32.totalorder %s217, %s218
      %p227 = scmp.eq.s32.totalorder %s76, 0
      %p228 = por %p226, %p227
      %p229 = scmp.ne.s32.totalorder %s217, %s218
      %p230 = scmp.eq.s32.totalorder %s77, 1
      %p231 = por %p229, %p230
      %p233 = scmp.ne.s32.totalorder %s218, %s232
      %p234 = scmp.eq.s32.totalorder %s77, 0
      %p235 = por %p233, %p234
      %s237 = sadd.s32 %s236, 1
      %p240 = scmp.eq.s32.totalorder %s71, 1
      %p241 = scmp.ne.s32.totalorder %s236, %s238
      %p242 = scmp.eq.s32.totalorder %s71, 0
      %p243 = por %p241, %p242
      %p244 = scmp.ne.s32.totalorder %s236, %s238
      %p245 = scmp.eq.s32.totalorder %s76, 1
      %p246 = por %p244, %p245
      %p247 = scmp.ne.s32.totalorder %s238, %s239
      %p248 = scmp.eq.s32.totalorder %s76, 0
      %p249 = por %p247, %p248
      %p250 = scmp.ne.s32.totalorder %s238, %s239
      %p251 = scmp.eq.s32.totalorder %s77, 1
      %p252 = por %p250, %p251
      %p254 = scmp.ne.s32.totalorder %s239, %s253
      %p255 = scmp.eq.s32.totalorder %s77, 0
      %p256 = por %p254, %p255
      %s258 = sadd.s32 %s257, 1
      %p261 = scmp.eq.s32.totalorder %s71, 1
      %p262 = scmp.ne.s32.totalorder %s257, %s259
      %p263 = scmp.eq.s32.totalorder %s71, 0
      %p264 = por %p262, %p263
      %p265 = scmp.ne.s32.totalorder %s257, %s259
      %p266 = scmp.eq.s32.totalorder %s76, 1
      %p267 = por %p265, %p266
      %p268 = scmp.ne.s32.totalorder %s259, %s260
      %p269 = scmp.eq.s32.totalorder %s76, 0
      %p270 = por %p268, %p269
      %p271 = scmp.ne.s32.totalorder %s259, %s260
      %p272 = scmp.eq.s32.totalorder %s77, 1
      %p273 = por %p271, %p272
      %p275 = scmp.ne.s32.totalorder %s260, %s274
      %p276 = scmp.eq.s32.totalorder %s77, 0
      %p277 = por %p275, %p276
      %s279 = sadd.s32 %s278, 1
      %p282 = scmp.eq.s32.totalorder %s71, 1
      %p283 = scmp.ne.s32.totalorder %s278, %s280
      %p284 = scmp.eq.s32.totalorder %s71, 0
      %p285 = por %p283, %p284
      %p286 = scmp.ne.s32.totalorder %s278, %s280
      %p287 = scmp.eq.s32.totalorder %s76, 1
      %p288 = por %p286, %p287
      %p289 = scmp.ne.s32.totalorder %s280, %s281
      %p290 = scmp.eq.s32.totalorder %s76, 0
      %p291 = por %p289, %p290
      %p292 = scmp.ne.s32.totalorder %s280, %s281
      %p293 = scmp.eq.s32.totalorder %s77, 1
      %p294 = por %p292, %p293
      %p296 = scmp.ne.s32.totalorder %s281, %s295
      %p297 = scmp.eq.s32.totalorder %s77, 0
      %p298 = por %p296, %p297
      %s300 = sadd.s32 %s299, 1
      %p303 = scmp.eq.s32.totalorder %s71, 1
      %p304 = scmp.ne.s32.totalorder %s299, %s301
      %p305 = scmp.eq.s32.totalorder %s71, 0
      %p306 = por %p304, %p305
      %p307 = scmp.ne.s32.totalorder %s299, %s301
      %p308 = scmp.eq.s32.totalorder %s76, 1
      %p309 = por %p307, %p308
      %p310 = scmp.ne.s32.totalorder %s301, %s302
      %p311 = scmp.eq.s32.totalorder %s76, 0
      %p312 = por %p310, %p311
      %p313 = scmp.ne.s32.totalorder %s301, %s302
      %p314 = scmp.eq.s32.totalorder %s77, 1
      %p315 = por %p313, %p314
      %p317 = scmp.ne.s32.totalorder %s302, %s316
      %p318 = scmp.eq.s32.totalorder %s77, 0
      %p319 = por %p317, %p318
      %s321 = sadd.s32 %s320, 1
      %p324 = scmp.eq.s32.totalorder %s71, 1
      %p325 = scmp.ne.s32.totalorder %s320, %s322
      %p326 = scmp.eq.s32.totalorder %s71, 0
      %p327 = por %p325, %p326
      %p328 = scmp.ne.s32.totalorder %s320, %s322
      %p329 = scmp.eq.s32.totalorder %s76, 1
      %p330 = por %p328, %p329
      %p331 = scmp.ne.s32.totalorder %s322, %s323
      %p332 = scmp.eq.s32.totalorder %s76, 0
      %p333 = por %p331, %p332
      %p334 = scmp.ne.s32.totalorder %s322, %s323
      %p335 = scmp.eq.s32.totalorder %s77, 1
      %p336 = por %p334, %p335
      %p338 = scmp.ne.s32.totalorder %s323, %s337
      %p339 = scmp.eq.s32.totalorder %s77, 0
      %p340 = por %p338, %p339
      %s342 = sadd.s32 %s341, 1
      %p345 = scmp.eq.s32.totalorder %s71, 1
      %p346 = scmp.ne.s32.totalorder %s341, %s343
      %p347 = scmp.eq.s32.totalorder %s71, 0
      %p348 = por %p346, %p347
      %p349 = scmp.ne.s32.totalorder %s341, %s343
      %p350 = scmp.eq.s32.totalorder %s76, 1
      %p351 = por %p349, %p350
      %p352 = scmp.ne.s32.totalorder %s343, %s344
      %p353 = scmp.eq.s32.totalorder %s76, 0
      %p354 = por %p352, %p353
      %p355 = scmp.ne.s32.totalorder %s343, %s344
      %p356 = scmp.eq.s32.totalorder %s77, 1
      %p357 = por %p355, %p356
      %p359 = scmp.ne.s32.totalorder %s344, %s358
      %p360 = scmp.eq.s32.totalorder %s77, 0
      %p361 = por %p359, %p360
      %s363 = sadd.s32 %s362, 1
      %p366 = scmp.eq.s32.totalorder %s71, 1
      %p367 = scmp.ne.s32.totalorder %s362, %s364
      %p368 = scmp.eq.s32.totalorder %s71, 0
      %p369 = por %p367, %p368
      %p370 = scmp.ne.s32.totalorder %s362, %s364
      %p371 = scmp.eq.s32.totalorder %s76, 1
      %p372 = por %p370, %p371
      %p373 = scmp.ne.s32.totalorder %s364, %s365
      %p374 = scmp.eq.s32.totalorder %s76, 0
      %p375 = por %p373, %p374
      %p376 = scmp.ne.s32.totalorder %s364, %s365
      %p377 = scmp.eq.s32.totalorder %s77, 1
      %p378 = por %p376, %p377
      %p380 = scmp.ne.s32.totalorder %s365, %s379
      %p381 = scmp.eq.s32.totalorder %s77, 0
      %p382 = por %p380, %p381
      %s384 = sadd.s32 %s383, 1
      %p387 = scmp.eq.s32.totalorder %s71, 1
      %p388 = scmp.ne.s32.totalorder %s383, %s385
      %p389 = scmp.eq.s32.totalorder %s71, 0
      %p390 = por %p388, %p389
      %p391 = scmp.ne.s32.totalorder %s383, %s385
      %p392 = scmp.eq.s32.totalorder %s76, 1
      %p393 = por %p391, %p392
      %p394 = scmp.ne.s32.totalorder %s385, %s386
      %p395 = scmp.eq.s32.totalorder %s76, 0
      %p396 = por %p394, %p395
      %p397 = scmp.ne.s32.totalorder %s385, %s386
      %p398 = scmp.eq.s32.totalorder %s77, 1
      %p399 = por %p397, %p398
      %p401 = scmp.ne.s32.totalorder %s386, %s400
      %p402 = scmp.eq.s32.totalorder %s77, 0
      %p403 = por %p401, %p402
      %s405 = sadd.s32 %s404, 1
      %p408 = scmp.eq.s32.totalorder %s71, 1
      %p409 = scmp.ne.s32.totalorder %s404, %s406
      %p410 = scmp.eq.s32.totalorder %s71, 0
      %p411 = por %p409, %p410
      %p412 = scmp.ne.s32.totalorder %s404, %s406
      %p413 = scmp.eq.s32.totalorder %s76, 1
      %p414 = por %p412, %p413
      %p415 = scmp.ne.s32.totalorder %s406, %s407
      %p416 = scmp.eq.s32.totalorder %s76, 0
      %p417 = por %p415, %p416
      %p418 = scmp.ne.s32.totalorder %s406, %s407
      %p419 = scmp.eq.s32.totalorder %s77, 1
      %p420 = por %p418, %p419
      %p422 = scmp.ne.s32.totalorder %s407, %s421
      %p423 = scmp.eq.s32.totalorder %s77, 0
      %p424 = por %p422, %p423
      %s426 = sadd.s32 %s425, 1
      %p429 = scmp.eq.s32.totalorder %s71, 1
      %p430 = scmp.ne.s32.totalorder %s425, %s427
      %p431 = scmp.eq.s32.totalorder %s71, 0
      %p432 = por %p430, %p431
      %p433 = scmp.ne.s32.totalorder %s425, %s427
      %p434 = scmp.eq.s32.totalorder %s76, 1
      %p435 = por %p433, %p434
      %p436 = scmp.ne.s32.totalorder %s427, %s428
      %p437 = scmp.eq.s32.totalorder %s76, 0
      %p438 = por %p436, %p437
      %p439 = scmp.ne.s32.totalorder %s427, %s428
      %p440 = scmp.eq.s32.totalorder %s77, 1
      %p441 = por %p439, %p440
      %p443 = scmp.ne.s32.totalorder %s428, %s442
      %p444 = scmp.eq.s32.totalorder %s77, 0
      %p445 = por %p443, %p444
      %s447 = sadd.s32 %s446, 1
      %p450 = scmp.eq.s32.totalorder %s71, 1
      %p451 = scmp.ne.s32.totalorder %s446, %s448
      %p452 = scmp.eq.s32.totalorder %s71, 0
      %p453 = por %p451, %p452
      %p454 = scmp.ne.s32.totalorder %s446, %s448
      %p455 = scmp.eq.s32.totalorder %s76, 1
      %p456 = por %p454, %p455
      %p457 = scmp.ne.s32.totalorder %s448, %s449
      %p458 = scmp.eq.s32.totalorder %s76, 0
      %p459 = por %p457, %p458
      %p460 = scmp.ne.s32.totalorder %s448, %s449
      %p461 = scmp.eq.s32.totalorder %s77, 1
      %p462 = por %p460, %p461
      %p464 = scmp.ne.s32.totalorder %s449, %s463
      %p465 = scmp.eq.s32.totalorder %s77, 0
      %p466 = por %p464, %p465
      %s468 = sadd.s32 %s467, 1
      %p471 = scmp.eq.s32.totalorder %s71, 1
      %p472 = scmp.ne.s32.totalorder %s467, %s469
      %p473 = scmp.eq.s32.totalorder %s71, 0
      %p474 = por %p472, %p473
      %p475 = scmp.ne.s32.totalorder %s467, %s469
      %p476 = scmp.eq.s32.totalorder %s76, 1
      %p477 = por %p475, %p476
      %p478 = scmp.ne.s32.totalorder %s469, %s470
      %p479 = scmp.eq.s32.totalorder %s76, 0
      %p480 = por %p478, %p479
      %p481 = scmp.ne.s32.totalorder %s469, %s470
      %p482 = scmp.eq.s32.totalorder %s77, 1
      %p483 = por %p481, %p482
      %p485 = scmp.ne.s32.totalorder %s470, %s484
      %p486 = scmp.eq.s32.totalorder %s77, 0
      %p487 = por %p485, %p486
      %s489 = sadd.s32 %s488, 1
      %p492 = scmp.eq.s32.totalorder %s71, 1
      %p493 = scmp.ne.s32.totalorder %s488, %s490
      %p494 = scmp.eq.s32.totalorder %s71, 0
      %p495 = por %p493, %p494
      %p496 = scmp.ne.s32.totalorder %s488, %s490
      %p497 = scmp.eq.s32.totalorder %s76, 1
      %p498 = por %p496, %p497
      %p499 = scmp.ne.s32.totalorder %s490, %s491
      %p500 = scmp.eq.s32.totalorder %s76, 0
      %p501 = por %p499, %p500
      %p502 = scmp.ne.s32.totalorder %s490, %s491
      %p503 = scmp.eq.s32.totalorder %s77, 1
      %p504 = por %p502, %p503
      %p506 = scmp.ne.s32.totalorder %s491, %s505
      %p507 = scmp.eq.s32.totalorder %s77, 0
      %p508 = por %p506, %p507
      %s510 = sadd.s32 %s509, 1
      %p513 = scmp.eq.s32.totalorder %s71, 1
      %p514 = scmp.ne.s32.totalorder %s509, %s511
      %p515 = scmp.eq.s32.totalorder %s71, 0
      %p516 = por %p514, %p515
      %p517 = scmp.ne.s32.totalorder %s509, %s511
      %p518 = scmp.eq.s32.totalorder %s76, 1
      %p519 = por %p517, %p518
      %p520 = scmp.ne.s32.totalorder %s511, %s512
      %p521 = scmp.eq.s32.totalorder %s76, 0
      %p522 = por %p520, %p521
      %p523 = scmp.ne.s32.totalorder %s511, %s512
      %p524 = scmp.eq.s32.totalorder %s77, 1
      %p525 = por %p523, %p524
      %p527 = scmp.ne.s32.totalorder %s512, %s526
      %p528 = scmp.eq.s32.totalorder %s77, 0
      %p529 = por %p527, %p528
      %s531 = sadd.s32 %s530, 1
      %p534 = scmp.eq.s32.totalorder %s71, 1
      %p535 = scmp.ne.s32.totalorder %s530, %s532
      %p536 = scmp.eq.s32.totalorder %s71, 0
      %p537 = por %p535, %p536
      %p538 = scmp.ne.s32.totalorder %s530, %s532
      %p539 = scmp.eq.s32.totalorder %s76, 1
      %p540 = por %p538, %p539
      %p541 = scmp.ne.s32.totalorder %s532, %s533
      %p542 = scmp.eq.s32.totalorder %s76, 0
      %p543 = por %p541, %p542
      %p544 = scmp.ne.s32.totalorder %s532, %s533
      %p545 = scmp.eq.s32.totalorder %s77, 1
      %p546 = por %p544, %p545
      %p548 = scmp.ne.s32.totalorder %s533, %s547
      %p549 = scmp.eq.s32.totalorder %s77, 0
      %p550 = por %p548, %p549
      %s552 = sadd.s32 %s551, 1
      %p555 = scmp.eq.s32.totalorder %s71, 1
      %p556 = scmp.ne.s32.totalorder %s551, %s553
      %p557 = scmp.eq.s32.totalorder %s71, 0
      %p558 = por %p556, %p557
      %p559 = scmp.ne.s32.totalorder %s551, %s553
      %p560 = scmp.eq.s32.totalorder %s76, 1
      %p561 = por %p559, %p560
      %p562 = scmp.ne.s32.totalorder %s553, %s554
      %p563 = scmp.eq.s32.totalorder %s76, 0
      %p564 = por %p562, %p563
      %p565 = scmp.ne.s32.totalorder %s553, %s554
      %p566 = scmp.eq.s32.totalorder %s77, 1
      %p567 = por %p565, %p566
      %p569 = scmp.ne.s32.totalorder %s554, %s568
      %p570 = scmp.eq.s32.totalorder %s77, 0
      %p571 = por %p569, %p570
      %s573 = sadd.s32 %s572, 1
      %p576 = scmp.eq.s32.totalorder %s71, 1
      %p577 = scmp.ne.s32.totalorder %s572, %s574
      %p578 = scmp.eq.s32.totalorder %s71, 0
      %p579 = por %p577, %p578
      %p580 = scmp.ne.s32.totalorder %s572, %s574
      %p581 = scmp.eq.s32.totalorder %s76, 1
      %p582 = por %p580, %p581
      %p583 = scmp.ne.s32.totalorder %s574, %s575
      %p584 = scmp.eq.s32.totalorder %s76, 0
      %p585 = por %p583, %p584
      %p586 = scmp.ne.s32.totalorder %s574, %s575
      %p587 = scmp.eq.s32.totalorder %s77, 1
      %p588 = por %p586, %p587
      %p590 = scmp.ne.s32.totalorder %s575, %s589
      %p591 = scmp.eq.s32.totalorder %s77, 0
      %p592 = por %p590, %p591
      %s594 = sadd.s32 %s593, 1
      %p597 = scmp.eq.s32.totalorder %s71, 1
      %p598 = scmp.ne.s32.totalorder %s593, %s595
      %p599 = scmp.eq.s32.totalorder %s71, 0
      %p600 = por %p598, %p599
      %p601 = scmp.ne.s32.totalorder %s593, %s595
      %p602 = scmp.eq.s32.totalorder %s76, 1
      %p603 = por %p601, %p602
      %p604 = scmp.ne.s32.totalorder %s595, %s596
      %p605 = scmp.eq.s32.totalorder %s76, 0
      %p606 = por %p604, %p605
      %p607 = scmp.ne.s32.totalorder %s595, %s596
      %p608 = scmp.eq.s32.totalorder %s77, 1
      %p609 = por %p607, %p608
      %p611 = scmp.ne.s32.totalorder %s596, %s610
      %p612 = scmp.eq.s32.totalorder %s77, 0
      %p613 = por %p611, %p612
      %s615 = sadd.s32 %s614, 1
      %p618 = scmp.eq.s32.totalorder %s71, 1
      %p619 = scmp.ne.s32.totalorder %s614, %s616
      %p620 = scmp.eq.s32.totalorder %s71, 0
      %p621 = por %p619, %p620
      %p622 = scmp.ne.s32.totalorder %s614, %s616
      %p623 = scmp.eq.s32.totalorder %s76, 1
      %p624 = por %p622, %p623
      %p625 = scmp.ne.s32.totalorder %s616, %s617
      %p626 = scmp.eq.s32.totalorder %s76, 0
      %p627 = por %p625, %p626
      %p628 = scmp.ne.s32.totalorder %s616, %s617
      %p629 = scmp.eq.s32.totalorder %s77, 1
      %p630 = por %p628, %p629
      %p632 = scmp.ne.s32.totalorder %s617, %s631
      %p633 = scmp.eq.s32.totalorder %s77, 0
      %p634 = por %p632, %p633
      %s636 = sadd.s32 %s635, 1
      %p639 = scmp.eq.s32.totalorder %s71, 1
      %p640 = scmp.ne.s32.totalorder %s635, %s637
      %p641 = scmp.eq.s32.totalorder %s71, 0
      %p642 = por %p640, %p641
      %p643 = scmp.ne.s32.totalorder %s635, %s637
      %p644 = scmp.eq.s32.totalorder %s76, 1
      %p645 = por %p643, %p644
      %p646 = scmp.ne.s32.totalorder %s637, %s638
      %p647 = scmp.eq.s32.totalorder %s76, 0
      %p648 = por %p646, %p647
      %p649 = scmp.ne.s32.totalorder %s637, %s638
      %p650 = scmp.eq.s32.totalorder %s77, 1
      %p651 = por %p649, %p650
      %p653 = scmp.ne.s32.totalorder %s638, %s652
      %p654 = scmp.eq.s32.totalorder %s77, 0
      %p655 = por %p653, %p654
      %s657 = sadd.s32 %s656, 1
      %p660 = scmp.eq.s32.totalorder %s71, 1
      %p661 = scmp.ne.s32.totalorder %s656, %s658
      %p662 = scmp.eq.s32.totalorder %s71, 0
      %p663 = por %p661, %p662
      %p664 = scmp.ne.s32.totalorder %s656, %s658
      %p665 = scmp.eq.s32.totalorder %s76, 1
      %p666 = por %p664, %p665
      %p667 = scmp.ne.s32.totalorder %s658, %s659
      %p668 = scmp.eq.s32.totalorder %s76, 0
      %p669 = por %p667, %p668
      %p670 = scmp.ne.s32.totalorder %s658, %s659
      %p671 = scmp.eq.s32.totalorder %s77, 1
      %p672 = por %p670, %p671
      %p674 = scmp.ne.s32.totalorder %s659, %s673
      %p675 = scmp.eq.s32.totalorder %s77, 0
      %p676 = por %p674, %p675
      %s678 = sadd.s32 %s677, 1
      %p681 = scmp.eq.s32.totalorder %s71, 1
      %p682 = scmp.ne.s32.totalorder %s677, %s679
      %p683 = scmp.eq.s32.totalorder %s71, 0
      %p684 = por %p682, %p683
      %p685 = scmp.ne.s32.totalorder %s677, %s679
      %p686 = scmp.eq.s32.totalorder %s76, 1
      %p687 = por %p685, %p686
      %p688 = scmp.ne.s32.totalorder %s679, %s680
      %p689 = scmp.eq.s32.totalorder %s76, 0
      %p690 = por %p688, %p689
      %p691 = scmp.ne.s32.totalorder %s679, %s680
      %p692 = scmp.eq.s32.totalorder %s77, 1
      %p693 = por %p691, %p692
      %p695 = scmp.ne.s32.totalorder %s680, %s694
      %p696 = scmp.eq.s32.totalorder %s77, 0
      %p697 = por %p695, %p696
      %s698 = ssub.s32 %s71, %s78
      %p699 = scmp.eq.s32.totalorder %s698, 0
      %s701 = sadd.s32 %s700, 1
      %s702 = scalar_select %p699, %s700, %s701
      %p705 = pneg %p699
      %p706 = scmp.eq.s32.totalorder %s71, 1
      %p707 = por %p705, %p706
      %p708 = scmp.ne.s32.totalorder %s700, %s703
      %p709 = scmp.eq.s32.totalorder %s71, 0
      %p710 = por %p708, %p709
      %p711 = scmp.ne.s32.totalorder %s700, %s703
      %p712 = scmp.eq.s32.totalorder %s76, 1
      %p713 = por %p711, %p712
      %p714 = scmp.ne.s32.totalorder %s703, %s704
      %p715 = scmp.eq.s32.totalorder %s76, 0
      %p716 = por %p714, %p715
      %p717 = scmp.ne.s32.totalorder %s703, %s704
      %p718 = scmp.eq.s32.totalorder %s77, 1
      %p719 = por %p717, %p718
      %p721 = scmp.ne.s32.totalorder %s704, %s720
      %p722 = scmp.eq.s32.totalorder %s77, 0
      %p723 = por %p721, %p722
      %s724 = ssub.s32 %s71, %s78
      %p725 = scmp.eq.s32.totalorder %s724, 0
      %s727 = sadd.s32 %s726, 1
      %s728 = scalar_select %p725, %s726, %s727
      %p731 = pneg %p725
      %p732 = scmp.eq.s32.totalorder %s71, 1
      %p733 = por %p731, %p732
      %p734 = scmp.ne.s32.totalorder %s726, %s729
      %p735 = scmp.eq.s32.totalorder %s71, 0
      %p736 = por %p734, %p735
      %p737 = scmp.ne.s32.totalorder %s726, %s729
      %p738 = scmp.eq.s32.totalorder %s76, 1
      %p739 = por %p737, %p738
      %p740 = scmp.ne.s32.totalorder %s729, %s730
      %p741 = scmp.eq.s32.totalorder %s76, 0
      %p742 = por %p740, %p741
      %p743 = scmp.ne.s32.totalorder %s729, %s730
      %p744 = scmp.eq.s32.totalorder %s77, 1
      %p745 = por %p743, %p744
      %p747 = scmp.ne.s32.totalorder %s730, %s746
      %p748 = scmp.eq.s32.totalorder %s77, 0
      %p749 = por %p747, %p748
      %p750 = scmp.le.s32.totalorder 1, %s71
      %p751 = scmp.lt.s32.totalorder %s71, 3
      %p752 = pnand %p750, %p751
      %p753 = pneg %p752
      // Predicated region
      $region9: #{tpu_custom_call.1} parent=5 // pred_check
        _
      $region10: #{tpu_custom_call.1} parent=5 // pred_check_branch
        %755 = sbr.rel (%p752) target = $region12
      $region11: #{tpu_custom_call.1} parent=5 // pred_region
        %s756 = ssub.s32 %s71, 1
        // Predicated region
        $region13: #{tpu_custom_call.1} parent=11 // pred_check
          %p757 = pneg %p118
        $region14: #{tpu_custom_call.1} parent=11 // pred_check_branch
          %759 = sbr.rel (%p757) target = $region16
        $region15: #{tpu_custom_call.1} parent=11 // pred_region
          _
        $region16: #{tpu_custom_call.1} parent=11 // pred_fallthru
          _
        // Predicated region
        $region17: #{tpu_custom_call.1} parent=11 // pred_check
          %p760 = pneg %p165
        $region18: #{tpu_custom_call.1} parent=11 // pred_check_branch
          %762 = sbr.rel (%p760) target = $region20
        $region19: #{tpu_custom_call.1} parent=11 // pred_region
          _
        $region20: #{tpu_custom_call.1} parent=11 // pred_fallthru
          _
        // Predicated region
        $region21: #{tpu_custom_call.1} parent=11 // pred_check
          %p763 = pneg %p186
        $region22: #{tpu_custom_call.1} parent=11 // pred_check_branch
          %765 = sbr.rel (%p763) target = $region24
        $region23: #{tpu_custom_call.1} parent=11 // pred_region
          _
        $region24: #{tpu_custom_call.1} parent=11 // pred_fallthru
          _
        // Predicated region
        $region25: #{tpu_custom_call.1} parent=11 // pred_check
          %p766 = pneg %p207
        $region26: #{tpu_custom_call.1} parent=11 // pred_check_branch
          %768 = sbr.rel (%p766) target = $region28
        $region27: #{tpu_custom_call.1} parent=11 // pred_region
          _
        $region28: #{tpu_custom_call.1} parent=11 // pred_fallthru
          _
        // Predicated region
        $region29: #{tpu_custom_call.1} parent=11 // pred_check
          %p769 = pneg %p228
        $region30: #{tpu_custom_call.1} parent=11 // pred_check_branch
          %771 = sbr.rel (%p769) target = $region32
        $region31: #{tpu_custom_call.1} parent=11 // pred_region
          _
        $region32: #{tpu_custom_call.1} parent=11 // pred_fallthru
          _
        // Predicated region
        $region33: #{tpu_custom_call.1} parent=11 // pred_check
          %p772 = pneg %p249
        $region34: #{tpu_custom_call.1} parent=11 // pred_check_branch
          %774 = sbr.rel (%p772) target = $region36
        $region35: #{tpu_custom_call.1} parent=11 // pred_region
          _
        $region36: #{tpu_custom_call.1} parent=11 // pred_fallthru
          _
        // Predicated region
        $region37: #{tpu_custom_call.1} parent=11 // pred_check
          %p775 = pneg %p270
        $region38: #{tpu_custom_call.1} parent=11 // pred_check_branch
          %777 = sbr.rel (%p775) target = $region40
        $region39: #{tpu_custom_call.1} parent=11 // pred_region
          _
        $region40: #{tpu_custom_call.1} parent=11 // pred_fallthru
          _
        // Predicated region
        $region41: #{tpu_custom_call.1} parent=11 // pred_check
          %p778 = pneg %p291
        $region42: #{tpu_custom_call.1} parent=11 // pred_check_branch
          %780 = sbr.rel (%p778) target = $region44
        $region43: #{tpu_custom_call.1} parent=11 // pred_region
          _
        $region44: #{tpu_custom_call.1} parent=11 // pred_fallthru
          _
        // Predicated region
        $region45: #{tpu_custom_call.1} parent=11 // pred_check
          %p781 = pneg %p312
        $region46: #{tpu_custom_call.1} parent=11 // pred_check_branch
          %783 = sbr.rel (%p781) target = $region48
        $region47: #{tpu_custom_call.1} parent=11 // pred_region
          _
        $region48: #{tpu_custom_call.1} parent=11 // pred_fallthru
          _
        // Predicated region
        $region49: #{tpu_custom_call.1} parent=11 // pred_check
          %p784 = pneg %p333
        $region50: #{tpu_custom_call.1} parent=11 // pred_check_branch
          %786 = sbr.rel (%p784) target = $region52
        $region51: #{tpu_custom_call.1} parent=11 // pred_region
          _
        $region52: #{tpu_custom_call.1} parent=11 // pred_fallthru
          _
        // Predicated region
        $region53: #{tpu_custom_call.1} parent=11 // pred_check
          %p787 = pneg %p354
        $region54: #{tpu_custom_call.1} parent=11 // pred_check_branch
          %789 = sbr.rel (%p787) target = $region56
        $region55: #{tpu_custom_call.1} parent=11 // pred_region
          _
        $region56: #{tpu_custom_call.1} parent=11 // pred_fallthru
          _
        // Predicated region
        $region57: #{tpu_custom_call.1} parent=11 // pred_check
          %p790 = pneg %p375
        $region58: #{tpu_custom_call.1} parent=11 // pred_check_branch
          %792 = sbr.rel (%p790) target = $region60
        $region59: #{tpu_custom_call.1} parent=11 // pred_region
          _
        $region60: #{tpu_custom_call.1} parent=11 // pred_fallthru
          _
        // Predicated region
        $region61: #{tpu_custom_call.1} parent=11 // pred_check
          %p793 = pneg %p396
        $region62: #{tpu_custom_call.1} parent=11 // pred_check_branch
          %795 = sbr.rel (%p793) target = $region64
        $region63: #{tpu_custom_call.1} parent=11 // pred_region
          _
        $region64: #{tpu_custom_call.1} parent=11 // pred_fallthru
          _
        // Predicated region
        $region65: #{tpu_custom_call.1} parent=11 // pred_check
          %p796 = pneg %p417
        $region66: #{tpu_custom_call.1} parent=11 // pred_check_branch
          %798 = sbr.rel (%p796) target = $region68
        $region67: #{tpu_custom_call.1} parent=11 // pred_region
          _
        $region68: #{tpu_custom_call.1} parent=11 // pred_fallthru
          _
        // Predicated region
        $region69: #{tpu_custom_call.1} parent=11 // pred_check
          %p799 = pneg %p438
        $region70: #{tpu_custom_call.1} parent=11 // pred_check_branch
          %801 = sbr.rel (%p799) target = $region72
        $region71: #{tpu_custom_call.1} parent=11 // pred_region
          _
        $region72: #{tpu_custom_call.1} parent=11 // pred_fallthru
          _
        // Predicated region
        $region73: #{tpu_custom_call.1} parent=11 // pred_check
          %p802 = pneg %p459
        $region74: #{tpu_custom_call.1} parent=11 // pred_check_branch
          %804 = sbr.rel (%p802) target = $region76
        $region75: #{tpu_custom_call.1} parent=11 // pred_region
          _
        $region76: #{tpu_custom_call.1} parent=11 // pred_fallthru
          _
        // Predicated region
        $region77: #{tpu_custom_call.1} parent=11 // pred_check
          %p805 = pneg %p480
        $region78: #{tpu_custom_call.1} parent=11 // pred_check_branch
          %807 = sbr.rel (%p805) target = $region80
        $region79: #{tpu_custom_call.1} parent=11 // pred_region
          _
        $region80: #{tpu_custom_call.1} parent=11 // pred_fallthru
          _
        // Predicated region
        $region81: #{tpu_custom_call.1} parent=11 // pred_check
          %p808 = pneg %p501
        $region82: #{tpu_custom_call.1} parent=11 // pred_check_branch
          %810 = sbr.rel (%p808) target = $region84
        $region83: #{tpu_custom_call.1} parent=11 // pred_region
          _
        $region84: #{tpu_custom_call.1} parent=11 // pred_fallthru
          _
        // Predicated region
        $region85: #{tpu_custom_call.1} parent=11 // pred_check
          %p811 = pneg %p522
        $region86: #{tpu_custom_call.1} parent=11 // pred_check_branch
          %813 = sbr.rel (%p811) target = $region88
        $region87: #{tpu_custom_call.1} parent=11 // pred_region
          _
        $region88: #{tpu_custom_call.1} parent=11 // pred_fallthru
          _
        // Predicated region
        $region89: #{tpu_custom_call.1} parent=11 // pred_check
          %p814 = pneg %p543
        $region90: #{tpu_custom_call.1} parent=11 // pred_check_branch
          %816 = sbr.rel (%p814) target = $region92
        $region91: #{tpu_custom_call.1} parent=11 // pred_region
          _
        $region92: #{tpu_custom_call.1} parent=11 // pred_fallthru
          _
        // Predicated region
        $region93: #{tpu_custom_call.1} parent=11 // pred_check
          %p817 = pneg %p564
        $region94: #{tpu_custom_call.1} parent=11 // pred_check_branch
          %819 = sbr.rel (%p817) target = $region96
        $region95: #{tpu_custom_call.1} parent=11 // pred_region
          _
        $region96: #{tpu_custom_call.1} parent=11 // pred_fallthru
          _
        // Predicated region
        $region97: #{tpu_custom_call.1} parent=11 // pred_check
          %p820 = pneg %p585
        $region98: #{tpu_custom_call.1} parent=11 // pred_check_branch
          %822 = sbr.rel (%p820) target = $region100
        $region99: #{tpu_custom_call.1} parent=11 // pred_region
          _
        $region100: #{tpu_custom_call.1} parent=11 // pred_fallthru
          _
        // Predicated region
        $region101: #{tpu_custom_call.1} parent=11 // pred_check
          %p823 = pneg %p606
        $region102: #{tpu_custom_call.1} parent=11 // pred_check_branch
          %825 = sbr.rel (%p823) target = $region104
        $region103: #{tpu_custom_call.1} parent=11 // pred_region
          _
        $region104: #{tpu_custom_call.1} parent=11 // pred_fallthru
          _
        // Predicated region
        $region105: #{tpu_custom_call.1} parent=11 // pred_check
          %p826 = pneg %p627
        $region106: #{tpu_custom_call.1} parent=11 // pred_check_branch
          %828 = sbr.rel (%p826) target = $region108
        $region107: #{tpu_custom_call.1} parent=11 // pred_region
          _
        $region108: #{tpu_custom_call.1} parent=11 // pred_fallthru
          _
        // Predicated region
        $region109: #{tpu_custom_call.1} parent=11 // pred_check
          %p829 = pneg %p648
        $region110: #{tpu_custom_call.1} parent=11 // pred_check_branch
          %831 = sbr.rel (%p829) target = $region112
        $region111: #{tpu_custom_call.1} parent=11 // pred_region
          _
        $region112: #{tpu_custom_call.1} parent=11 // pred_fallthru
          _
        // Predicated region
        $region113: #{tpu_custom_call.1} parent=11 // pred_check
          %p832 = pneg %p669
        $region114: #{tpu_custom_call.1} parent=11 // pred_check_branch
          %834 = sbr.rel (%p832) target = $region116
        $region115: #{tpu_custom_call.1} parent=11 // pred_region
          _
        $region116: #{tpu_custom_call.1} parent=11 // pred_fallthru
          _
        // Predicated region
        $region117: #{tpu_custom_call.1} parent=11 // pred_check
          %p835 = pneg %p690
        $region118: #{tpu_custom_call.1} parent=11 // pred_check_branch
          %837 = sbr.rel (%p835) target = $region120
        $region119: #{tpu_custom_call.1} parent=11 // pred_region
          _
        $region120: #{tpu_custom_call.1} parent=11 // pred_fallthru
          _
      $region12: #{tpu_custom_call.1} parent=5 // pred_fallthru
        _
      %p838 = scmp.lt.s32.totalorder %s71, 2
      // Predicated region
      $region121: #{tpu_custom_call.1} parent=5 // pred_check
        %p839 = pneg %p838
      $region122: #{tpu_custom_call.1} parent=5 // pred_check_branch
        %841 = sbr.rel (%p839) target = $region124
      $region123: #{tpu_custom_call.1} parent=5 // pred_region
        // Predicated region
        $region125: #{tpu_custom_call.1} parent=123 // pred_check
          %p842 = pneg %p91
        $region126: #{tpu_custom_call.1} parent=123 // pred_check_branch
          %844 = sbr.rel (%p842) target = $region128
        $region127: #{tpu_custom_call.1} parent=123 // pred_region
          %p845 = scmp.lt.s32.totalorder %s71, 1
          %s846 = scalar_select %p845, %s71, 1
          %s847 = smul.addr %s846, 8
          %s848 = scalar_lea.vmem %s1, %s847
        $region128: #{tpu_custom_call.1} parent=123 // pred_fallthru
          _
        // Predicated region
        $region129: #{tpu_custom_call.1} parent=123 // pred_check
          %p849 = pneg %p138
        $region130: #{tpu_custom_call.1} parent=123 // pred_check_branch
          %851 = sbr.rel (%p849) target = $region132
        $region131: #{tpu_custom_call.1} parent=123 // pred_region
          %s852 = smul.u32 16, %s71
          %p853 = scmp.lt.s32.totalorder %s852, 31
          %s854 = scalar_select %p853, %s852, 31
          %s855 = smul.addr %s854, 8
          %s856 = scalar_lea.vmem %s5, %s855
          %s857 = smul.u32 16, %s71
        $region132: #{tpu_custom_call.1} parent=123 // pred_fallthru
          _
      $region124: #{tpu_custom_call.1} parent=5 // pred_fallthru
        _
      %p858 = scmp.le.s32.totalorder 1, %s71
      %p859 = scmp.lt.s32.totalorder %s71, 3
      %p860 = pnand %p858, %p859
      %p861 = pneg %p860
      // Predicated region
      $region133: #{tpu_custom_call.1} parent=5 // pred_check
        _
      $region134: #{tpu_custom_call.1} parent=5 // pred_check_branch
        %863 = sbr.rel (%p860) target = $region136
      $region135: #{tpu_custom_call.1} parent=5 // pred_region
        %s864 = ssub.s32 %s71, 1
        %p865 = scmp.lt.s32.totalorder %s76, 1
        %s866 = scalar_select %p865, %s76, 1
        %s867 = smul.addr %s866, 8
        %s868 = scalar_lea.vmem %s1, %s867
        %p869 = pneg %p97
        %p870 = pneg %p94
        %p871 = pneg %p118
        %p872 = pneg %p115
        %s873 = smul.u32 16, %s76
        %p874 = scmp.lt.s32.totalorder %s873, 31
        %s875 = scalar_select %p874, %s873, 31
        %s876 = smul.addr %s875, 8
        %s877 = scalar_lea.vmem %s5, %s876
        %p878 = pneg %p144
        %p879 = pneg %p141
        %p880 = pneg %p165
        %p881 = pneg %p162
        %p882 = pneg %p186
        %p883 = pneg %p183
        %p884 = pneg %p207
        %p885 = pneg %p204
        %p886 = pneg %p228
        %p887 = pneg %p225
        %p888 = pneg %p249
        %p889 = pneg %p246
        %p890 = pneg %p270
        %p891 = pneg %p267
        %p892 = pneg %p291
        %p893 = pneg %p288
        %p894 = pneg %p312
        %p895 = pneg %p309
        %p896 = pneg %p333
        %p897 = pneg %p330
        %p898 = pneg %p354
        %p899 = pneg %p351
        %p900 = pneg %p375
        %p901 = pneg %p372
        %p902 = pneg %p396
        %p903 = pneg %p393
        %p904 = pneg %p417
        %p905 = pneg %p414
        %p906 = pneg %p438
        %p907 = pneg %p435
        %p908 = pneg %p459
        %p909 = pneg %p456
        %p910 = pneg %p480
        %p911 = pneg %p477
        %p912 = pneg %p501
        %p913 = pneg %p498
        %p914 = pneg %p522
        %p915 = pneg %p519
        %p916 = pneg %p543
        %p917 = pneg %p540
        %p918 = pneg %p564
        %p919 = pneg %p561
        %p920 = pneg %p585
        %p921 = pneg %p582
        %p922 = pneg %p606
        %p923 = pneg %p603
        %p924 = pneg %p627
        %p925 = pneg %p624
        %p926 = pneg %p648
        %p927 = pneg %p645
        %p928 = pneg %p669
        %p929 = pneg %p666
        %p930 = pneg %p690
        %p931 = pneg %p687
        %p932 = pneg %p716
        %p933 = pneg %p713
        %s934 = sand.u32 %s703, 1
        %s935 = scalar_lea.sflag [#allocation3], %s934
        %s936 = sand.u32 %s703, 1
        %s937 = smul.addr %s936, 8
        %s938 = scalar_lea.vmem [#allocation2], %s937
        %p939 = pneg %p742
        %p940 = pneg %p739
        %s941 = smul.u32 16, %s76
        %p942 = scmp.lt.s32.totalorder %s941, 31
        %s943 = scalar_select %p942, %s941, 31
        %s944 = smul.addr %s943, 8
        %s945 = scalar_lea.vmem %s61, %s944
        %p946 = scmp.lt.s32.totalorder %s76, 1
        %s947 = scalar_select %p946, %s76, 1
        %s948 = smul.addr %s947, 8
        %s949 = scalar_lea.vmem %s1, %s948
        %s950 = smul.u32 16, %s76
        %p951 = scmp.lt.s32.totalorder %s950, 31
        %s952 = scalar_select %p951, %s950, 31
        %s953 = smul.addr %s952, 8
        %s954 = scalar_lea.vmem %s5, %s953
        %s955 = smul.u32 16, %s76
        %s956 = smul.u32 16, %s76
        %p957 = scmp.lt.s32.totalorder %s956, 31
        %s958 = scalar_select %p957, %s956, 31
        %s959 = smul.addr %s958, 8
        %s960 = scalar_lea.vmem %s61, %s959
        %s961 = smul.u32 16, %s76
        %v962 = vld [vmem:[%s949] sm:$0xff]
        %v963 = vld [vmem:[%s3] sm:$0xff]
        %v964 = vld [vmem:[%s3 + $0x8] sm:$0xff]
        %v965 = vld [vmem:[%s954] sm:$0xff]
        %v966 = vld [vmem:[%s954 + $0x8] sm:$0xff]
        %v967 = vld [vmem:[%s954 + $0x10] sm:$0xff]
        %v968 = vld [vmem:[%s954 + $0x18] sm:$0xff]
        %v969 = vld [vmem:[%s954 + $0x20] sm:$0xff]
        %v970 = vld [vmem:[%s954 + $0x28] sm:$0xff]
        %v971 = vld [vmem:[%s954 + $0x30] sm:$0xff]
        %v972 = vld [vmem:[%s954 + $0x38] sm:$0xff]
        %v973 = vld [vmem:[%s954 + $0x40] sm:$0xff]
        %v974 = vld [vmem:[%s954 + $0x48] sm:$0xff]
        %v975 = vld [vmem:[%s954 + $0x50] sm:$0xff]
        %v976 = vld [vmem:[%s954 + $0x58] sm:$0xff]
        %v977 = vld [vmem:[%s954 + $0x60] sm:$0xff]
        %v978 = vld [vmem:[%s954 + $0x68] sm:$0xff]
        %v979 = vld [vmem:[%s954 + $0x70] sm:$0xff]
        %v980 = vld [vmem:[%s954 + $0x78] sm:$0xff]
        %v981 = vld [vmem:[%s7] sm:$0xff]
        %v982 = vld [vmem:[%s7 + $0x8] sm:$0xff]
        %v983 = vld [vmem:[%s7 + $0x10] sm:$0xff]
        %v984 = vld [vmem:[%s7 + $0x18] sm:$0xff]
        %v985 = vld [vmem:[%s9] sm:$0x1]
        %v987 = vlaneseq
        %v988 = vshrl.u32 %v987, 7
        %v989 = vsub.s32 0, %v988
        %v990 = vrot.slane %v985, %v989
        %vm992 = vcmask 261120
        %v994 = vsel %vm992, %v962, 0
        %996 = vmatprep.subr.mxu0 0.0
        %997 = vmatpush1.msra.mxu0 0.0
        %998 = vmatprep.subr.mxu0 0.0
        %999 = vmatpush1.msra.mxu0 0.0
        %1000 = vmatprep.subr.mxu0 0.0
        %1001 = vmatpush1.msra.mxu0 0.0
        %1002 = vmatprep.subr.mxu0 0.0
        %1003 = vmatpush1.msra.mxu0 0.0
        %1004 = vmatprep.subr.mxu0 0.0
        %1005 = vmatpush1.msra.mxu0 0.0
        %1006 = vmatprep.subr.mxu0 0.0
        %1007 = vmatpush1.msra.mxu0 0.0
        %1008 = vmatprep.subr.mxu0 0.0
        %1009 = vmatpush1.msra.mxu0 0.0
        %1010 = vmatprep.subr.mxu0 0.0
        %1011 = vmatpush1.msra.mxu0 0.0
        %1012 = vmatprep.subr.mxu0 0.0
        %1013 = vmatpush1.msra.mxu0 0.0
        %1014 = vmatprep.subr.mxu0 0.0
        %1015 = vmatpush1.msra.mxu0 0.0
        %1016 = vmatprep.subr.mxu0 0.0
        %1017 = vmatpush1.msra.mxu0 0.0
        %1018 = vmatprep.subr.mxu0 0.0
        %1019 = vmatpush1.msra.mxu0 0.0
        %1020 = vmatprep.subr.mxu0 0.0
        %1021 = vmatpush1.msra.mxu0 %v984
        %1022 = vmatprep.subr.mxu0 0.0
        %1023 = vmatpush1.msra.mxu0 %v983
        %1024 = vmatprep.subr.mxu0 0.0
        %1025 = vmatpush1.msra.mxu0 %v982
        %1026 = vmatprep.subr.mxu0 0.0
        %1027 = vmatpush1.msra.mxu0 %v981
        %1028 = vmatprep.subr.mxu0 0.0
        %1029 = vmatpush2.msra.mxu0 0.0
        %1030 = vmatprep.subr.mxu0 0.0
        %1031 = vmatpush2.msra.mxu0 0.0
        %1032 = vmatprep.subr.mxu0 0.0
        %1033 = vmatpush2.msra.mxu0 0.0
        %1034 = vmatprep.subr.mxu0 0.0
        %1035 = vmatpush2.msra.mxu0 0.0
        %1036 = vmatprep.subr.mxu0 0.0
        %1037 = vmatpush2.msra.mxu0 0.0
        %1038 = vmatprep.subr.mxu0 0.0
        %1039 = vmatpush2.msra.mxu0 0.0
        %1040 = vmatprep.subr.mxu0 0.0
        %1041 = vmatpush2.msra.mxu0 0.0
        %1042 = vmatprep.subr.mxu0 0.0
        %1043 = vmatpush2.msra.mxu0 0.0
        %1044 = vmatprep.subr.mxu0 0.0
        %1045 = vmatpush2.msra.mxu0 0.0
        %1046 = vmatprep.subr.mxu0 0.0
        %1047 = vmatpush2.msra.mxu0 0.0
        %1048 = vmatprep.subr.mxu0 0.0
        %1049 = vmatpush2.msra.mxu0 0.0
        %1050 = vmatprep.subr.mxu0 0.0
        %1051 = vmatpush2.msra.mxu0 0.0
        %1052 = vmatprep.subr.mxu0 0.0
        %1053 = vmatpush2.msra.mxu0 0.0
        %1054 = vmatprep.subr.mxu0 0.0
        %1055 = vmatpush2.msra.mxu0 0.0
        %1056 = vmatprep.subr.mxu0 0.0
        %1057 = vmatpush2.msra.mxu0 0.0
        %1058 = vmatprep.subr.mxu0 0.0
        %1059 = vmatpush2.msra.mxu0 0.0
        %1060 = vmatprep.mubr.f32.mxu0 0.0
        %1061 = vmatmul.mubr.f32.gmra.mxu0 %v994
        %v1062 = vpop.f32.mrf.mxu0
        %v1063 = vadd.f32 %v990, %v1062
        %v1064 = vpop.f32.mrf.mxu0
        %1065 = vdwg.mxu0
        %v1066 = vld [vmem:[%s11] sm:$0xff]
        %v1067 = vld [vmem:[%s11 + $0x8] sm:$0xff]
        %v1068 = vld [vmem:[%s11 + $0x10] sm:$0xff]
        %v1069 = vld [vmem:[%s11 + $0x18] sm:$0xff]
        %v1070 = vld [vmem:[%s13] sm:$0x1]
        %v1072 = vlaneseq
        %v1073 = vshrl.u32 %v1072, 7
        %v1074 = vsub.s32 0, %v1073
        %v1075 = vrot.slane %v1070, %v1074
        %v1078 = vsel %vm992, %v963, 0
        %v1081 = vsel %vm992, %v964, 0
        %1083 = vmatprep.subr.mxu0 0.0
        %1084 = vmatpush1.msra.mxu0 0.0
        %1085 = vmatprep.subr.mxu0 0.0
        %1086 = vmatpush1.msra.mxu0 0.0
        %1087 = vmatprep.subr.mxu0 0.0
        %1088 = vmatpush1.msra.mxu0 0.0
        %1089 = vmatprep.subr.mxu0 0.0
        %1090 = vmatpush1.msra.mxu0 0.0
        %1091 = vmatprep.subr.mxu0 0.0
        %1092 = vmatpush1.msra.mxu0 0.0
        %1093 = vmatprep.subr.mxu0 0.0
        %1094 = vmatpush1.msra.mxu0 0.0
        %1095 = vmatprep.subr.mxu0 0.0
        %1096 = vmatpush1.msra.mxu0 0.0
        %1097 = vmatprep.subr.mxu0 0.0
        %1098 = vmatpush1.msra.mxu0 0.0
        %1099 = vmatprep.subr.mxu0 0.0
        %1100 = vmatpush1.msra.mxu0 0.0
        %1101 = vmatprep.subr.mxu0 0.0
        %1102 = vmatpush1.msra.mxu0 0.0
        %1103 = vmatprep.subr.mxu0 0.0
        %1104 = vmatpush1.msra.mxu0 0.0
        %1105 = vmatprep.subr.mxu0 0.0
        %1106 = vmatpush1.msra.mxu0 0.0
        %1107 = vmatprep.subr.mxu0 0.0
        %1108 = vmatpush1.msra.mxu0 %v1069
        %1109 = vmatprep.subr.mxu0 0.0
        %1110 = vmatpush1.msra.mxu0 %v1068
        %1111 = vmatprep.subr.mxu0 0.0
        %1112 = vmatpush1.msra.mxu0 %v1067
        %1113 = vmatprep.subr.mxu0 0.0
        %1114 = vmatpush1.msra.mxu0 %v1066
        %1115 = vmatprep.subr.mxu0 0.0
        %1116 = vmatpush2.msra.mxu0 0.0
        %1117 = vmatprep.subr.mxu0 0.0
        %1118 = vmatpush2.msra.mxu0 0.0
        %1119 = vmatprep.subr.mxu0 0.0
        %1120 = vmatpush2.msra.mxu0 0.0
        %1121 = vmatprep.subr.mxu0 0.0
        %1122 = vmatpush2.msra.mxu0 0.0
        %1123 = vmatprep.subr.mxu0 0.0
        %1124 = vmatpush2.msra.mxu0 0.0
        %1125 = vmatprep.subr.mxu0 0.0
        %1126 = vmatpush2.msra.mxu0 0.0
        %1127 = vmatprep.subr.mxu0 0.0
        %1128 = vmatpush2.msra.mxu0 0.0
        %1129 = vmatprep.subr.mxu0 0.0
        %1130 = vmatpush2.msra.mxu0 0.0
        %1131 = vmatprep.subr.mxu0 0.0
        %1132 = vmatpush2.msra.mxu0 0.0
        %1133 = vmatprep.subr.mxu0 0.0
        %1134 = vmatpush2.msra.mxu0 0.0
        %1135 = vmatprep.subr.mxu0 0.0
        %1136 = vmatpush2.msra.mxu0 0.0
        %1137 = vmatprep.subr.mxu0 0.0
        %1138 = vmatpush2.msra.mxu0 0.0
        %1139 = vmatprep.subr.mxu0 0.0
        %1140 = vmatpush2.msra.mxu0 0.0
        %1141 = vmatprep.subr.mxu0 0.0
        %1142 = vmatpush2.msra.mxu0 0.0
        %1143 = vmatprep.subr.mxu0 0.0
        %1144 = vmatpush2.msra.mxu0 0.0
        %1145 = vmatprep.subr.mxu0 0.0
        %1146 = vmatpush2.msra.mxu0 0.0
        %1147 = vmatprep.mubr.f32.mxu0 0.0
        %1148 = vmatmul.mubr.f32.gmra.mxu0 %v1078
        %v1149 = vpop.f32.mrf.mxu0
        %v1150 = vadd.f32 %v1075, %v1149
        %v1151 = vpop.f32.mrf.mxu0
        %1152 = vmatprep.mubr.f32.mxu0 0.0
        %1153 = vmatmul.mubr.f32.gmra.mxu0 %v1081
        %v1154 = vpop.f32.mrf.mxu0
        %v1155 = vadd.f32 %v1075, %v1154
        %v1156 = vpop.f32.mrf.mxu0
        %1157 = vdwg.mxu0
        %v1158 = vld [vmem:[%s15] sm:$0xff]
        %v1159 = vld [vmem:[%s15 + $0x8] sm:$0xff]
        %v1160 = vld [vmem:[%s17] sm:$0x1]
        %v1162 = vlaneseq
        %v1163 = vshrl.u32 %v1162, 7
        %v1164 = vsub.s32 0, %v1163
        %v1165 = vrot.slane %v1160, %v1164
        %vm1167 = vcmask 130048
        %v1169 = vsel %vm1167, %v965, 0
        %v1172 = vsel %vm1167, %v966, 0
        %v1175 = vsel %vm1167, %v967, 0
        %v1178 = vsel %vm1167, %v968, 0
        %v1181 = vsel %vm1167, %v969, 0
        %v1184 = vsel %vm1167, %v970, 0
        %v1187 = vsel %vm1167, %v971, 0
        %v1190 = vsel %vm1167, %v972, 0
        %v1193 = vsel %vm1167, %v973, 0
        %v1196 = vsel %vm1167, %v974, 0
        %v1199 = vsel %vm1167, %v975, 0
        %v1202 = vsel %vm1167, %v976, 0
        %v1205 = vsel %vm1167, %v977, 0
        %v1208 = vsel %vm1167, %v978, 0
        %v1211 = vsel %vm1167, %v979, 0
        %v1214 = vsel %vm1167, %v980, 0
        %1216 = vmatprep.subr.mxu0 0.0
        %1217 = vmatpush1.msra.mxu0 0.0
        %1218 = vmatprep.subr.mxu0 0.0
        %1219 = vmatpush1.msra.mxu0 0.0
        %1220 = vmatprep.subr.mxu0 0.0
        %1221 = vmatpush1.msra.mxu0 0.0
        %1222 = vmatprep.subr.mxu0 0.0
        %1223 = vmatpush1.msra.mxu0 0.0
        %1224 = vmatprep.subr.mxu0 0.0
        %1225 = vmatpush1.msra.mxu0 0.0
        %1226 = vmatprep.subr.mxu0 0.0
        %1227 = vmatpush1.msra.mxu0 0.0
        %1228 = vmatprep.subr.mxu0 0.0
        %1229 = vmatpush1.msra.mxu0 0.0
        %1230 = vmatprep.subr.mxu0 0.0
        %1231 = vmatpush1.msra.mxu0 0.0
        %1232 = vmatprep.subr.mxu0 0.0
        %1233 = vmatpush1.msra.mxu0 0.0
        %1234 = vmatprep.subr.mxu0 0.0
        %1235 = vmatpush1.msra.mxu0 0.0
        %1236 = vmatprep.subr.mxu0 0.0
        %1237 = vmatpush1.msra.mxu0 0.0
        %1238 = vmatprep.subr.mxu0 0.0
        %1239 = vmatpush1.msra.mxu0 0.0
        %1240 = vmatprep.subr.mxu0 0.0
        %1241 = vmatpush1.msra.mxu0 0.0
        %1242 = vmatprep.subr.mxu0 0.0
        %1243 = vmatpush1.msra.mxu0 0.0
        %1244 = vmatprep.subr.mxu0 0.0
        %1245 = vmatpush1.msra.mxu0 %v1159
        %1246 = vmatprep.subr.mxu0 0.0
        %1247 = vmatpush1.msra.mxu0 %v1158
        %1248 = vmatprep.subr.mxu0 0.0
        %1249 = vmatpush2.msra.mxu0 0.0
        %1250 = vmatprep.subr.mxu0 0.0
        %1251 = vmatpush2.msra.mxu0 0.0
        %1252 = vmatprep.subr.mxu0 0.0
        %1253 = vmatpush2.msra.mxu0 0.0
        %1254 = vmatprep.subr.mxu0 0.0
        %1255 = vmatpush2.msra.mxu0 0.0
        %1256 = vmatprep.subr.mxu0 0.0
        %1257 = vmatpush2.msra.mxu0 0.0
        %1258 = vmatprep.subr.mxu0 0.0
        %1259 = vmatpush2.msra.mxu0 0.0
        %1260 = vmatprep.subr.mxu0 0.0
        %1261 = vmatpush2.msra.mxu0 0.0
        %1262 = vmatprep.subr.mxu0 0.0
        %1263 = vmatpush2.msra.mxu0 0.0
        %1264 = vmatprep.subr.mxu0 0.0
        %1265 = vmatpush2.msra.mxu0 0.0
        %1266 = vmatprep.subr.mxu0 0.0
        %1267 = vmatpush2.msra.mxu0 0.0
        %1268 = vmatprep.subr.mxu0 0.0
        %1269 = vmatpush2.msra.mxu0 0.0
        %1270 = vmatprep.subr.mxu0 0.0
        %1271 = vmatpush2.msra.mxu0 0.0
        %1272 = vmatprep.subr.mxu0 0.0
        %1273 = vmatpush2.msra.mxu0 0.0
        %1274 = vmatprep.subr.mxu0 0.0
        %1275 = vmatpush2.msra.mxu0 0.0
        %1276 = vmatprep.subr.mxu0 0.0
        %1277 = vmatpush2.msra.mxu0 0.0
        %1278 = vmatprep.subr.mxu0 0.0
        %1279 = vmatpush2.msra.mxu0 0.0
        %1280 = vmatprep.mubr.f32.mxu0 0.0
        %1281 = vmatmul.mubr.f32.gmra.mxu0 %v1169
        %v1282 = vpop.f32.mrf.mxu0
        %v1283 = vadd.f32 %v1165, %v1282
        %v1284 = vpop.f32.mrf.mxu0
        %1285 = vmatprep.mubr.f32.mxu0 0.0
        %1286 = vmatmul.mubr.f32.gmra.mxu0 %v1172
        %v1287 = vpop.f32.mrf.mxu0
        %v1288 = vadd.f32 %v1165, %v1287
        %v1289 = vpop.f32.mrf.mxu0
        %1290 = vmatprep.mubr.f32.mxu0 0.0
        %1291 = vmatmul.mubr.f32.gmra.mxu0 %v1175
        %v1292 = vpop.f32.mrf.mxu0
        %v1293 = vadd.f32 %v1165, %v1292
        %v1294 = vpop.f32.mrf.mxu0
        %1295 = vmatprep.mubr.f32.mxu0 0.0
        %1296 = vmatmul.mubr.f32.gmra.mxu0 %v1178
        %v1297 = vpop.f32.mrf.mxu0
        %v1298 = vadd.f32 %v1165, %v1297
        %v1299 = vpop.f32.mrf.mxu0
        %1300 = vmatprep.mubr.f32.mxu0 0.0
        %1301 = vmatmul.mubr.f32.gmra.mxu0 %v1181
        %v1302 = vpop.f32.mrf.mxu0
        %v1303 = vadd.f32 %v1165, %v1302
        %v1304 = vpop.f32.mrf.mxu0
        %1305 = vmatprep.mubr.f32.mxu0 0.0
        %1306 = vmatmul.mubr.f32.gmra.mxu0 %v1184
        %v1307 = vpop.f32.mrf.mxu0
        %v1308 = vadd.f32 %v1165, %v1307
        %v1309 = vpop.f32.mrf.mxu0
        %1310 = vmatprep.mubr.f32.mxu0 0.0
        %1311 = vmatmul.mubr.f32.gmra.mxu0 %v1187
        %v1312 = vpop.f32.mrf.mxu0
        %v1313 = vadd.f32 %v1165, %v1312
        %v1314 = vpop.f32.mrf.mxu0
        %1315 = vmatprep.mubr.f32.mxu0 0.0
        %1316 = vmatmul.mubr.f32.gmra.mxu0 %v1190
        %v1317 = vpop.f32.mrf.mxu0
        %v1318 = vadd.f32 %v1165, %v1317
        %v1319 = vpop.f32.mrf.mxu0
        %1320 = vmatprep.mubr.f32.mxu0 0.0
        %1321 = vmatmul.mubr.f32.gmra.mxu0 %v1193
        %v1322 = vpop.f32.mrf.mxu0
        %v1323 = vadd.f32 %v1165, %v1322
        %v1324 = vpop.f32.mrf.mxu0
        %1325 = vmatprep.mubr.f32.mxu0 0.0
        %1326 = vmatmul.mubr.f32.gmra.mxu0 %v1196
        %v1327 = vpop.f32.mrf.mxu0
        %v1328 = vadd.f32 %v1165, %v1327
        %v1329 = vpop.f32.mrf.mxu0
        %1330 = vmatprep.mubr.f32.mxu0 0.0
        %1331 = vmatmul.mubr.f32.gmra.mxu0 %v1199
        %v1332 = vpop.f32.mrf.mxu0
        %v1333 = vadd.f32 %v1165, %v1332
        %v1334 = vpop.f32.mrf.mxu0
        %1335 = vmatprep.mubr.f32.mxu0 0.0
        %1336 = vmatmul.mubr.f32.gmra.mxu0 %v1202
        %v1337 = vpop.f32.mrf.mxu0
        %v1338 = vadd.f32 %v1165, %v1337
        %v1339 = vpop.f32.mrf.mxu0
        %1340 = vmatprep.mubr.f32.mxu0 0.0
        %1341 = vmatmul.mubr.f32.gmra.mxu0 %v1205
        %v1342 = vpop.f32.mrf.mxu0
        %v1343 = vadd.f32 %v1165, %v1342
        %v1344 = vpop.f32.mrf.mxu0
        %1345 = vmatprep.mubr.f32.mxu0 0.0
        %1346 = vmatmul.mubr.f32.gmra.mxu0 %v1208
        %v1347 = vpop.f32.mrf.mxu0
        %v1348 = vadd.f32 %v1165, %v1347
        %v1349 = vpop.f32.mrf.mxu0
        %1350 = vmatprep.mubr.f32.mxu0 0.0
        %1351 = vmatmul.mubr.f32.gmra.mxu0 %v1211
        %v1352 = vpop.f32.mrf.mxu0
        %v1353 = vadd.f32 %v1165, %v1352
        %v1354 = vpop.f32.mrf.mxu0
        %1355 = vmatprep.mubr.f32.mxu0 0.0
        %1356 = vmatmul.mubr.f32.gmra.mxu0 %v1214
        %v1357 = vpop.f32.mrf.mxu0
        %v1358 = vadd.f32 %v1165, %v1357
        %v1359 = vpop.f32.mrf.mxu0
        %1360 = vdwg.mxu0
        %v1362 = vcombine.high %v1063, %v1063
        %v1364 = vunpack.c.l.s4 1966171168
        %v1365 = vunpack.c.0.s8 %v1364
        %v1366 = vlaneseq
        %v1367 = vshrl.u32 %v1366, 7
        %v1368 = vsub.s32 %v1365, %v1367
        %v1369 = vrot.slane %v1063, %v1368
        %v1371 = vunpack.c.l.s4 1966171168
        %v1372 = vunpack.c.0.s8 %v1371
        %v1373 = vlaneseq
        %v1374 = vshrl.u32 %v1373, 7
        %v1375 = vsub.s32 %v1372, %v1374
        %v1376 = vrot.slane %v1362, %v1375
        %v1377 = vcombine.high %v1369, %v1369
        %v1378 = vcombine.high %v1376, %v1376
        %v1380 = vunpack.c.l.s4 1966171168
        %v1381 = vunpack.c.0.s8 %v1380
        %v1382 = vlaneseq
        %v1383 = vshrl.u32 %v1382, 7
        %v1384 = vsub.s32 %v1381, %v1383
        %v1385 = vrot.slane %v1369, %v1384
        %v1387 = vunpack.c.l.s4 1966171168
        %v1388 = vunpack.c.0.s8 %v1387
        %v1389 = vlaneseq
        %v1390 = vshrl.u32 %v1389, 7
        %v1391 = vsub.s32 %v1388, %v1390
        %v1392 = vrot.slane %v1376, %v1391
        %v1394 = vunpack.c.l.s4 1966171168
        %v1395 = vunpack.c.0.s8 %v1394
        %v1396 = vlaneseq
        %v1397 = vshrl.u32 %v1396, 7
        %v1398 = vsub.s32 %v1395, %v1397
        %v1399 = vrot.slane %v1377, %v1398
        %v1401 = vunpack.c.l.s4 1966171168
        %v1402 = vunpack.c.0.s8 %v1401
        %v1403 = vlaneseq
        %v1404 = vshrl.u32 %v1403, 7
        %v1405 = vsub.s32 %v1402, %v1404
        %v1406 = vrot.slane %v1378, %v1405
        %v1407 = vcombine.high %v1385, %v1385
        %v1408 = vcombine.high %v1392, %v1392
        %v1409 = vcombine.high %v1399, %v1399
        %v1410 = vcombine.high %v1406, %v1406
        %v1411 = vlaneseq
        %v1412 = vshrl.u32 %v1411, 7
        %v1413 = vsub.s32 0, %v1412
        %v1414 = vrot.slane %v1385, %v1413
        %v1415 = vlaneseq
        %v1416 = vshrl.u32 %v1415, 7
        %v1417 = vsub.s32 0, %v1416
        %v1418 = vrot.slane %v1399, %v1417
        %v1419 = vlaneseq
        %v1420 = vshrl.u32 %v1419, 7
        %v1421 = vsub.s32 0, %v1420
        %v1422 = vrot.slane %v1407, %v1421
        %v1423 = vlaneseq
        %v1424 = vshrl.u32 %v1423, 7
        %v1425 = vsub.s32 0, %v1424
        %v1426 = vrot.slane %v1409, %v1425
        %v1427 = vlaneseq
        %v1428 = vshrl.u32 %v1427, 7
        %v1429 = vsub.s32 0, %v1428
        %v1430 = vrot.slane %v1392, %v1429
        %v1431 = vlaneseq
        %v1432 = vshrl.u32 %v1431, 7
        %v1433 = vsub.s32 0, %v1432
        %v1434 = vrot.slane %v1406, %v1433
        %v1435 = vlaneseq
        %v1436 = vshrl.u32 %v1435, 7
        %v1437 = vsub.s32 0, %v1436
        %v1438 = vrot.slane %v1408, %v1437
        %v1439 = vlaneseq
        %v1440 = vshrl.u32 %v1439, 7
        %v1441 = vsub.s32 0, %v1440
        %v1442 = vrot.slane %v1410, %v1441
        %v1451 = vmul.f32 %v1414, %v1150
        %v1452 = vmul.f32 %v1414, %v1155
        %v1453 = vmul.f32 %v1418, %v1150
        %v1454 = vmul.f32 %v1418, %v1155
        %v1455 = vmul.f32 %v1422, %v1150
        %v1456 = vmul.f32 %v1422, %v1155
        %v1457 = vmul.f32 %v1426, %v1150
        %v1458 = vmul.f32 %v1426, %v1155
        %v1459 = vmul.f32 %v1430, %v1150
        %v1460 = vmul.f32 %v1430, %v1155
        %v1461 = vmul.f32 %v1434, %v1150
        %v1462 = vmul.f32 %v1434, %v1155
        %v1463 = vmul.f32 %v1438, %v1150
        %v1464 = vmul.f32 %v1438, %v1155
        %v1465 = vmul.f32 %v1442, %v1150
        %v1466 = vmul.f32 %v1442, %v1155
        %v1467 = vmul.f32 %v1451, %v1283
        %v1468 = vmul.f32 %v1452, %v1288
        %v1469 = vmul.f32 %v1453, %v1293
        %v1470 = vmul.f32 %v1454, %v1298
        %v1471 = vmul.f32 %v1455, %v1303
        %v1472 = vmul.f32 %v1456, %v1308
        %v1473 = vmul.f32 %v1457, %v1313
        %v1474 = vmul.f32 %v1458, %v1318
        %v1475 = vmul.f32 %v1459, %v1323
        %v1476 = vmul.f32 %v1460, %v1328
        %v1477 = vmul.f32 %v1461, %v1333
        %v1478 = vmul.f32 %v1462, %v1338
        %v1479 = vmul.f32 %v1463, %v1343
        %v1480 = vmul.f32 %v1464, %v1348
        %v1481 = vmul.f32 %v1465, %v1353
        %v1482 = vmul.f32 %v1466, %v1358
        %1499 = vrot.lane.b32.xlu0 %v1283, 96
        %v1500 = vpop.permute.xlu0 %1499
        %1501 = vrot.lane.b32.xlu0 %v1288, 96
        %v1502 = vpop.permute.xlu0 %1501
        %1503 = vrot.lane.b32.xlu0 %v1293, 96
        %v1504 = vpop.permute.xlu0 %1503
        %1505 = vrot.lane.b32.xlu0 %v1298, 96
        %v1506 = vpop.permute.xlu0 %1505
        %1507 = vrot.lane.b32.xlu0 %v1303, 96
        %v1508 = vpop.permute.xlu0 %1507
        %1509 = vrot.lane.b32.xlu0 %v1308, 96
        %v1510 = vpop.permute.xlu0 %1509
        %1511 = vrot.lane.b32.xlu0 %v1313, 96
        %v1512 = vpop.permute.xlu0 %1511
        %1513 = vrot.lane.b32.xlu0 %v1318, 96
        %v1514 = vpop.permute.xlu0 %1513
        %1515 = vrot.lane.b32.xlu0 %v1323, 96
        %v1516 = vpop.permute.xlu0 %1515
        %1517 = vrot.lane.b32.xlu0 %v1328, 96
        %v1518 = vpop.permute.xlu0 %1517
        %1519 = vrot.lane.b32.xlu0 %v1333, 96
        %v1520 = vpop.permute.xlu0 %1519
        %1521 = vrot.lane.b32.xlu0 %v1338, 96
        %v1522 = vpop.permute.xlu0 %1521
        %1523 = vrot.lane.b32.xlu0 %v1343, 96
        %v1524 = vpop.permute.xlu0 %1523
        %1525 = vrot.lane.b32.xlu0 %v1348, 96
        %v1526 = vpop.permute.xlu0 %1525
        %1527 = vrot.lane.b32.xlu0 %v1353, 96
        %v1528 = vpop.permute.xlu0 %1527
        %1529 = vrot.lane.b32.xlu0 %v1358, 96
        %v1530 = vpop.permute.xlu0 %1529
        %v1547 = vadd.f32 %v1467, %v1500
        %v1548 = vadd.f32 %v1468, %v1502
        %v1549 = vadd.f32 %v1469, %v1504
        %v1550 = vadd.f32 %v1470, %v1506
        %v1551 = vadd.f32 %v1471, %v1508
        %v1552 = vadd.f32 %v1472, %v1510
        %v1553 = vadd.f32 %v1473, %v1512
        %v1554 = vadd.f32 %v1474, %v1514
        %v1555 = vadd.f32 %v1475, %v1516
        %v1556 = vadd.f32 %v1476, %v1518
        %v1557 = vadd.f32 %v1477, %v1520
        %v1558 = vadd.f32 %v1478, %v1522
        %v1559 = vadd.f32 %v1479, %v1524
        %v1560 = vadd.f32 %v1480, %v1526
        %v1561 = vadd.f32 %v1481, %v1528
        %v1562 = vadd.f32 %v1482, %v1530
        %v1563 = vld [vmem:[%s19] sm:$0xff]
        %v1564 = vld [vmem:[%s19 + $0x8] sm:$0xff]
        %v1565 = vld [vmem:[%s19 + $0x10] sm:$0xff]
        %v1566 = vld [vmem:[%s19 + $0x18] sm:$0xff]
        %v1567 = vld [vmem:[%s21] sm:$0x1]
        %v1569 = vlaneseq
        %v1570 = vshrl.u32 %v1569, 7
        %v1571 = vsub.s32 0, %v1570
        %v1572 = vrot.slane %v1567, %v1571
        %v1575 = vsel %vm992, %v1547, 0
        %v1578 = vsel %vm992, %v1548, 0
        %v1581 = vsel %vm992, %v1549, 0
        %v1584 = vsel %vm992, %v1550, 0
        %v1587 = vsel %vm992, %v1551, 0
        %v1590 = vsel %vm992, %v1552, 0
        %v1593 = vsel %vm992, %v1553, 0
        %v1596 = vsel %vm992, %v1554, 0
        %v1599 = vsel %vm992, %v1555, 0
        %v1602 = vsel %vm992, %v1556, 0
        %v1605 = vsel %vm992, %v1557, 0
        %v1608 = vsel %vm992, %v1558, 0
        %v1611 = vsel %vm992, %v1559, 0
        %v1614 = vsel %vm992, %v1560, 0
        %v1617 = vsel %vm992, %v1561, 0
        %v1620 = vsel %vm992, %v1562, 0
        %1622 = vmatprep.subr.mxu0 0.0
        %1623 = vmatpush1.msra.mxu0 0.0
        %1624 = vmatprep.subr.mxu0 0.0
        %1625 = vmatpush1.msra.mxu0 0.0
        %1626 = vmatprep.subr.mxu0 0.0
        %1627 = vmatpush1.msra.mxu0 0.0
        %1628 = vmatprep.subr.mxu0 0.0
        %1629 = vmatpush1.msra.mxu0 0.0
        %1630 = vmatprep.subr.mxu0 0.0
        %1631 = vmatpush1.msra.mxu0 0.0
        %1632 = vmatprep.subr.mxu0 0.0
        %1633 = vmatpush1.msra.mxu0 0.0
        %1634 = vmatprep.subr.mxu0 0.0
        %1635 = vmatpush1.msra.mxu0 0.0
        %1636 = vmatprep.subr.mxu0 0.0
        %1637 = vmatpush1.msra.mxu0 0.0
        %1638 = vmatprep.subr.mxu0 0.0
        %1639 = vmatpush1.msra.mxu0 0.0
        %1640 = vmatprep.subr.mxu0 0.0
        %1641 = vmatpush1.msra.mxu0 0.0
        %1642 = vmatprep.subr.mxu0 0.0
        %1643 = vmatpush1.msra.mxu0 0.0
        %1644 = vmatprep.subr.mxu0 0.0
        %1645 = vmatpush1.msra.mxu0 0.0
        %1646 = vmatprep.subr.mxu0 0.0
        %1647 = vmatpush1.msra.mxu0 %v1566
        %1648 = vmatprep.subr.mxu0 0.0
        %1649 = vmatpush1.msra.mxu0 %v1565
        %1650 = vmatprep.subr.mxu0 0.0
        %1651 = vmatpush1.msra.mxu0 %v1564
        %1652 = vmatprep.subr.mxu0 0.0
        %1653 = vmatpush1.msra.mxu0 %v1563
        %1654 = vmatprep.subr.mxu0 0.0
        %1655 = vmatpush2.msra.mxu0 0.0
        %1656 = vmatprep.subr.mxu0 0.0
        %1657 = vmatpush2.msra.mxu0 0.0
        %1658 = vmatprep.subr.mxu0 0.0
        %1659 = vmatpush2.msra.mxu0 0.0
        %1660 = vmatprep.subr.mxu0 0.0
        %1661 = vmatpush2.msra.mxu0 0.0
        %1662 = vmatprep.subr.mxu0 0.0
        %1663 = vmatpush2.msra.mxu0 0.0
        %1664 = vmatprep.subr.mxu0 0.0
        %1665 = vmatpush2.msra.mxu0 0.0
        %1666 = vmatprep.subr.mxu0 0.0
        %1667 = vmatpush2.msra.mxu0 0.0
        %1668 = vmatprep.subr.mxu0 0.0
        %1669 = vmatpush2.msra.mxu0 0.0
        %1670 = vmatprep.subr.mxu0 0.0
        %1671 = vmatpush2.msra.mxu0 0.0
        %1672 = vmatprep.subr.mxu0 0.0
        %1673 = vmatpush2.msra.mxu0 0.0
        %1674 = vmatprep.subr.mxu0 0.0
        %1675 = vmatpush2.msra.mxu0 0.0
        %1676 = vmatprep.subr.mxu0 0.0
        %1677 = vmatpush2.msra.mxu0 0.0
        %1678 = vmatprep.subr.mxu0 0.0
        %1679 = vmatpush2.msra.mxu0 0.0
        %1680 = vmatprep.subr.mxu0 0.0
        %1681 = vmatpush2.msra.mxu0 0.0
        %1682 = vmatprep.subr.mxu0 0.0
        %1683 = vmatpush2.msra.mxu0 0.0
        %1684 = vmatprep.subr.mxu0 0.0
        %1685 = vmatpush2.msra.mxu0 0.0
        %1686 = vmatprep.mubr.f32.mxu0 0.0
        %1687 = vmatmul.mubr.f32.gmra.mxu0 %v1575
        %v1688 = vpop.f32.mrf.mxu0
        %v1689 = vadd.f32 %v1572, %v1688
        %v1690 = vpop.f32.mrf.mxu0
        %1691 = vmatprep.mubr.f32.mxu0 0.0
        %1692 = vmatmul.mubr.f32.gmra.mxu0 %v1578
        %v1693 = vpop.f32.mrf.mxu0
        %v1694 = vadd.f32 %v1572, %v1693
        %v1695 = vpop.f32.mrf.mxu0
        %1696 = vmatprep.mubr.f32.mxu0 0.0
        %1697 = vmatmul.mubr.f32.gmra.mxu0 %v1581
        %v1698 = vpop.f32.mrf.mxu0
        %v1699 = vadd.f32 %v1572, %v1698
        %v1700 = vpop.f32.mrf.mxu0
        %1701 = vmatprep.mubr.f32.mxu0 0.0
        %1702 = vmatmul.mubr.f32.gmra.mxu0 %v1584
        %v1703 = vpop.f32.mrf.mxu0
        %v1704 = vadd.f32 %v1572, %v1703
        %v1705 = vpop.f32.mrf.mxu0
        %1706 = vmatprep.mubr.f32.mxu0 0.0
        %1707 = vmatmul.mubr.f32.gmra.mxu0 %v1587
        %v1708 = vpop.f32.mrf.mxu0
        %v1709 = vadd.f32 %v1572, %v1708
        %v1710 = vpop.f32.mrf.mxu0
        %1711 = vmatprep.mubr.f32.mxu0 0.0
        %1712 = vmatmul.mubr.f32.gmra.mxu0 %v1590
        %v1713 = vpop.f32.mrf.mxu0
        %v1714 = vadd.f32 %v1572, %v1713
        %v1715 = vpop.f32.mrf.mxu0
        %1716 = vmatprep.mubr.f32.mxu0 0.0
        %1717 = vmatmul.mubr.f32.gmra.mxu0 %v1593
        %v1718 = vpop.f32.mrf.mxu0
        %v1719 = vadd.f32 %v1572, %v1718
        %v1720 = vpop.f32.mrf.mxu0
        %1721 = vmatprep.mubr.f32.mxu0 0.0
        %1722 = vmatmul.mubr.f32.gmra.mxu0 %v1596
        %v1723 = vpop.f32.mrf.mxu0
        %v1724 = vadd.f32 %v1572, %v1723
        %v1725 = vpop.f32.mrf.mxu0
        %1726 = vmatprep.mubr.f32.mxu0 0.0
        %1727 = vmatmul.mubr.f32.gmra.mxu0 %v1599
        %v1728 = vpop.f32.mrf.mxu0
        %v1729 = vadd.f32 %v1572, %v1728
        %v1730 = vpop.f32.mrf.mxu0
        %1731 = vmatprep.mubr.f32.mxu0 0.0
        %1732 = vmatmul.mubr.f32.gmra.mxu0 %v1602
        %v1733 = vpop.f32.mrf.mxu0
        %v1734 = vadd.f32 %v1572, %v1733
        %v1735 = vpop.f32.mrf.mxu0
        %1736 = vmatprep.mubr.f32.mxu0 0.0
        %1737 = vmatmul.mubr.f32.gmra.mxu0 %v1605
        %v1738 = vpop.f32.mrf.mxu0
        %v1739 = vadd.f32 %v1572, %v1738
        %v1740 = vpop.f32.mrf.mxu0
        %1741 = vmatprep.mubr.f32.mxu0 0.0
        %1742 = vmatmul.mubr.f32.gmra.mxu0 %v1608
        %v1743 = vpop.f32.mrf.mxu0
        %v1744 = vadd.f32 %v1572, %v1743
        %v1745 = vpop.f32.mrf.mxu0
        %1746 = vmatprep.mubr.f32.mxu0 0.0
        %1747 = vmatmul.mubr.f32.gmra.mxu0 %v1611
        %v1748 = vpop.f32.mrf.mxu0
        %v1749 = vadd.f32 %v1572, %v1748
        %v1750 = vpop.f32.mrf.mxu0
        %1751 = vmatprep.mubr.f32.mxu0 0.0
        %1752 = vmatmul.mubr.f32.gmra.mxu0 %v1614
        %v1753 = vpop.f32.mrf.mxu0
        %v1754 = vadd.f32 %v1572, %v1753
        %v1755 = vpop.f32.mrf.mxu0
        %1756 = vmatprep.mubr.f32.mxu0 0.0
        %1757 = vmatmul.mubr.f32.gmra.mxu0 %v1617
        %v1758 = vpop.f32.mrf.mxu0
        %v1759 = vadd.f32 %v1572, %v1758
        %v1760 = vpop.f32.mrf.mxu0
        %1761 = vmatprep.mubr.f32.mxu0 0.0
        %1762 = vmatmul.mubr.f32.gmra.mxu0 %v1620
        %v1763 = vpop.f32.mrf.mxu0
        %v1764 = vadd.f32 %v1572, %v1763
        %v1765 = vpop.f32.mrf.mxu0
        %1766 = vdwg.mxu0
        %v1767 = vsel %vm992, %v1547, -inf
        %v1768 = vsel %vm992, %v1548, -inf
        %v1769 = vmax.f32 %v1767, %v1768
        %v1770 = vrot.slane %v1769, 4
        %v1771 = vmax.f32 %v1769, %v1770
        %v1772 = vrot.slane %v1771, 2
        %v1773 = vmax.f32 %v1771, %v1772
        %v1774 = vrot.slane %v1773, 1
        %v1775 = vmax.f32 %v1773, %v1774
        %v1776 = vsel %vm992, %v1549, -inf
        %v1777 = vsel %vm992, %v1550, -inf
        %v1778 = vmax.f32 %v1776, %v1777
        %v1779 = vrot.slane %v1778, 4
        %v1780 = vmax.f32 %v1778, %v1779
        %v1781 = vrot.slane %v1780, 2
        %v1782 = vmax.f32 %v1780, %v1781
        %v1783 = vrot.slane %v1782, 1
        %v1784 = vmax.f32 %v1782, %v1783
        %v1785 = vsel %vm992, %v1551, -inf
        %v1786 = vsel %vm992, %v1552, -inf
        %v1787 = vmax.f32 %v1785, %v1786
        %v1788 = vrot.slane %v1787, 4
        %v1789 = vmax.f32 %v1787, %v1788
        %v1790 = vrot.slane %v1789, 2
        %v1791 = vmax.f32 %v1789, %v1790
        %v1792 = vrot.slane %v1791, 1
        %v1793 = vmax.f32 %v1791, %v1792
        %v1794 = vsel %vm992, %v1553, -inf
        %v1795 = vsel %vm992, %v1554, -inf
        %v1796 = vmax.f32 %v1794, %v1795
        %v1797 = vrot.slane %v1796, 4
        %v1798 = vmax.f32 %v1796, %v1797
        %v1799 = vrot.slane %v1798, 2
        %v1800 = vmax.f32 %v1798, %v1799
        %v1801 = vrot.slane %v1800, 1
        %v1802 = vmax.f32 %v1800, %v1801
        %v1803 = vsel %vm992, %v1555, -inf
        %v1804 = vsel %vm992, %v1556, -inf
        %v1805 = vmax.f32 %v1803, %v1804
        %v1806 = vrot.slane %v1805, 4
        %v1807 = vmax.f32 %v1805, %v1806
        %v1808 = vrot.slane %v1807, 2
        %v1809 = vmax.f32 %v1807, %v1808
        %v1810 = vrot.slane %v1809, 1
        %v1811 = vmax.f32 %v1809, %v1810
        %v1812 = vsel %vm992, %v1557, -inf
        %v1813 = vsel %vm992, %v1558, -inf
        %v1814 = vmax.f32 %v1812, %v1813
        %v1815 = vrot.slane %v1814, 4
        %v1816 = vmax.f32 %v1814, %v1815
        %v1817 = vrot.slane %v1816, 2
        %v1818 = vmax.f32 %v1816, %v1817
        %v1819 = vrot.slane %v1818, 1
        %v1820 = vmax.f32 %v1818, %v1819
        %v1821 = vsel %vm992, %v1559, -inf
        %v1822 = vsel %vm992, %v1560, -inf
        %v1823 = vmax.f32 %v1821, %v1822
        %v1824 = vrot.slane %v1823, 4
        %v1825 = vmax.f32 %v1823, %v1824
        %v1826 = vrot.slane %v1825, 2
        %v1827 = vmax.f32 %v1825, %v1826
        %v1828 = vrot.slane %v1827, 1
        %v1829 = vmax.f32 %v1827, %v1828
        %v1830 = vsel %vm992, %v1561, -inf
        %v1831 = vsel %vm992, %v1562, -inf
        %v1832 = vmax.f32 %v1830, %v1831
        %v1833 = vrot.slane %v1832, 4
        %v1834 = vmax.f32 %v1832, %v1833
        %v1835 = vrot.slane %v1834, 2
        %v1836 = vmax.f32 %v1834, %v1835
        %v1837 = vrot.slane %v1836, 1
        %v1838 = vmax.f32 %v1836, %v1837
        %v1839 = vsub.f32 %v1547, %v1775
        %v1840 = vsub.f32 %v1548, %v1775
        %v1841 = vsub.f32 %v1549, %v1784
        %v1842 = vsub.f32 %v1550, %v1784
        %v1843 = vsub.f32 %v1551, %v1793
        %v1844 = vsub.f32 %v1552, %v1793
        %v1845 = vsub.f32 %v1553, %v1802
        %v1846 = vsub.f32 %v1554, %v1802
        %v1847 = vsub.f32 %v1555, %v1811
        %v1848 = vsub.f32 %v1556, %v1811
        %v1849 = vsub.f32 %v1557, %v1820
        %v1850 = vsub.f32 %v1558, %v1820
        %v1851 = vsub.f32 %v1559, %v1829
        %v1852 = vsub.f32 %v1560, %v1829
        %v1853 = vsub.f32 %v1561, %v1838
        %v1854 = vsub.f32 %v1562, %v1838
        %v1855 = vmul.f32 %v1839, 1.442695
        %v1856 = vpow.pop %v1855
        %v1857 = vmul.f32 %v1840, 1.442695
        %v1858 = vpow.pop %v1857
        %v1859 = vmul.f32 %v1841, 1.442695
        %v1860 = vpow.pop %v1859
        %v1861 = vmul.f32 %v1842, 1.442695
        %v1862 = vpow.pop %v1861
        %v1863 = vmul.f32 %v1843, 1.442695
        %v1864 = vpow.pop %v1863
        %v1865 = vmul.f32 %v1844, 1.442695
        %v1866 = vpow.pop %v1865
        %v1867 = vmul.f32 %v1845, 1.442695
        %v1868 = vpow.pop %v1867
        %v1869 = vmul.f32 %v1846, 1.442695
        %v1870 = vpow.pop %v1869
        %v1871 = vmul.f32 %v1847, 1.442695
        %v1872 = vpow.pop %v1871
        %v1873 = vmul.f32 %v1848, 1.442695
        %v1874 = vpow.pop %v1873
        %v1875 = vmul.f32 %v1849, 1.442695
        %v1876 = vpow.pop %v1875
        %v1877 = vmul.f32 %v1850, 1.442695
        %v1878 = vpow.pop %v1877
        %v1879 = vmul.f32 %v1851, 1.442695
        %v1880 = vpow.pop %v1879
        %v1881 = vmul.f32 %v1852, 1.442695
        %v1882 = vpow.pop %v1881
        %v1883 = vmul.f32 %v1853, 1.442695
        %v1884 = vpow.pop %v1883
        %v1885 = vmul.f32 %v1854, 1.442695
        %v1886 = vpow.pop %v1885
        %v1887 = vsel %vm992, %v1856, 0.0
        %v1888 = vsel %vm992, %v1858, 0.0
        %v1889 = vadd.f32 %v1887, %v1888
        %v1890 = vrot.slane %v1889, 4
        %v1891 = vadd.f32 %v1889, %v1890
        %v1892 = vrot.slane %v1891, 2
        %v1893 = vadd.f32 %v1891, %v1892
        %v1894 = vrot.slane %v1893, 1
        %v1895 = vadd.f32 %v1893, %v1894
        %v1896 = vsel %vm992, %v1860, 0.0
        %v1897 = vsel %vm992, %v1862, 0.0
        %v1898 = vadd.f32 %v1896, %v1897
        %v1899 = vrot.slane %v1898, 4
        %v1900 = vadd.f32 %v1898, %v1899
        %v1901 = vrot.slane %v1900, 2
        %v1902 = vadd.f32 %v1900, %v1901
        %v1903 = vrot.slane %v1902, 1
        %v1904 = vadd.f32 %v1902, %v1903
        %v1905 = vsel %vm992, %v1864, 0.0
        %v1906 = vsel %vm992, %v1866, 0.0
        %v1907 = vadd.f32 %v1905, %v1906
        %v1908 = vrot.slane %v1907, 4
        %v1909 = vadd.f32 %v1907, %v1908
        %v1910 = vrot.slane %v1909, 2
        %v1911 = vadd.f32 %v1909, %v1910
        %v1912 = vrot.slane %v1911, 1
        %v1913 = vadd.f32 %v1911, %v1912
        %v1914 = vsel %vm992, %v1868, 0.0
        %v1915 = vsel %vm992, %v1870, 0.0
        %v1916 = vadd.f32 %v1914, %v1915
        %v1917 = vrot.slane %v1916, 4
        %v1918 = vadd.f32 %v1916, %v1917
        %v1919 = vrot.slane %v1918, 2
        %v1920 = vadd.f32 %v1918, %v1919
        %v1921 = vrot.slane %v1920, 1
        %v1922 = vadd.f32 %v1920, %v1921
        %v1923 = vsel %vm992, %v1872, 0.0
        %v1924 = vsel %vm992, %v1874, 0.0
        %v1925 = vadd.f32 %v1923, %v1924
        %v1926 = vrot.slane %v1925, 4
        %v1927 = vadd.f32 %v1925, %v1926
        %v1928 = vrot.slane %v1927, 2
        %v1929 = vadd.f32 %v1927, %v1928
        %v1930 = vrot.slane %v1929, 1
        %v1931 = vadd.f32 %v1929, %v1930
        %v1932 = vsel %vm992, %v1876, 0.0
        %v1933 = vsel %vm992, %v1878, 0.0
        %v1934 = vadd.f32 %v1932, %v1933
        %v1935 = vrot.slane %v1934, 4
        %v1936 = vadd.f32 %v1934, %v1935
        %v1937 = vrot.slane %v1936, 2
        %v1938 = vadd.f32 %v1936, %v1937
        %v1939 = vrot.slane %v1938, 1
        %v1940 = vadd.f32 %v1938, %v1939
        %v1941 = vsel %vm992, %v1880, 0.0
        %v1942 = vsel %vm992, %v1882, 0.0
        %v1943 = vadd.f32 %v1941, %v1942
        %v1944 = vrot.slane %v1943, 4
        %v1945 = vadd.f32 %v1943, %v1944
        %v1946 = vrot.slane %v1945, 2
        %v1947 = vadd.f32 %v1945, %v1946
        %v1948 = vrot.slane %v1947, 1
        %v1949 = vadd.f32 %v1947, %v1948
        %v1950 = vsel %vm992, %v1884, 0.0
        %v1951 = vsel %vm992, %v1886, 0.0
        %v1952 = vadd.f32 %v1950, %v1951
        %v1953 = vrot.slane %v1952, 4
        %v1954 = vadd.f32 %v1952, %v1953
        %v1955 = vrot.slane %v1954, 2
        %v1956 = vadd.f32 %v1954, %v1955
        %v1957 = vrot.slane %v1956, 1
        %v1958 = vadd.f32 %v1956, %v1957
        %1961 = vrot.lane.b32.xlu0 %v1150, 96
        %v1962 = vpop.permute.xlu0 %1961
        %1963 = vrot.lane.b32.xlu0 %v1155, 96
        %v1964 = vpop.permute.xlu0 %1963
        %v1967 = vmul.f32 %v1856, %v1962
        %v1968 = vmul.f32 %v1858, %v1964
        %v1969 = vmul.f32 %v1860, %v1962
        %v1970 = vmul.f32 %v1862, %v1964
        %v1971 = vmul.f32 %v1864, %v1962
        %v1972 = vmul.f32 %v1866, %v1964
        %v1973 = vmul.f32 %v1868, %v1962
        %v1974 = vmul.f32 %v1870, %v1964
        %v1975 = vmul.f32 %v1872, %v1962
        %v1976 = vmul.f32 %v1874, %v1964
        %v1977 = vmul.f32 %v1876, %v1962
        %v1978 = vmul.f32 %v1878, %v1964
        %v1979 = vmul.f32 %v1880, %v1962
        %v1980 = vmul.f32 %v1882, %v1964
        %v1981 = vmul.f32 %v1884, %v1962
        %v1982 = vmul.f32 %v1886, %v1964
        %v1983 = vsel %vm992, %v1967, 0.0
        %v1984 = vsel %vm992, %v1968, 0.0
        %v1985 = vadd.f32 %v1983, %v1984
        %v1986 = vrot.slane %v1985, 4
        %v1987 = vadd.f32 %v1985, %v1986
        %v1988 = vrot.slane %v1987, 2
        %v1989 = vadd.f32 %v1987, %v1988
        %v1990 = vrot.slane %v1989, 1
        %v1991 = vadd.f32 %v1989, %v1990
        %v1992 = vsel %vm992, %v1969, 0.0
        %v1993 = vsel %vm992, %v1970, 0.0
        %v1994 = vadd.f32 %v1992, %v1993
        %v1995 = vrot.slane %v1994, 4
        %v1996 = vadd.f32 %v1994, %v1995
        %v1997 = vrot.slane %v1996, 2
        %v1998 = vadd.f32 %v1996, %v1997
        %v1999 = vrot.slane %v1998, 1
        %v2000 = vadd.f32 %v1998, %v1999
        %v2001 = vsel %vm992, %v1971, 0.0
        %v2002 = vsel %vm992, %v1972, 0.0
        %v2003 = vadd.f32 %v2001, %v2002
        %v2004 = vrot.slane %v2003, 4
        %v2005 = vadd.f32 %v2003, %v2004
        %v2006 = vrot.slane %v2005, 2
        %v2007 = vadd.f32 %v2005, %v2006
        %v2008 = vrot.slane %v2007, 1
        %v2009 = vadd.f32 %v2007, %v2008
        %v2010 = vsel %vm992, %v1973, 0.0
        %v2011 = vsel %vm992, %v1974, 0.0
        %v2012 = vadd.f32 %v2010, %v2011
        %v2013 = vrot.slane %v2012, 4
        %v2014 = vadd.f32 %v2012, %v2013
        %v2015 = vrot.slane %v2014, 2
        %v2016 = vadd.f32 %v2014, %v2015
        %v2017 = vrot.slane %v2016, 1
        %v2018 = vadd.f32 %v2016, %v2017
        %v2019 = vsel %vm992, %v1975, 0.0
        %v2020 = vsel %vm992, %v1976, 0.0
        %v2021 = vadd.f32 %v2019, %v2020
        %v2022 = vrot.slane %v2021, 4
        %v2023 = vadd.f32 %v2021, %v2022
        %v2024 = vrot.slane %v2023, 2
        %v2025 = vadd.f32 %v2023, %v2024
        %v2026 = vrot.slane %v2025, 1
        %v2027 = vadd.f32 %v2025, %v2026
        %v2028 = vsel %vm992, %v1977, 0.0
        %v2029 = vsel %vm992, %v1978, 0.0
        %v2030 = vadd.f32 %v2028, %v2029
        %v2031 = vrot.slane %v2030, 4
        %v2032 = vadd.f32 %v2030, %v2031
        %v2033 = vrot.slane %v2032, 2
        %v2034 = vadd.f32 %v2032, %v2033
        %v2035 = vrot.slane %v2034, 1
        %v2036 = vadd.f32 %v2034, %v2035
        %v2037 = vsel %vm992, %v1979, 0.0
        %v2038 = vsel %vm992, %v1980, 0.0
        %v2039 = vadd.f32 %v2037, %v2038
        %v2040 = vrot.slane %v2039, 4
        %v2041 = vadd.f32 %v2039, %v2040
        %v2042 = vrot.slane %v2041, 2
        %v2043 = vadd.f32 %v2041, %v2042
        %v2044 = vrot.slane %v2043, 1
        %v2045 = vadd.f32 %v2043, %v2044
        %v2046 = vsel %vm992, %v1981, 0.0
        %v2047 = vsel %vm992, %v1982, 0.0
        %v2048 = vadd.f32 %v2046, %v2047
        %v2049 = vrot.slane %v2048, 4
        %v2050 = vadd.f32 %v2048, %v2049
        %v2051 = vrot.slane %v2050, 2
        %v2052 = vadd.f32 %v2050, %v2051
        %v2053 = vrot.slane %v2052, 1
        %v2054 = vadd.f32 %v2052, %v2053
        %v2055 = vrcp.pop %v1895
        %v2056 = vmul.f32 %v1991, %v2055
        %v2057 = vrcp.pop %v1904
        %v2058 = vmul.f32 %v2000, %v2057
        %v2059 = vrcp.pop %v1913
        %v2060 = vmul.f32 %v2009, %v2059
        %v2061 = vrcp.pop %v1922
        %v2062 = vmul.f32 %v2018, %v2061
        %v2063 = vrcp.pop %v1931
        %v2064 = vmul.f32 %v2027, %v2063
        %v2065 = vrcp.pop %v1940
        %v2066 = vmul.f32 %v2036, %v2065
        %v2067 = vrcp.pop %v1949
        %v2068 = vmul.f32 %v2045, %v2067
        %v2069 = vrcp.pop %v1958
        %v2070 = vmul.f32 %v2054, %v2069
        %v2071 = vld [vmem:[%s23] sm:$0xff]
        %v2072 = vld [vmem:[%s23 + $0x8] sm:$0xff]
        %v2073 = vld [vmem:[%s23 + $0x10] sm:$0xff]
        %v2074 = vld [vmem:[%s23 + $0x18] sm:$0xff]
        %v2075 = vld [vmem:[%s25] sm:$0x1]
        %v2077 = vlaneseq
        %v2078 = vshrl.u32 %v2077, 7
        %v2079 = vsub.s32 0, %v2078
        %v2080 = vrot.slane %v2075, %v2079
        %vm2090 = vcmask 1041409
        %v2091 = vsel %vm2090, %v2058, %v2056
        %vm2092 = vcmask 1042434
        %v2093 = vsel %vm2092, %v2060, %v2091
        %vm2094 = vcmask 1043459
        %v2095 = vsel %vm2094, %v2062, %v2093
        %vm2096 = vcmask 1044484
        %v2097 = vsel %vm2096, %v2064, %v2095
        %vm2098 = vcmask 1045509
        %v2099 = vsel %vm2098, %v2066, %v2097
        %vm2100 = vcmask 1046534
        %v2101 = vsel %vm2100, %v2068, %v2099
        %vm2102 = vcmask 1047559
        %v2103 = vsel %vm2102, %v2070, %v2101
        %v2104 = vsel %vm992, %v2103, 0
        %2106 = vmatprep.subr.mxu0 0.0
        %2107 = vmatpush1.msra.mxu0 0.0
        %2108 = vmatprep.subr.mxu0 0.0
        %2109 = vmatpush1.msra.mxu0 0.0
        %2110 = vmatprep.subr.mxu0 0.0
        %2111 = vmatpush1.msra.mxu0 0.0
        %2112 = vmatprep.subr.mxu0 0.0
        %2113 = vmatpush1.msra.mxu0 0.0
        %2114 = vmatprep.subr.mxu0 0.0
        %2115 = vmatpush1.msra.mxu0 0.0
        %2116 = vmatprep.subr.mxu0 0.0
        %2117 = vmatpush1.msra.mxu0 0.0
        %2118 = vmatprep.subr.mxu0 0.0
        %2119 = vmatpush1.msra.mxu0 0.0
        %2120 = vmatprep.subr.mxu0 0.0
        %2121 = vmatpush1.msra.mxu0 0.0
        %2122 = vmatprep.subr.mxu0 0.0
        %2123 = vmatpush1.msra.mxu0 0.0
        %2124 = vmatprep.subr.mxu0 0.0
        %2125 = vmatpush1.msra.mxu0 0.0
        %2126 = vmatprep.subr.mxu0 0.0
        %2127 = vmatpush1.msra.mxu0 0.0
        %2128 = vmatprep.subr.mxu0 0.0
        %2129 = vmatpush1.msra.mxu0 0.0
        %2130 = vmatprep.subr.mxu0 0.0
        %2131 = vmatpush1.msra.mxu0 %v2074
        %2132 = vmatprep.subr.mxu0 0.0
        %2133 = vmatpush1.msra.mxu0 %v2073
        %2134 = vmatprep.subr.mxu0 0.0
        %2135 = vmatpush1.msra.mxu0 %v2072
        %2136 = vmatprep.subr.mxu0 0.0
        %2137 = vmatpush1.msra.mxu0 %v2071
        %2138 = vmatprep.subr.mxu0 0.0
        %2139 = vmatpush2.msra.mxu0 0.0
        %2140 = vmatprep.subr.mxu0 0.0
        %2141 = vmatpush2.msra.mxu0 0.0
        %2142 = vmatprep.subr.mxu0 0.0
        %2143 = vmatpush2.msra.mxu0 0.0
        %2144 = vmatprep.subr.mxu0 0.0
        %2145 = vmatpush2.msra.mxu0 0.0
        %2146 = vmatprep.subr.mxu0 0.0
        %2147 = vmatpush2.msra.mxu0 0.0
        %2148 = vmatprep.subr.mxu0 0.0
        %2149 = vmatpush2.msra.mxu0 0.0
        %2150 = vmatprep.subr.mxu0 0.0
        %2151 = vmatpush2.msra.mxu0 0.0
        %2152 = vmatprep.subr.mxu0 0.0
        %2153 = vmatpush2.msra.mxu0 0.0
        %2154 = vmatprep.subr.mxu0 0.0
        %2155 = vmatpush2.msra.mxu0 0.0
        %2156 = vmatprep.subr.mxu0 0.0
        %2157 = vmatpush2.msra.mxu0 0.0
        %2158 = vmatprep.subr.mxu0 0.0
        %2159 = vmatpush2.msra.mxu0 0.0
        %2160 = vmatprep.subr.mxu0 0.0
        %2161 = vmatpush2.msra.mxu0 0.0
        %2162 = vmatprep.subr.mxu0 0.0
        %2163 = vmatpush2.msra.mxu0 0.0
        %2164 = vmatprep.subr.mxu0 0.0
        %2165 = vmatpush2.msra.mxu0 0.0
        %2166 = vmatprep.subr.mxu0 0.0
        %2167 = vmatpush2.msra.mxu0 0.0
        %2168 = vmatprep.subr.mxu0 0.0
        %2169 = vmatpush2.msra.mxu0 0.0
        %2170 = vmatprep.mubr.f32.mxu0 0.0
        %2171 = vmatmul.mubr.f32.gmra.mxu0 %v2104
        %v2172 = vpop.f32.mrf.mxu0
        %v2173 = vadd.f32 %v2080, %v2172
        %v2174 = vpop.f32.mrf.mxu0
        %2175 = vdwg.mxu0
        %v2176 = vadd.f32 %v962, %v2173
        %v2177 = vld [vmem:[%s27] sm:$0x1]
        %v2178 = vld [vmem:[%s29] sm:$0x1]
        %v2179 = vsel %vm992, %v2176, 0.0
        %2180 = vadd.xlane.f32.xlu0 %v2179
        %v2181 = vpop.xlane.xlu0 %2180
        %v2182 = vrcp.pop 32.0
        %v2183 = vmul.f32 %v2181, %v2182
        %v2184 = vsub.f32 %v2176, %v2183
        %v2185 = vmul.f32 %v2184, %v2184
        %v2186 = vsel %vm992, %v2185, 0.0
        %2187 = vadd.xlane.f32.xlu0 %v2186
        %v2188 = vpop.xlane.xlu0 %2187
        %v2189 = vmul.f32 %v2188, %v2182
        %v2190 = vadd.f32 %v2189, 1e-05
        %v2191 = vrsqrt.pop %v2190
        %v2192 = vmul.f32 %v2184, %v2191
        %v2194 = vlaneseq
        %v2195 = vshrl.u32 %v2194, 7
        %v2196 = vsub.s32 0, %v2195
        %v2197 = vrot.slane %v2177, %v2196
        %v2199 = vmul.f32 %v2192, %v2197
        %v2201 = vlaneseq
        %v2202 = vshrl.u32 %v2201, 7
        %v2203 = vsub.s32 0, %v2202
        %v2204 = vrot.slane %v2178, %v2203
        %v2206 = vadd.f32 %v2199, %v2204
        %v2207 = vld [vmem:[%s31] sm:$0xff]
        %v2208 = vld [vmem:[%s31 + $0x8] sm:$0xff]
        %v2209 = vld [vmem:[%s31 + $0x10] sm:$0xff]
        %v2210 = vld [vmem:[%s31 + $0x18] sm:$0xff]
        %v2211 = vld [vmem:[%s33] sm:$0x1]
        %v2213 = vlaneseq
        %v2214 = vshrl.u32 %v2213, 7
        %v2215 = vsub.s32 0, %v2214
        %v2216 = vrot.slane %v2211, %v2215
        %v2219 = vsel %vm992, %v2206, 0
        %2221 = vmatprep.subr.mxu0 0.0
        %2222 = vmatpush1.msra.mxu0 0.0
        %2223 = vmatprep.subr.mxu0 0.0
        %2224 = vmatpush1.msra.mxu0 0.0
        %2225 = vmatprep.subr.mxu0 0.0
        %2226 = vmatpush1.msra.mxu0 0.0
        %2227 = vmatprep.subr.mxu0 0.0
        %2228 = vmatpush1.msra.mxu0 0.0
        %2229 = vmatprep.subr.mxu0 0.0
        %2230 = vmatpush1.msra.mxu0 0.0
        %2231 = vmatprep.subr.mxu0 0.0
        %2232 = vmatpush1.msra.mxu0 0.0
        %2233 = vmatprep.subr.mxu0 0.0
        %2234 = vmatpush1.msra.mxu0 0.0
        %2235 = vmatprep.subr.mxu0 0.0
        %2236 = vmatpush1.msra.mxu0 0.0
        %2237 = vmatprep.subr.mxu0 0.0
        %2238 = vmatpush1.msra.mxu0 0.0
        %2239 = vmatprep.subr.mxu0 0.0
        %2240 = vmatpush1.msra.mxu0 0.0
        %2241 = vmatprep.subr.mxu0 0.0
        %2242 = vmatpush1.msra.mxu0 0.0
        %2243 = vmatprep.subr.mxu0 0.0
        %2244 = vmatpush1.msra.mxu0 0.0
        %2245 = vmatprep.subr.mxu0 0.0
        %2246 = vmatpush1.msra.mxu0 %v2210
        %2247 = vmatprep.subr.mxu0 0.0
        %2248 = vmatpush1.msra.mxu0 %v2209
        %2249 = vmatprep.subr.mxu0 0.0
        %2250 = vmatpush1.msra.mxu0 %v2208
        %2251 = vmatprep.subr.mxu0 0.0
        %2252 = vmatpush1.msra.mxu0 %v2207
        %2253 = vmatprep.subr.mxu0 0.0
        %2254 = vmatpush2.msra.mxu0 0.0
        %2255 = vmatprep.subr.mxu0 0.0
        %2256 = vmatpush2.msra.mxu0 0.0
        %2257 = vmatprep.subr.mxu0 0.0
        %2258 = vmatpush2.msra.mxu0 0.0
        %2259 = vmatprep.subr.mxu0 0.0
        %2260 = vmatpush2.msra.mxu0 0.0
        %2261 = vmatprep.subr.mxu0 0.0
        %2262 = vmatpush2.msra.mxu0 0.0
        %2263 = vmatprep.subr.mxu0 0.0
        %2264 = vmatpush2.msra.mxu0 0.0
        %2265 = vmatprep.subr.mxu0 0.0
        %2266 = vmatpush2.msra.mxu0 0.0
        %2267 = vmatprep.subr.mxu0 0.0
        %2268 = vmatpush2.msra.mxu0 0.0
        %2269 = vmatprep.subr.mxu0 0.0
        %2270 = vmatpush2.msra.mxu0 0.0
        %2271 = vmatprep.subr.mxu0 0.0
        %2272 = vmatpush2.msra.mxu0 0.0
        %2273 = vmatprep.subr.mxu0 0.0
        %2274 = vmatpush2.msra.mxu0 0.0
        %2275 = vmatprep.subr.mxu0 0.0
        %2276 = vmatpush2.msra.mxu0 0.0
        %2277 = vmatprep.subr.mxu0 0.0
        %2278 = vmatpush2.msra.mxu0 0.0
        %2279 = vmatprep.subr.mxu0 0.0
        %2280 = vmatpush2.msra.mxu0 0.0
        %2281 = vmatprep.subr.mxu0 0.0
        %2282 = vmatpush2.msra.mxu0 0.0
        %2283 = vmatprep.subr.mxu0 0.0
        %2284 = vmatpush2.msra.mxu0 0.0
        %2285 = vmatprep.mubr.f32.mxu0 0.0
        %2286 = vmatmul.mubr.f32.gmra.mxu0 %v2219
        %v2287 = vpop.f32.mrf.mxu0
        %v2288 = vadd.f32 %v2216, %v2287
        %v2289 = vpop.f32.mrf.mxu0
        %2290 = vdwg.mxu0
        %v2291 = vmax.f32 %v2288, 0.0
        %v2292 = vld [vmem:[%s35] sm:$0xff]
        %v2293 = vld [vmem:[%s35 + $0x8] sm:$0xff]
        %v2294 = vld [vmem:[%s35 + $0x10] sm:$0xff]
        %v2295 = vld [vmem:[%s35 + $0x18] sm:$0xff]
        %v2296 = vld [vmem:[%s35 + $0x20] sm:$0xff]
        %v2297 = vld [vmem:[%s35 + $0x28] sm:$0xff]
        %v2298 = vld [vmem:[%s35 + $0x30] sm:$0xff]
        %v2299 = vld [vmem:[%s35 + $0x38] sm:$0xff]
        %v2300 = vld [vmem:[%s37] sm:$0x1]
        %v2302 = vlaneseq
        %v2303 = vshrl.u32 %v2302, 7
        %v2304 = vsub.s32 0, %v2303
        %v2305 = vrot.slane %v2300, %v2304
        %vm2307 = vcmask 523264
        %v2309 = vsel %vm2307, %v2291, 0
        %2311 = vmatprep.subr.mxu0 0.0
        %2312 = vmatpush1.msra.mxu0 0.0
        %2313 = vmatprep.subr.mxu0 0.0
        %2314 = vmatpush1.msra.mxu0 0.0
        %2315 = vmatprep.subr.mxu0 0.0
        %2316 = vmatpush1.msra.mxu0 0.0
        %2317 = vmatprep.subr.mxu0 0.0
        %2318 = vmatpush1.msra.mxu0 0.0
        %2319 = vmatprep.subr.mxu0 0.0
        %2320 = vmatpush1.msra.mxu0 0.0
        %2321 = vmatprep.subr.mxu0 0.0
        %2322 = vmatpush1.msra.mxu0 0.0
        %2323 = vmatprep.subr.mxu0 0.0
        %2324 = vmatpush1.msra.mxu0 0.0
        %2325 = vmatprep.subr.mxu0 0.0
        %2326 = vmatpush1.msra.mxu0 0.0
        %2327 = vmatprep.subr.mxu0 0.0
        %2328 = vmatpush1.msra.mxu0 %v2299
        %2329 = vmatprep.subr.mxu0 0.0
        %2330 = vmatpush1.msra.mxu0 %v2298
        %2331 = vmatprep.subr.mxu0 0.0
        %2332 = vmatpush1.msra.mxu0 %v2297
        %2333 = vmatprep.subr.mxu0 0.0
        %2334 = vmatpush1.msra.mxu0 %v2296
        %2335 = vmatprep.subr.mxu0 0.0
        %2336 = vmatpush1.msra.mxu0 %v2295
        %2337 = vmatprep.subr.mxu0 0.0
        %2338 = vmatpush1.msra.mxu0 %v2294
        %2339 = vmatprep.subr.mxu0 0.0
        %2340 = vmatpush1.msra.mxu0 %v2293
        %2341 = vmatprep.subr.mxu0 0.0
        %2342 = vmatpush1.msra.mxu0 %v2292
        %2343 = vmatprep.subr.mxu0 0.0
        %2344 = vmatpush2.msra.mxu0 0.0
        %2345 = vmatprep.subr.mxu0 0.0
        %2346 = vmatpush2.msra.mxu0 0.0
        %2347 = vmatprep.subr.mxu0 0.0
        %2348 = vmatpush2.msra.mxu0 0.0
        %2349 = vmatprep.subr.mxu0 0.0
        %2350 = vmatpush2.msra.mxu0 0.0
        %2351 = vmatprep.subr.mxu0 0.0
        %2352 = vmatpush2.msra.mxu0 0.0
        %2353 = vmatprep.subr.mxu0 0.0
        %2354 = vmatpush2.msra.mxu0 0.0
        %2355 = vmatprep.subr.mxu0 0.0
        %2356 = vmatpush2.msra.mxu0 0.0
        %2357 = vmatprep.subr.mxu0 0.0
        %2358 = vmatpush2.msra.mxu0 0.0
        %2359 = vmatprep.subr.mxu0 0.0
        %2360 = vmatpush2.msra.mxu0 0.0
        %2361 = vmatprep.subr.mxu0 0.0
        %2362 = vmatpush2.msra.mxu0 0.0
        %2363 = vmatprep.subr.mxu0 0.0
        %2364 = vmatpush2.msra.mxu0 0.0
        %2365 = vmatprep.subr.mxu0 0.0
        %2366 = vmatpush2.msra.mxu0 0.0
        %2367 = vmatprep.subr.mxu0 0.0
        %2368 = vmatpush2.msra.mxu0 0.0
        %2369 = vmatprep.subr.mxu0 0.0
        %2370 = vmatpush2.msra.mxu0 0.0
        %2371 = vmatprep.subr.mxu0 0.0
        %2372 = vmatpush2.msra.mxu0 0.0
        %2373 = vmatprep.subr.mxu0 0.0
        %2374 = vmatpush2.msra.mxu0 0.0
        %2375 = vmatprep.mubr.f32.mxu0 0.0
        %2376 = vmatmul.mubr.f32.gmra.mxu0 %v2309
        %v2377 = vpop.f32.mrf.mxu0
        %v2378 = vadd.f32 %v2305, %v2377
        %v2379 = vpop.f32.mrf.mxu0
        %2380 = vdwg.mxu0
        %v2381 = vadd.f32 %v2206, %v2378
        %v2382 = vld [vmem:[%s39] sm:$0x1]
        %v2383 = vld [vmem:[%s41] sm:$0x1]
        %v2384 = vsel %vm992, %v2381, 0.0
        %2385 = vadd.xlane.f32.xlu0 %v2384
        %v2386 = vpop.xlane.xlu0 %2385
        %v2387 = vmul.f32 %v2386, %v2182
        %v2388 = vsub.f32 %v2381, %v2387
        %v2389 = vmul.f32 %v2388, %v2388
        %v2390 = vsel %vm992, %v2389, 0.0
        %2391 = vadd.xlane.f32.xlu0 %v2390
        %v2392 = vpop.xlane.xlu0 %2391
        %v2393 = vmul.f32 %v2392, %v2182
        %v2394 = vadd.f32 %v2393, 1e-05
        %v2395 = vrsqrt.pop %v2394
        %v2396 = vmul.f32 %v2388, %v2395
        %v2398 = vlaneseq
        %v2399 = vshrl.u32 %v2398, 7
        %v2400 = vsub.s32 0, %v2399
        %v2401 = vrot.slane %v2382, %v2400
        %v2403 = vmul.f32 %v2396, %v2401
        %v2405 = vlaneseq
        %v2406 = vshrl.u32 %v2405, 7
        %v2407 = vsub.s32 0, %v2406
        %v2408 = vrot.slane %v2383, %v2407
        %v2410 = vadd.f32 %v2403, %v2408
        %2411 = vst.msk [vmem:[%s938] sm:$0xff] %vm992, %v2410
        %v2412 = vadd.f32 %v965, %v1689
        %v2413 = vadd.f32 %v966, %v1694
        %v2414 = vadd.f32 %v967, %v1699
        %v2415 = vadd.f32 %v968, %v1704
        %v2416 = vadd.f32 %v969, %v1709
        %v2417 = vadd.f32 %v970, %v1714
        %v2418 = vadd.f32 %v971, %v1719
        %v2419 = vadd.f32 %v972, %v1724
        %v2420 = vadd.f32 %v973, %v1729
        %v2421 = vadd.f32 %v974, %v1734
        %v2422 = vadd.f32 %v975, %v1739
        %v2423 = vadd.f32 %v976, %v1744
        %v2424 = vadd.f32 %v977, %v1749
        %v2425 = vadd.f32 %v978, %v1754
        %v2426 = vadd.f32 %v979, %v1759
        %v2427 = vadd.f32 %v980, %v1764
        %v2428 = vld [vmem:[%s43] sm:$0x1]
        %v2429 = vld [vmem:[%s45] sm:$0x1]
        %v2430 = vsel %vm1167, %v2412, 0.0
        %2431 = vadd.xlane.f32.xlu0 %v2430
        %v2432 = vpop.xlane.xlu0 %2431
        %v2433 = vsel %vm1167, %v2413, 0.0
        %2434 = vadd.xlane.f32.xlu0 %v2433
        %v2435 = vpop.xlane.xlu0 %2434
        %v2436 = vsel %vm1167, %v2414, 0.0
        %2437 = vadd.xlane.f32.xlu0 %v2436
        %v2438 = vpop.xlane.xlu0 %2437
        %v2439 = vsel %vm1167, %v2415, 0.0
        %2440 = vadd.xlane.f32.xlu0 %v2439
        %v2441 = vpop.xlane.xlu0 %2440
        %v2442 = vsel %vm1167, %v2416, 0.0
        %2443 = vadd.xlane.f32.xlu0 %v2442
        %v2444 = vpop.xlane.xlu0 %2443
        %v2445 = vsel %vm1167, %v2417, 0.0
        %2446 = vadd.xlane.f32.xlu0 %v2445
        %v2447 = vpop.xlane.xlu0 %2446
        %v2448 = vsel %vm1167, %v2418, 0.0
        %2449 = vadd.xlane.f32.xlu0 %v2448
        %v2450 = vpop.xlane.xlu0 %2449
        %v2451 = vsel %vm1167, %v2419, 0.0
        %2452 = vadd.xlane.f32.xlu0 %v2451
        %v2453 = vpop.xlane.xlu0 %2452
        %v2454 = vsel %vm1167, %v2420, 0.0
        %2455 = vadd.xlane.f32.xlu0 %v2454
        %v2456 = vpop.xlane.xlu0 %2455
        %v2457 = vsel %vm1167, %v2421, 0.0
        %2458 = vadd.xlane.f32.xlu0 %v2457
        %v2459 = vpop.xlane.xlu0 %2458
        %v2460 = vsel %vm1167, %v2422, 0.0
        %2461 = vadd.xlane.f32.xlu0 %v2460
        %v2462 = vpop.xlane.xlu0 %2461
        %v2463 = vsel %vm1167, %v2423, 0.0
        %2464 = vadd.xlane.f32.xlu0 %v2463
        %v2465 = vpop.xlane.xlu0 %2464
        %v2466 = vsel %vm1167, %v2424, 0.0
        %2467 = vadd.xlane.f32.xlu0 %v2466
        %v2468 = vpop.xlane.xlu0 %2467
        %v2469 = vsel %vm1167, %v2425, 0.0
        %2470 = vadd.xlane.f32.xlu0 %v2469
        %v2471 = vpop.xlane.xlu0 %2470
        %v2472 = vsel %vm1167, %v2426, 0.0
        %2473 = vadd.xlane.f32.xlu0 %v2472
        %v2474 = vpop.xlane.xlu0 %2473
        %v2475 = vsel %vm1167, %v2427, 0.0
        %2476 = vadd.xlane.f32.xlu0 %v2475
        %v2477 = vpop.xlane.xlu0 %2476
        %v2478 = vrcp.pop 16.0
        %v2479 = vmul.f32 %v2432, %v2478
        %v2480 = vmul.f32 %v2435, %v2478
        %v2481 = vmul.f32 %v2438, %v2478
        %v2482 = vmul.f32 %v2441, %v2478
        %v2483 = vmul.f32 %v2444, %v2478
        %v2484 = vmul.f32 %v2447, %v2478
        %v2485 = vmul.f32 %v2450, %v2478
        %v2486 = vmul.f32 %v2453, %v2478
        %v2487 = vmul.f32 %v2456, %v2478
        %v2488 = vmul.f32 %v2459, %v2478
        %v2489 = vmul.f32 %v2462, %v2478
        %v2490 = vmul.f32 %v2465, %v2478
        %v2491 = vmul.f32 %v2468, %v2478
        %v2492 = vmul.f32 %v2471, %v2478
        %v2493 = vmul.f32 %v2474, %v2478
        %v2494 = vmul.f32 %v2477, %v2478
        %v2495 = vsub.f32 %v2412, %v2479
        %v2496 = vsub.f32 %v2413, %v2480
        %v2497 = vsub.f32 %v2414, %v2481
        %v2498 = vsub.f32 %v2415, %v2482
        %v2499 = vsub.f32 %v2416, %v2483
        %v2500 = vsub.f32 %v2417, %v2484
        %v2501 = vsub.f32 %v2418, %v2485
        %v2502 = vsub.f32 %v2419, %v2486
        %v2503 = vsub.f32 %v2420, %v2487
        %v2504 = vsub.f32 %v2421, %v2488
        %v2505 = vsub.f32 %v2422, %v2489
        %v2506 = vsub.f32 %v2423, %v2490
        %v2507 = vsub.f32 %v2424, %v2491
        %v2508 = vsub.f32 %v2425, %v2492
        %v2509 = vsub.f32 %v2426, %v2493
        %v2510 = vsub.f32 %v2427, %v2494
        %v2511 = vmul.f32 %v2495, %v2495
        %v2512 = vmul.f32 %v2496, %v2496
        %v2513 = vmul.f32 %v2497, %v2497
        %v2514 = vmul.f32 %v2498, %v2498
        %v2515 = vmul.f32 %v2499, %v2499
        %v2516 = vmul.f32 %v2500, %v2500
        %v2517 = vmul.f32 %v2501, %v2501
        %v2518 = vmul.f32 %v2502, %v2502
        %v2519 = vmul.f32 %v2503, %v2503
        %v2520 = vmul.f32 %v2504, %v2504
        %v2521 = vmul.f32 %v2505, %v2505
        %v2522 = vmul.f32 %v2506, %v2506
        %v2523 = vmul.f32 %v2507, %v2507
        %v2524 = vmul.f32 %v2508, %v2508
        %v2525 = vmul.f32 %v2509, %v2509
        %v2526 = vmul.f32 %v2510, %v2510
        %v2527 = vsel %vm1167, %v2511, 0.0
        %2528 = vadd.xlane.f32.xlu0 %v2527
        %v2529 = vpop.xlane.xlu0 %2528
        %v2530 = vsel %vm1167, %v2512, 0.0
        %2531 = vadd.xlane.f32.xlu0 %v2530
        %v2532 = vpop.xlane.xlu0 %2531
        %v2533 = vsel %vm1167, %v2513, 0.0
        %2534 = vadd.xlane.f32.xlu0 %v2533
        %v2535 = vpop.xlane.xlu0 %2534
        %v2536 = vsel %vm1167, %v2514, 0.0
        %2537 = vadd.xlane.f32.xlu0 %v2536
        %v2538 = vpop.xlane.xlu0 %2537
        %v2539 = vsel %vm1167, %v2515, 0.0
        %2540 = vadd.xlane.f32.xlu0 %v2539
        %v2541 = vpop.xlane.xlu0 %2540
        %v2542 = vsel %vm1167, %v2516, 0.0
        %2543 = vadd.xlane.f32.xlu0 %v2542
        %v2544 = vpop.xlane.xlu0 %2543
        %v2545 = vsel %vm1167, %v2517, 0.0
        %2546 = vadd.xlane.f32.xlu0 %v2545
        %v2547 = vpop.xlane.xlu0 %2546
        %v2548 = vsel %vm1167, %v2518, 0.0
        %2549 = vadd.xlane.f32.xlu0 %v2548
        %v2550 = vpop.xlane.xlu0 %2549
        %v2551 = vsel %vm1167, %v2519, 0.0
        %2552 = vadd.xlane.f32.xlu0 %v2551
        %v2553 = vpop.xlane.xlu0 %2552
        %v2554 = vsel %vm1167, %v2520, 0.0
        %2555 = vadd.xlane.f32.xlu0 %v2554
        %v2556 = vpop.xlane.xlu0 %2555
        %v2557 = vsel %vm1167, %v2521, 0.0
        %2558 = vadd.xlane.f32.xlu0 %v2557
        %v2559 = vpop.xlane.xlu0 %2558
        %v2560 = vsel %vm1167, %v2522, 0.0
        %2561 = vadd.xlane.f32.xlu0 %v2560
        %v2562 = vpop.xlane.xlu0 %2561
        %v2563 = vsel %vm1167, %v2523, 0.0
        %2564 = vadd.xlane.f32.xlu0 %v2563
        %v2565 = vpop.xlane.xlu0 %2564
        %v2566 = vsel %vm1167, %v2524, 0.0
        %2567 = vadd.xlane.f32.xlu0 %v2566
        %v2568 = vpop.xlane.xlu0 %2567
        %v2569 = vsel %vm1167, %v2525, 0.0
        %2570 = vadd.xlane.f32.xlu0 %v2569
        %v2571 = vpop.xlane.xlu0 %2570
        %v2572 = vsel %vm1167, %v2526, 0.0
        %2573 = vadd.xlane.f32.xlu0 %v2572
        %v2574 = vpop.xlane.xlu0 %2573
        %v2575 = vmul.f32 %v2529, %v2478
        %v2576 = vmul.f32 %v2532, %v2478
        %v2577 = vmul.f32 %v2535, %v2478
        %v2578 = vmul.f32 %v2538, %v2478
        %v2579 = vmul.f32 %v2541, %v2478
        %v2580 = vmul.f32 %v2544, %v2478
        %v2581 = vmul.f32 %v2547, %v2478
        %v2582 = vmul.f32 %v2550, %v2478
        %v2583 = vmul.f32 %v2553, %v2478
        %v2584 = vmul.f32 %v2556, %v2478
        %v2585 = vmul.f32 %v2559, %v2478
        %v2586 = vmul.f32 %v2562, %v2478
        %v2587 = vmul.f32 %v2565, %v2478
        %v2588 = vmul.f32 %v2568, %v2478
        %v2589 = vmul.f32 %v2571, %v2478
        %v2590 = vmul.f32 %v2574, %v2478
        %v2591 = vadd.f32 %v2575, 1e-05
        %v2592 = vadd.f32 %v2576, 1e-05
        %v2593 = vadd.f32 %v2577, 1e-05
        %v2594 = vadd.f32 %v2578, 1e-05
        %v2595 = vadd.f32 %v2579, 1e-05
        %v2596 = vadd.f32 %v2580, 1e-05
        %v2597 = vadd.f32 %v2581, 1e-05
        %v2598 = vadd.f32 %v2582, 1e-05
        %v2599 = vadd.f32 %v2583, 1e-05
        %v2600 = vadd.f32 %v2584, 1e-05
        %v2601 = vadd.f32 %v2585, 1e-05
        %v2602 = vadd.f32 %v2586, 1e-05
        %v2603 = vadd.f32 %v2587, 1e-05
        %v2604 = vadd.f32 %v2588, 1e-05
        %v2605 = vadd.f32 %v2589, 1e-05
        %v2606 = vadd.f32 %v2590, 1e-05
        %v2607 = vrsqrt.pop %v2591
        %v2608 = vrsqrt.pop %v2592
        %v2609 = vrsqrt.pop %v2593
        %v2610 = vrsqrt.pop %v2594
        %v2611 = vrsqrt.pop %v2595
        %v2612 = vrsqrt.pop %v2596
        %v2613 = vrsqrt.pop %v2597
        %v2614 = vrsqrt.pop %v2598
        %v2615 = vrsqrt.pop %v2599
        %v2616 = vrsqrt.pop %v2600
        %v2617 = vrsqrt.pop %v2601
        %v2618 = vrsqrt.pop %v2602
        %v2619 = vrsqrt.pop %v2603
        %v2620 = vrsqrt.pop %v2604
        %v2621 = vrsqrt.pop %v2605
        %v2622 = vrsqrt.pop %v2606
        %v2623 = vmul.f32 %v2495, %v2607
        %v2624 = vmul.f32 %v2496, %v2608
        %v2625 = vmul.f32 %v2497, %v2609
        %v2626 = vmul.f32 %v2498, %v2610
        %v2627 = vmul.f32 %v2499, %v2611
        %v2628 = vmul.f32 %v2500, %v2612
        %v2629 = vmul.f32 %v2501, %v2613
        %v2630 = vmul.f32 %v2502, %v2614
        %v2631 = vmul.f32 %v2503, %v2615
        %v2632 = vmul.f32 %v2504, %v2616
        %v2633 = vmul.f32 %v2505, %v2617
        %v2634 = vmul.f32 %v2506, %v2618
        %v2635 = vmul.f32 %v2507, %v2619
        %v2636 = vmul.f32 %v2508, %v2620
        %v2637 = vmul.f32 %v2509, %v2621
        %v2638 = vmul.f32 %v2510, %v2622
        %v2640 = vlaneseq
        %v2641 = vshrl.u32 %v2640, 7
        %v2642 = vsub.s32 0, %v2641
        %v2643 = vrot.slane %v2428, %v2642
        %v2645 = vmul.f32 %v2623, %v2643
        %v2646 = vmul.f32 %v2624, %v2643
        %v2647 = vmul.f32 %v2625, %v2643
        %v2648 = vmul.f32 %v2626, %v2643
        %v2649 = vmul.f32 %v2627, %v2643
        %v2650 = vmul.f32 %v2628, %v2643
        %v2651 = vmul.f32 %v2629, %v2643
        %v2652 = vmul.f32 %v2630, %v2643
        %v2653 = vmul.f32 %v2631, %v2643
        %v2654 = vmul.f32 %v2632, %v2643
        %v2655 = vmul.f32 %v2633, %v2643
        %v2656 = vmul.f32 %v2634, %v2643
        %v2657 = vmul.f32 %v2635, %v2643
        %v2658 = vmul.f32 %v2636, %v2643
        %v2659 = vmul.f32 %v2637, %v2643
        %v2660 = vmul.f32 %v2638, %v2643
        %v2662 = vlaneseq
        %v2663 = vshrl.u32 %v2662, 7
        %v2664 = vsub.s32 0, %v2663
        %v2665 = vrot.slane %v2429, %v2664
        %v2667 = vadd.f32 %v2645, %v2665
        %v2668 = vadd.f32 %v2646, %v2665
        %v2669 = vadd.f32 %v2647, %v2665
        %v2670 = vadd.f32 %v2648, %v2665
        %v2671 = vadd.f32 %v2649, %v2665
        %v2672 = vadd.f32 %v2650, %v2665
        %v2673 = vadd.f32 %v2651, %v2665
        %v2674 = vadd.f32 %v2652, %v2665
        %v2675 = vadd.f32 %v2653, %v2665
        %v2676 = vadd.f32 %v2654, %v2665
        %v2677 = vadd.f32 %v2655, %v2665
        %v2678 = vadd.f32 %v2656, %v2665
        %v2679 = vadd.f32 %v2657, %v2665
        %v2680 = vadd.f32 %v2658, %v2665
        %v2681 = vadd.f32 %v2659, %v2665
        %v2682 = vadd.f32 %v2660, %v2665
        %v2683 = vld [vmem:[%s47] sm:$0xff]
        %v2684 = vld [vmem:[%s47 + $0x8] sm:$0xff]
        %v2685 = vld [vmem:[%s49] sm:$0x1]
        %v2687 = vlaneseq
        %v2688 = vshrl.u32 %v2687, 7
        %v2689 = vsub.s32 0, %v2688
        %v2690 = vrot.slane %v2685, %v2689
        %v2693 = vsel %vm1167, %v2667, 0
        %v2696 = vsel %vm1167, %v2668, 0
        %v2699 = vsel %vm1167, %v2669, 0
        %v2702 = vsel %vm1167, %v2670, 0
        %v2705 = vsel %vm1167, %v2671, 0
        %v2708 = vsel %vm1167, %v2672, 0
        %v2711 = vsel %vm1167, %v2673, 0
        %v2714 = vsel %vm1167, %v2674, 0
        %v2717 = vsel %vm1167, %v2675, 0
        %v2720 = vsel %vm1167, %v2676, 0
        %v2723 = vsel %vm1167, %v2677, 0
        %v2726 = vsel %vm1167, %v2678, 0
        %v2729 = vsel %vm1167, %v2679, 0
        %v2732 = vsel %vm1167, %v2680, 0
        %v2735 = vsel %vm1167, %v2681, 0
        %v2738 = vsel %vm1167, %v2682, 0
        %2740 = vmatprep.subr.mxu0 0.0
        %2741 = vmatpush1.msra.mxu0 0.0
        %2742 = vmatprep.subr.mxu0 0.0
        %2743 = vmatpush1.msra.mxu0 0.0
        %2744 = vmatprep.subr.mxu0 0.0
        %2745 = vmatpush1.msra.mxu0 0.0
        %2746 = vmatprep.subr.mxu0 0.0
        %2747 = vmatpush1.msra.mxu0 0.0
        %2748 = vmatprep.subr.mxu0 0.0
        %2749 = vmatpush1.msra.mxu0 0.0
        %2750 = vmatprep.subr.mxu0 0.0
        %2751 = vmatpush1.msra.mxu0 0.0
        %2752 = vmatprep.subr.mxu0 0.0
        %2753 = vmatpush1.msra.mxu0 0.0
        %2754 = vmatprep.subr.mxu0 0.0
        %2755 = vmatpush1.msra.mxu0 0.0
        %2756 = vmatprep.subr.mxu0 0.0
        %2757 = vmatpush1.msra.mxu0 0.0
        %2758 = vmatprep.subr.mxu0 0.0
        %2759 = vmatpush1.msra.mxu0 0.0
        %2760 = vmatprep.subr.mxu0 0.0
        %2761 = vmatpush1.msra.mxu0 0.0
        %2762 = vmatprep.subr.mxu0 0.0
        %2763 = vmatpush1.msra.mxu0 0.0
        %2764 = vmatprep.subr.mxu0 0.0
        %2765 = vmatpush1.msra.mxu0 0.0
        %2766 = vmatprep.subr.mxu0 0.0
        %2767 = vmatpush1.msra.mxu0 0.0
        %2768 = vmatprep.subr.mxu0 0.0
        %2769 = vmatpush1.msra.mxu0 %v2684
        %2770 = vmatprep.subr.mxu0 0.0
        %2771 = vmatpush1.msra.mxu0 %v2683
        %2772 = vmatprep.subr.mxu0 0.0
        %2773 = vmatpush2.msra.mxu0 0.0
        %2774 = vmatprep.subr.mxu0 0.0
        %2775 = vmatpush2.msra.mxu0 0.0
        %2776 = vmatprep.subr.mxu0 0.0
        %2777 = vmatpush2.msra.mxu0 0.0
        %2778 = vmatprep.subr.mxu0 0.0
        %2779 = vmatpush2.msra.mxu0 0.0
        %2780 = vmatprep.subr.mxu0 0.0
        %2781 = vmatpush2.msra.mxu0 0.0
        %2782 = vmatprep.subr.mxu0 0.0
        %2783 = vmatpush2.msra.mxu0 0.0
        %2784 = vmatprep.subr.mxu0 0.0
        %2785 = vmatpush2.msra.mxu0 0.0
        %2786 = vmatprep.subr.mxu0 0.0
        %2787 = vmatpush2.msra.mxu0 0.0
        %2788 = vmatprep.subr.mxu0 0.0
        %2789 = vmatpush2.msra.mxu0 0.0
        %2790 = vmatprep.subr.mxu0 0.0
        %2791 = vmatpush2.msra.mxu0 0.0
        %2792 = vmatprep.subr.mxu0 0.0
        %2793 = vmatpush2.msra.mxu0 0.0
        %2794 = vmatprep.subr.mxu0 0.0
        %2795 = vmatpush2.msra.mxu0 0.0
        %2796 = vmatprep.subr.mxu0 0.0
        %2797 = vmatpush2.msra.mxu0 0.0
        %2798 = vmatprep.subr.mxu0 0.0
        %2799 = vmatpush2.msra.mxu0 0.0
        %2800 = vmatprep.subr.mxu0 0.0
        %2801 = vmatpush2.msra.mxu0 0.0
        %2802 = vmatprep.subr.mxu0 0.0
        %2803 = vmatpush2.msra.mxu0 0.0
        %2804 = vmatprep.mubr.f32.mxu0 0.0
        %2805 = vmatmul.mubr.f32.gmra.mxu0 %v2693
        %v2806 = vpop.f32.mrf.mxu0
        %v2807 = vadd.f32 %v2690, %v2806
        %v2808 = vpop.f32.mrf.mxu0
        %2809 = vmatprep.mubr.f32.mxu0 0.0
        %2810 = vmatmul.mubr.f32.gmra.mxu0 %v2696
        %v2811 = vpop.f32.mrf.mxu0
        %v2812 = vadd.f32 %v2690, %v2811
        %v2813 = vpop.f32.mrf.mxu0
        %2814 = vmatprep.mubr.f32.mxu0 0.0
        %2815 = vmatmul.mubr.f32.gmra.mxu0 %v2699
        %v2816 = vpop.f32.mrf.mxu0
        %v2817 = vadd.f32 %v2690, %v2816
        %v2818 = vpop.f32.mrf.mxu0
        %2819 = vmatprep.mubr.f32.mxu0 0.0
        %2820 = vmatmul.mubr.f32.gmra.mxu0 %v2702
        %v2821 = vpop.f32.mrf.mxu0
        %v2822 = vadd.f32 %v2690, %v2821
        %v2823 = vpop.f32.mrf.mxu0
        %2824 = vmatprep.mubr.f32.mxu0 0.0
        %2825 = vmatmul.mubr.f32.gmra.mxu0 %v2705
        %v2826 = vpop.f32.mrf.mxu0
        %v2827 = vadd.f32 %v2690, %v2826
        %v2828 = vpop.f32.mrf.mxu0
        %2829 = vmatprep.mubr.f32.mxu0 0.0
        %2830 = vmatmul.mubr.f32.gmra.mxu0 %v2708
        %v2831 = vpop.f32.mrf.mxu0
        %v2832 = vadd.f32 %v2690, %v2831
        %v2833 = vpop.f32.mrf.mxu0
        %2834 = vmatprep.mubr.f32.mxu0 0.0
        %2835 = vmatmul.mubr.f32.gmra.mxu0 %v2711
        %v2836 = vpop.f32.mrf.mxu0
        %v2837 = vadd.f32 %v2690, %v2836
        %v2838 = vpop.f32.mrf.mxu0
        %2839 = vmatprep.mubr.f32.mxu0 0.0
        %2840 = vmatmul.mubr.f32.gmra.mxu0 %v2714
        %v2841 = vpop.f32.mrf.mxu0
        %v2842 = vadd.f32 %v2690, %v2841
        %v2843 = vpop.f32.mrf.mxu0
        %2844 = vmatprep.mubr.f32.mxu0 0.0
        %2845 = vmatmul.mubr.f32.gmra.mxu0 %v2717
        %v2846 = vpop.f32.mrf.mxu0
        %v2847 = vadd.f32 %v2690, %v2846
        %v2848 = vpop.f32.mrf.mxu0
        %2849 = vmatprep.mubr.f32.mxu0 0.0
        %2850 = vmatmul.mubr.f32.gmra.mxu0 %v2720
        %v2851 = vpop.f32.mrf.mxu0
        %v2852 = vadd.f32 %v2690, %v2851
        %v2853 = vpop.f32.mrf.mxu0
        %2854 = vmatprep.mubr.f32.mxu0 0.0
        %2855 = vmatmul.mubr.f32.gmra.mxu0 %v2723
        %v2856 = vpop.f32.mrf.mxu0
        %v2857 = vadd.f32 %v2690, %v2856
        %v2858 = vpop.f32.mrf.mxu0
        %2859 = vmatprep.mubr.f32.mxu0 0.0
        %2860 = vmatmul.mubr.f32.gmra.mxu0 %v2726
        %v2861 = vpop.f32.mrf.mxu0
        %v2862 = vadd.f32 %v2690, %v2861
        %v2863 = vpop.f32.mrf.mxu0
        %2864 = vmatprep.mubr.f32.mxu0 0.0
        %2865 = vmatmul.mubr.f32.gmra.mxu0 %v2729
        %v2866 = vpop.f32.mrf.mxu0
        %v2867 = vadd.f32 %v2690, %v2866
        %v2868 = vpop.f32.mrf.mxu0
        %2869 = vmatprep.mubr.f32.mxu0 0.0
        %2870 = vmatmul.mubr.f32.gmra.mxu0 %v2732
        %v2871 = vpop.f32.mrf.mxu0
        %v2872 = vadd.f32 %v2690, %v2871
        %v2873 = vpop.f32.mrf.mxu0
        %2874 = vmatprep.mubr.f32.mxu0 0.0
        %2875 = vmatmul.mubr.f32.gmra.mxu0 %v2735
        %v2876 = vpop.f32.mrf.mxu0
        %v2877 = vadd.f32 %v2690, %v2876
        %v2878 = vpop.f32.mrf.mxu0
        %2879 = vmatprep.mubr.f32.mxu0 0.0
        %2880 = vmatmul.mubr.f32.gmra.mxu0 %v2738
        %v2881 = vpop.f32.mrf.mxu0
        %v2882 = vadd.f32 %v2690, %v2881
        %v2883 = vpop.f32.mrf.mxu0
        %2884 = vdwg.mxu0
        %v2885 = vmax.f32 %v2807, 0.0
        %v2886 = vmax.f32 %v2812, 0.0
        %v2887 = vmax.f32 %v2817, 0.0
        %v2888 = vmax.f32 %v2822, 0.0
        %v2889 = vmax.f32 %v2827, 0.0
        %v2890 = vmax.f32 %v2832, 0.0
        %v2891 = vmax.f32 %v2837, 0.0
        %v2892 = vmax.f32 %v2842, 0.0
        %v2893 = vmax.f32 %v2847, 0.0
        %v2894 = vmax.f32 %v2852, 0.0
        %v2895 = vmax.f32 %v2857, 0.0
        %v2896 = vmax.f32 %v2862, 0.0
        %v2897 = vmax.f32 %v2867, 0.0
        %v2898 = vmax.f32 %v2872, 0.0
        %v2899 = vmax.f32 %v2877, 0.0
        %v2900 = vmax.f32 %v2882, 0.0
        %v2901 = vld [vmem:[%s51] sm:$0xff]
        %v2902 = vld [vmem:[%s51 + $0x8] sm:$0xff]
        %v2903 = vld [vmem:[%s53] sm:$0x1]
        %v2905 = vlaneseq
        %v2906 = vshrl.u32 %v2905, 7
        %v2907 = vsub.s32 0, %v2906
        %v2908 = vrot.slane %v2903, %v2907
        %v2911 = vsel %vm1167, %v2885, 0
        %v2914 = vsel %vm1167, %v2886, 0
        %v2917 = vsel %vm1167, %v2887, 0
        %v2920 = vsel %vm1167, %v2888, 0
        %v2923 = vsel %vm1167, %v2889, 0
        %v2926 = vsel %vm1167, %v2890, 0
        %v2929 = vsel %vm1167, %v2891, 0
        %v2932 = vsel %vm1167, %v2892, 0
        %v2935 = vsel %vm1167, %v2893, 0
        %v2938 = vsel %vm1167, %v2894, 0
        %v2941 = vsel %vm1167, %v2895, 0
        %v2944 = vsel %vm1167, %v2896, 0
        %v2947 = vsel %vm1167, %v2897, 0
        %v2950 = vsel %vm1167, %v2898, 0
        %v2953 = vsel %vm1167, %v2899, 0
        %v2956 = vsel %vm1167, %v2900, 0
        %2958 = vmatprep.subr.mxu0 0.0
        %2959 = vmatpush1.msra.mxu0 0.0
        %2960 = vmatprep.subr.mxu0 0.0
        %2961 = vmatpush1.msra.mxu0 0.0
        %2962 = vmatprep.subr.mxu0 0.0
        %2963 = vmatpush1.msra.mxu0 0.0
        %2964 = vmatprep.subr.mxu0 0.0
        %2965 = vmatpush1.msra.mxu0 0.0
        %2966 = vmatprep.subr.mxu0 0.0
        %2967 = vmatpush1.msra.mxu0 0.0
        %2968 = vmatprep.subr.mxu0 0.0
        %2969 = vmatpush1.msra.mxu0 0.0
        %2970 = vmatprep.subr.mxu0 0.0
        %2971 = vmatpush1.msra.mxu0 0.0
        %2972 = vmatprep.subr.mxu0 0.0
        %2973 = vmatpush1.msra.mxu0 0.0
        %2974 = vmatprep.subr.mxu0 0.0
        %2975 = vmatpush1.msra.mxu0 0.0
        %2976 = vmatprep.subr.mxu0 0.0
        %2977 = vmatpush1.msra.mxu0 0.0
        %2978 = vmatprep.subr.mxu0 0.0
        %2979 = vmatpush1.msra.mxu0 0.0
        %2980 = vmatprep.subr.mxu0 0.0
        %2981 = vmatpush1.msra.mxu0 0.0
        %2982 = vmatprep.subr.mxu0 0.0
        %2983 = vmatpush1.msra.mxu0 0.0
        %2984 = vmatprep.subr.mxu0 0.0
        %2985 = vmatpush1.msra.mxu0 0.0
        %2986 = vmatprep.subr.mxu0 0.0
        %2987 = vmatpush1.msra.mxu0 %v2902
        %2988 = vmatprep.subr.mxu0 0.0
        %2989 = vmatpush1.msra.mxu0 %v2901
        %2990 = vmatprep.subr.mxu0 0.0
        %2991 = vmatpush2.msra.mxu0 0.0
        %2992 = vmatprep.subr.mxu0 0.0
        %2993 = vmatpush2.msra.mxu0 0.0
        %2994 = vmatprep.subr.mxu0 0.0
        %2995 = vmatpush2.msra.mxu0 0.0
        %2996 = vmatprep.subr.mxu0 0.0
        %2997 = vmatpush2.msra.mxu0 0.0
        %2998 = vmatprep.subr.mxu0 0.0
        %2999 = vmatpush2.msra.mxu0 0.0
        %3000 = vmatprep.subr.mxu0 0.0
        %3001 = vmatpush2.msra.mxu0 0.0
        %3002 = vmatprep.subr.mxu0 0.0
        %3003 = vmatpush2.msra.mxu0 0.0
        %3004 = vmatprep.subr.mxu0 0.0
        %3005 = vmatpush2.msra.mxu0 0.0
        %3006 = vmatprep.subr.mxu0 0.0
        %3007 = vmatpush2.msra.mxu0 0.0
        %3008 = vmatprep.subr.mxu0 0.0
        %3009 = vmatpush2.msra.mxu0 0.0
        %3010 = vmatprep.subr.mxu0 0.0
        %3011 = vmatpush2.msra.mxu0 0.0
        %3012 = vmatprep.subr.mxu0 0.0
        %3013 = vmatpush2.msra.mxu0 0.0
        %3014 = vmatprep.subr.mxu0 0.0
        %3015 = vmatpush2.msra.mxu0 0.0
        %3016 = vmatprep.subr.mxu0 0.0
        %3017 = vmatpush2.msra.mxu0 0.0
        %3018 = vmatprep.subr.mxu0 0.0
        %3019 = vmatpush2.msra.mxu0 0.0
        %3020 = vmatprep.subr.mxu0 0.0
        %3021 = vmatpush2.msra.mxu0 0.0
        %3022 = vmatprep.mubr.f32.mxu0 0.0
        %3023 = vmatmul.mubr.f32.gmra.mxu0 %v2911
        %v3024 = vpop.f32.mrf.mxu0
        %v3025 = vadd.f32 %v2908, %v3024
        %v3026 = vpop.f32.mrf.mxu0
        %3027 = vmatprep.mubr.f32.mxu0 0.0
        %3028 = vmatmul.mubr.f32.gmra.mxu0 %v2914
        %v3029 = vpop.f32.mrf.mxu0
        %v3030 = vadd.f32 %v2908, %v3029
        %v3031 = vpop.f32.mrf.mxu0
        %3032 = vmatprep.mubr.f32.mxu0 0.0
        %3033 = vmatmul.mubr.f32.gmra.mxu0 %v2917
        %v3034 = vpop.f32.mrf.mxu0
        %v3035 = vadd.f32 %v2908, %v3034
        %v3036 = vpop.f32.mrf.mxu0
        %3037 = vmatprep.mubr.f32.mxu0 0.0
        %3038 = vmatmul.mubr.f32.gmra.mxu0 %v2920
        %v3039 = vpop.f32.mrf.mxu0
        %v3040 = vadd.f32 %v2908, %v3039
        %v3041 = vpop.f32.mrf.mxu0
        %3042 = vmatprep.mubr.f32.mxu0 0.0
        %3043 = vmatmul.mubr.f32.gmra.mxu0 %v2923
        %v3044 = vpop.f32.mrf.mxu0
        %v3045 = vadd.f32 %v2908, %v3044
        %v3046 = vpop.f32.mrf.mxu0
        %3047 = vmatprep.mubr.f32.mxu0 0.0
        %3048 = vmatmul.mubr.f32.gmra.mxu0 %v2926
        %v3049 = vpop.f32.mrf.mxu0
        %v3050 = vadd.f32 %v2908, %v3049
        %v3051 = vpop.f32.mrf.mxu0
        %3052 = vmatprep.mubr.f32.mxu0 0.0
        %3053 = vmatmul.mubr.f32.gmra.mxu0 %v2929
        %v3054 = vpop.f32.mrf.mxu0
        %v3055 = vadd.f32 %v2908, %v3054
        %v3056 = vpop.f32.mrf.mxu0
        %3057 = vmatprep.mubr.f32.mxu0 0.0
        %3058 = vmatmul.mubr.f32.gmra.mxu0 %v2932
        %v3059 = vpop.f32.mrf.mxu0
        %v3060 = vadd.f32 %v2908, %v3059
        %v3061 = vpop.f32.mrf.mxu0
        %3062 = vmatprep.mubr.f32.mxu0 0.0
        %3063 = vmatmul.mubr.f32.gmra.mxu0 %v2935
        %v3064 = vpop.f32.mrf.mxu0
        %v3065 = vadd.f32 %v2908, %v3064
        %v3066 = vpop.f32.mrf.mxu0
        %3067 = vmatprep.mubr.f32.mxu0 0.0
        %3068 = vmatmul.mubr.f32.gmra.mxu0 %v2938
        %v3069 = vpop.f32.mrf.mxu0
        %v3070 = vadd.f32 %v2908, %v3069
        %v3071 = vpop.f32.mrf.mxu0
        %3072 = vmatprep.mubr.f32.mxu0 0.0
        %3073 = vmatmul.mubr.f32.gmra.mxu0 %v2941
        %v3074 = vpop.f32.mrf.mxu0
        %v3075 = vadd.f32 %v2908, %v3074
        %v3076 = vpop.f32.mrf.mxu0
        %3077 = vmatprep.mubr.f32.mxu0 0.0
        %3078 = vmatmul.mubr.f32.gmra.mxu0 %v2944
        %v3079 = vpop.f32.mrf.mxu0
        %v3080 = vadd.f32 %v2908, %v3079
        %v3081 = vpop.f32.mrf.mxu0
        %3082 = vmatprep.mubr.f32.mxu0 0.0
        %3083 = vmatmul.mubr.f32.gmra.mxu0 %v2947
        %v3084 = vpop.f32.mrf.mxu0
        %v3085 = vadd.f32 %v2908, %v3084
        %v3086 = vpop.f32.mrf.mxu0
        %3087 = vmatprep.mubr.f32.mxu0 0.0
        %3088 = vmatmul.mubr.f32.gmra.mxu0 %v2950
        %v3089 = vpop.f32.mrf.mxu0
        %v3090 = vadd.f32 %v2908, %v3089
        %v3091 = vpop.f32.mrf.mxu0
        %3092 = vmatprep.mubr.f32.mxu0 0.0
        %3093 = vmatmul.mubr.f32.gmra.mxu0 %v2953
        %v3094 = vpop.f32.mrf.mxu0
        %v3095 = vadd.f32 %v2908, %v3094
        %v3096 = vpop.f32.mrf.mxu0
        %3097 = vmatprep.mubr.f32.mxu0 0.0
        %3098 = vmatmul.mubr.f32.gmra.mxu0 %v2956
        %v3099 = vpop.f32.mrf.mxu0
        %v3100 = vadd.f32 %v2908, %v3099
        %v3101 = vpop.f32.mrf.mxu0
        %3102 = vdwg.mxu0
        %v3103 = vadd.f32 %v2667, %v3025
        %v3104 = vadd.f32 %v2668, %v3030
        %v3105 = vadd.f32 %v2669, %v3035
        %v3106 = vadd.f32 %v2670, %v3040
        %v3107 = vadd.f32 %v2671, %v3045
        %v3108 = vadd.f32 %v2672, %v3050
        %v3109 = vadd.f32 %v2673, %v3055
        %v3110 = vadd.f32 %v2674, %v3060
        %v3111 = vadd.f32 %v2675, %v3065
        %v3112 = vadd.f32 %v2676, %v3070
        %v3113 = vadd.f32 %v2677, %v3075
        %v3114 = vadd.f32 %v2678, %v3080
        %v3115 = vadd.f32 %v2679, %v3085
        %v3116 = vadd.f32 %v2680, %v3090
        %v3117 = vadd.f32 %v2681, %v3095
        %v3118 = vadd.f32 %v2682, %v3100
        %v3119 = vld [vmem:[%s55] sm:$0x1]
        %v3120 = vld [vmem:[%s57] sm:$0x1]
        %v3121 = vsel %vm1167, %v3103, 0.0
        %3122 = vadd.xlane.f32.xlu0 %v3121
        %v3123 = vpop.xlane.xlu0 %3122
        %v3124 = vsel %vm1167, %v3104, 0.0
        %3125 = vadd.xlane.f32.xlu0 %v3124
        %v3126 = vpop.xlane.xlu0 %3125
        %v3127 = vsel %vm1167, %v3105, 0.0
        %3128 = vadd.xlane.f32.xlu0 %v3127
        %v3129 = vpop.xlane.xlu0 %3128
        %v3130 = vsel %vm1167, %v3106, 0.0
        %3131 = vadd.xlane.f32.xlu0 %v3130
        %v3132 = vpop.xlane.xlu0 %3131
        %v3133 = vsel %vm1167, %v3107, 0.0
        %3134 = vadd.xlane.f32.xlu0 %v3133
        %v3135 = vpop.xlane.xlu0 %3134
        %v3136 = vsel %vm1167, %v3108, 0.0
        %3137 = vadd.xlane.f32.xlu0 %v3136
        %v3138 = vpop.xlane.xlu0 %3137
        %v3139 = vsel %vm1167, %v3109, 0.0
        %3140 = vadd.xlane.f32.xlu0 %v3139
        %v3141 = vpop.xlane.xlu0 %3140
        %v3142 = vsel %vm1167, %v3110, 0.0
        %3143 = vadd.xlane.f32.xlu0 %v3142
        %v3144 = vpop.xlane.xlu0 %3143
        %v3145 = vsel %vm1167, %v3111, 0.0
        %3146 = vadd.xlane.f32.xlu0 %v3145
        %v3147 = vpop.xlane.xlu0 %3146
        %v3148 = vsel %vm1167, %v3112, 0.0
        %3149 = vadd.xlane.f32.xlu0 %v3148
        %v3150 = vpop.xlane.xlu0 %3149
        %v3151 = vsel %vm1167, %v3113, 0.0
        %3152 = vadd.xlane.f32.xlu0 %v3151
        %v3153 = vpop.xlane.xlu0 %3152
        %v3154 = vsel %vm1167, %v3114, 0.0
        %3155 = vadd.xlane.f32.xlu0 %v3154
        %v3156 = vpop.xlane.xlu0 %3155
        %v3157 = vsel %vm1167, %v3115, 0.0
        %3158 = vadd.xlane.f32.xlu0 %v3157
        %v3159 = vpop.xlane.xlu0 %3158
        %v3160 = vsel %vm1167, %v3116, 0.0
        %3161 = vadd.xlane.f32.xlu0 %v3160
        %v3162 = vpop.xlane.xlu0 %3161
        %v3163 = vsel %vm1167, %v3117, 0.0
        %3164 = vadd.xlane.f32.xlu0 %v3163
        %v3165 = vpop.xlane.xlu0 %3164
        %v3166 = vsel %vm1167, %v3118, 0.0
        %3167 = vadd.xlane.f32.xlu0 %v3166
        %v3168 = vpop.xlane.xlu0 %3167
        %v3169 = vmul.f32 %v3123, %v2478
        %v3170 = vmul.f32 %v3126, %v2478
        %v3171 = vmul.f32 %v3129, %v2478
        %v3172 = vmul.f32 %v3132, %v2478
        %v3173 = vmul.f32 %v3135, %v2478
        %v3174 = vmul.f32 %v3138, %v2478
        %v3175 = vmul.f32 %v3141, %v2478
        %v3176 = vmul.f32 %v3144, %v2478
        %v3177 = vmul.f32 %v3147, %v2478
        %v3178 = vmul.f32 %v3150, %v2478
        %v3179 = vmul.f32 %v3153, %v2478
        %v3180 = vmul.f32 %v3156, %v2478
        %v3181 = vmul.f32 %v3159, %v2478
        %v3182 = vmul.f32 %v3162, %v2478
        %v3183 = vmul.f32 %v3165, %v2478
        %v3184 = vmul.f32 %v3168, %v2478
        %v3185 = vsub.f32 %v3103, %v3169
        %v3186 = vsub.f32 %v3104, %v3170
        %v3187 = vsub.f32 %v3105, %v3171
        %v3188 = vsub.f32 %v3106, %v3172
        %v3189 = vsub.f32 %v3107, %v3173
        %v3190 = vsub.f32 %v3108, %v3174
        %v3191 = vsub.f32 %v3109, %v3175
        %v3192 = vsub.f32 %v3110, %v3176
        %v3193 = vsub.f32 %v3111, %v3177
        %v3194 = vsub.f32 %v3112, %v3178
        %v3195 = vsub.f32 %v3113, %v3179
        %v3196 = vsub.f32 %v3114, %v3180
        %v3197 = vsub.f32 %v3115, %v3181
        %v3198 = vsub.f32 %v3116, %v3182
        %v3199 = vsub.f32 %v3117, %v3183
        %v3200 = vsub.f32 %v3118, %v3184
        %v3201 = vmul.f32 %v3185, %v3185
        %v3202 = vmul.f32 %v3186, %v3186
        %v3203 = vmul.f32 %v3187, %v3187
        %v3204 = vmul.f32 %v3188, %v3188
        %v3205 = vmul.f32 %v3189, %v3189
        %v3206 = vmul.f32 %v3190, %v3190
        %v3207 = vmul.f32 %v3191, %v3191
        %v3208 = vmul.f32 %v3192, %v3192
        %v3209 = vmul.f32 %v3193, %v3193
        %v3210 = vmul.f32 %v3194, %v3194
        %v3211 = vmul.f32 %v3195, %v3195
        %v3212 = vmul.f32 %v3196, %v3196
        %v3213 = vmul.f32 %v3197, %v3197
        %v3214 = vmul.f32 %v3198, %v3198
        %v3215 = vmul.f32 %v3199, %v3199
        %v3216 = vmul.f32 %v3200, %v3200
        %v3217 = vsel %vm1167, %v3201, 0.0
        %3218 = vadd.xlane.f32.xlu0 %v3217
        %v3219 = vpop.xlane.xlu0 %3218
        %v3220 = vsel %vm1167, %v3202, 0.0
        %3221 = vadd.xlane.f32.xlu0 %v3220
        %v3222 = vpop.xlane.xlu0 %3221
        %v3223 = vsel %vm1167, %v3203, 0.0
        %3224 = vadd.xlane.f32.xlu0 %v3223
        %v3225 = vpop.xlane.xlu0 %3224
        %v3226 = vsel %vm1167, %v3204, 0.0
        %3227 = vadd.xlane.f32.xlu0 %v3226
        %v3228 = vpop.xlane.xlu0 %3227
        %v3229 = vsel %vm1167, %v3205, 0.0
        %3230 = vadd.xlane.f32.xlu0 %v3229
        %v3231 = vpop.xlane.xlu0 %3230
        %v3232 = vsel %vm1167, %v3206, 0.0
        %3233 = vadd.xlane.f32.xlu0 %v3232
        %v3234 = vpop.xlane.xlu0 %3233
        %v3235 = vsel %vm1167, %v3207, 0.0
        %3236 = vadd.xlane.f32.xlu0 %v3235
        %v3237 = vpop.xlane.xlu0 %3236
        %v3238 = vsel %vm1167, %v3208, 0.0
        %3239 = vadd.xlane.f32.xlu0 %v3238
        %v3240 = vpop.xlane.xlu0 %3239
        %v3241 = vsel %vm1167, %v3209, 0.0
        %3242 = vadd.xlane.f32.xlu0 %v3241
        %v3243 = vpop.xlane.xlu0 %3242
        %v3244 = vsel %vm1167, %v3210, 0.0
        %3245 = vadd.xlane.f32.xlu0 %v3244
        %v3246 = vpop.xlane.xlu0 %3245
        %v3247 = vsel %vm1167, %v3211, 0.0
        %3248 = vadd.xlane.f32.xlu0 %v3247
        %v3249 = vpop.xlane.xlu0 %3248
        %v3250 = vsel %vm1167, %v3212, 0.0
        %3251 = vadd.xlane.f32.xlu0 %v3250
        %v3252 = vpop.xlane.xlu0 %3251
        %v3253 = vsel %vm1167, %v3213, 0.0
        %3254 = vadd.xlane.f32.xlu0 %v3253
        %v3255 = vpop.xlane.xlu0 %3254
        %v3256 = vsel %vm1167, %v3214, 0.0
        %3257 = vadd.xlane.f32.xlu0 %v3256
        %v3258 = vpop.xlane.xlu0 %3257
        %v3259 = vsel %vm1167, %v3215, 0.0
        %3260 = vadd.xlane.f32.xlu0 %v3259
        %v3261 = vpop.xlane.xlu0 %3260
        %v3262 = vsel %vm1167, %v3216, 0.0
        %3263 = vadd.xlane.f32.xlu0 %v3262
        %v3264 = vpop.xlane.xlu0 %3263
        %v3265 = vmul.f32 %v3219, %v2478
        %v3266 = vmul.f32 %v3222, %v2478
        %v3267 = vmul.f32 %v3225, %v2478
        %v3268 = vmul.f32 %v3228, %v2478
        %v3269 = vmul.f32 %v3231, %v2478
        %v3270 = vmul.f32 %v3234, %v2478
        %v3271 = vmul.f32 %v3237, %v2478
        %v3272 = vmul.f32 %v3240, %v2478
        %v3273 = vmul.f32 %v3243, %v2478
        %v3274 = vmul.f32 %v3246, %v2478
        %v3275 = vmul.f32 %v3249, %v2478
        %v3276 = vmul.f32 %v3252, %v2478
        %v3277 = vmul.f32 %v3255, %v2478
        %v3278 = vmul.f32 %v3258, %v2478
        %v3279 = vmul.f32 %v3261, %v2478
        %v3280 = vmul.f32 %v3264, %v2478
        %v3281 = vadd.f32 %v3265, 1e-05
        %v3282 = vadd.f32 %v3266, 1e-05
        %v3283 = vadd.f32 %v3267, 1e-05
        %v3284 = vadd.f32 %v3268, 1e-05
        %v3285 = vadd.f32 %v3269, 1e-05
        %v3286 = vadd.f32 %v3270, 1e-05
        %v3287 = vadd.f32 %v3271, 1e-05
        %v3288 = vadd.f32 %v3272, 1e-05
        %v3289 = vadd.f32 %v3273, 1e-05
        %v3290 = vadd.f32 %v3274, 1e-05
        %v3291 = vadd.f32 %v3275, 1e-05
        %v3292 = vadd.f32 %v3276, 1e-05
        %v3293 = vadd.f32 %v3277, 1e-05
        %v3294 = vadd.f32 %v3278, 1e-05
        %v3295 = vadd.f32 %v3279, 1e-05
        %v3296 = vadd.f32 %v3280, 1e-05
        %v3297 = vrsqrt.pop %v3281
        %v3298 = vrsqrt.pop %v3282
        %v3299 = vrsqrt.pop %v3283
        %v3300 = vrsqrt.pop %v3284
        %v3301 = vrsqrt.pop %v3285
        %v3302 = vrsqrt.pop %v3286
        %v3303 = vrsqrt.pop %v3287
        %v3304 = vrsqrt.pop %v3288
        %v3305 = vrsqrt.pop %v3289
        %v3306 = vrsqrt.pop %v3290
        %v3307 = vrsqrt.pop %v3291
        %v3308 = vrsqrt.pop %v3292
        %v3309 = vrsqrt.pop %v3293
        %v3310 = vrsqrt.pop %v3294
        %v3311 = vrsqrt.pop %v3295
        %v3312 = vrsqrt.pop %v3296
        %v3313 = vmul.f32 %v3185, %v3297
        %v3314 = vmul.f32 %v3186, %v3298
        %v3315 = vmul.f32 %v3187, %v3299
        %v3316 = vmul.f32 %v3188, %v3300
        %v3317 = vmul.f32 %v3189, %v3301
        %v3318 = vmul.f32 %v3190, %v3302
        %v3319 = vmul.f32 %v3191, %v3303
        %v3320 = vmul.f32 %v3192, %v3304
        %v3321 = vmul.f32 %v3193, %v3305
        %v3322 = vmul.f32 %v3194, %v3306
        %v3323 = vmul.f32 %v3195, %v3307
        %v3324 = vmul.f32 %v3196, %v3308
        %v3325 = vmul.f32 %v3197, %v3309
        %v3326 = vmul.f32 %v3198, %v3310
        %v3327 = vmul.f32 %v3199, %v3311
        %v3328 = vmul.f32 %v3200, %v3312
        %v3330 = vlaneseq
        %v3331 = vshrl.u32 %v3330, 7
        %v3332 = vsub.s32 0, %v3331
        %v3333 = vrot.slane %v3119, %v3332
        %v3335 = vmul.f32 %v3313, %v3333
        %v3336 = vmul.f32 %v3314, %v3333
        %v3337 = vmul.f32 %v3315, %v3333
        %v3338 = vmul.f32 %v3316, %v3333
        %v3339 = vmul.f32 %v3317, %v3333
        %v3340 = vmul.f32 %v3318, %v3333
        %v3341 = vmul.f32 %v3319, %v3333
        %v3342 = vmul.f32 %v3320, %v3333
        %v3343 = vmul.f32 %v3321, %v3333
        %v3344 = vmul.f32 %v3322, %v3333
        %v3345 = vmul.f32 %v3323, %v3333
        %v3346 = vmul.f32 %v3324, %v3333
        %v3347 = vmul.f32 %v3325, %v3333
        %v3348 = vmul.f32 %v3326, %v3333
        %v3349 = vmul.f32 %v3327, %v3333
        %v3350 = vmul.f32 %v3328, %v3333
        %v3352 = vlaneseq
        %v3353 = vshrl.u32 %v3352, 7
        %v3354 = vsub.s32 0, %v3353
        %v3355 = vrot.slane %v3120, %v3354
        %v3357 = vadd.f32 %v3335, %v3355
        %v3358 = vadd.f32 %v3336, %v3355
        %v3359 = vadd.f32 %v3337, %v3355
        %v3360 = vadd.f32 %v3338, %v3355
        %v3361 = vadd.f32 %v3339, %v3355
        %v3362 = vadd.f32 %v3340, %v3355
        %v3363 = vadd.f32 %v3341, %v3355
        %v3364 = vadd.f32 %v3342, %v3355
        %v3365 = vadd.f32 %v3343, %v3355
        %v3366 = vadd.f32 %v3344, %v3355
        %v3367 = vadd.f32 %v3345, %v3355
        %v3368 = vadd.f32 %v3346, %v3355
        %v3369 = vadd.f32 %v3347, %v3355
        %v3370 = vadd.f32 %v3348, %v3355
        %v3371 = vadd.f32 %v3349, %v3355
        %v3372 = vadd.f32 %v3350, %v3355
        %3373 = vst.msk [vmem:[%s960] sm:$0xff] %vm1167, %v3357
        %3374 = vst.msk [vmem:[%s960 + $0x8] sm:$0xff] %vm1167, %v3358
        %3375 = vst.msk [vmem:[%s960 + $0x10] sm:$0xff] %vm1167, %v3359
        %3376 = vst.msk [vmem:[%s960 + $0x18] sm:$0xff] %vm1167, %v3360
        %3377 = vst.msk [vmem:[%s960 + $0x20] sm:$0xff] %vm1167, %v3361
        %3378 = vst.msk [vmem:[%s960 + $0x28] sm:$0xff] %vm1167, %v3362
        %3379 = vst.msk [vmem:[%s960 + $0x30] sm:$0xff] %vm1167, %v3363
        %3380 = vst.msk [vmem:[%s960 + $0x38] sm:$0xff] %vm1167, %v3364
        %3381 = vst.msk [vmem:[%s960 + $0x40] sm:$0xff] %vm1167, %v3365
        %3382 = vst.msk [vmem:[%s960 + $0x48] sm:$0xff] %vm1167, %v3366
        %3383 = vst.msk [vmem:[%s960 + $0x50] sm:$0xff] %vm1167, %v3367
        %3384 = vst.msk [vmem:[%s960 + $0x58] sm:$0xff] %vm1167, %v3368
        %3385 = vst.msk [vmem:[%s960 + $0x60] sm:$0xff] %vm1167, %v3369
        %3386 = vst.msk [vmem:[%s960 + $0x68] sm:$0xff] %vm1167, %v3370
        %3387 = vst.msk [vmem:[%s960 + $0x70] sm:$0xff] %vm1167, %v3371
        %3388 = vst.msk [vmem:[%s960 + $0x78] sm:$0xff] %vm1167, %v3372
        %s3389 = sand.u32 %s703, 1
        %s3390 = scalar_lea.sflag [#allocation3], %s3389
        %s3391 = sand.u32 %s703, 1
        %s3392 = smul.addr %s3391, 8
        %s3393 = scalar_lea.vmem [#allocation2], %s3392
        %s3394 = smul.u32 16, %s76
        %p3395 = scmp.lt.s32.totalorder %s3394, 31
        %s3396 = scalar_select %p3395, %s3394, 31
        %s3397 = smul.addr %s3396, 8
        %s3398 = scalar_lea.vmem %s61, %s3397
        // Predicated region
        $region137: #{tpu_custom_call.1} parent=135 // pred_check
          %p3399 = pneg %p713
        $region138: #{tpu_custom_call.1} parent=135 // pred_check_branch
          %3401 = sbr.rel (%p3399) target = $region140
        $region139: #{tpu_custom_call.1} parent=135 // pred_region
          %s3403 = ssub.s32 128, 128
          %3404 = vsyncadd %s3390, %s3403
          %s3405 = smul.addr %s76, 128
          %s3406 = scalar_lea.hbm %s59, %s3405
          %s3408 = sshll.u32 %s3393, 4
          %s3409 = int_to_ptr.vmem [resolvable:$true] %s3408
          %3411 = dma.vmem_to_hbm [thread:$0]  %s3409, 128, %s3406, %s3390
        $region140: #{tpu_custom_call.1} parent=135 // pred_fallthru
          _
        // Predicated region
        $region141: #{tpu_custom_call.1} parent=135 // pred_check
          %p3412 = pneg %p739
        $region142: #{tpu_custom_call.1} parent=135 // pred_check_branch
          %3414 = sbr.rel (%p3412) target = $region144
        $region143: #{tpu_custom_call.1} parent=135 // pred_region
          %s3415 = smul.u32 16, %s76
        $region144: #{tpu_custom_call.1} parent=135 // pred_fallthru
          _
      $region136: #{tpu_custom_call.1} parent=5 // pred_fallthru
        _
      %p3416 = scmp.le.s32.totalorder 2, %s71
      // Predicated region
      $region145: #{tpu_custom_call.1} parent=5 // pred_check
        %p3417 = pneg %p3416
      $region146: #{tpu_custom_call.1} parent=5 // pred_check_branch
        %3419 = sbr.rel (%p3417) target = $region148
      $region147: #{tpu_custom_call.1} parent=5 // pred_region
        %s3420 = ssub.s32 %s71, 2
        // Predicated region
        $region149: #{tpu_custom_call.1} parent=147 // pred_check
          %p3421 = pneg %p719
        $region150: #{tpu_custom_call.1} parent=147 // pred_check_branch
          %3423 = sbr.rel (%p3421) target = $region152
        $region151: #{tpu_custom_call.1} parent=147 // pred_region
          %s3424 = sand.u32 %s704, 1
          %s3425 = scalar_lea.sflag [#allocation3], %s3424
          %s3426 = sand.u32 %s704, 1
          %s3427 = smul.addr %s3426, 8
          %s3428 = scalar_lea.vmem [#allocation2], %s3427
          %3429 = dma.done %s3425, 128
        $region152: #{tpu_custom_call.1} parent=147 // pred_fallthru
          _
        // Predicated region
        $region153: #{tpu_custom_call.1} parent=147 // pred_check
          %p3430 = pneg %p745
        $region154: #{tpu_custom_call.1} parent=147 // pred_check_branch
          %3432 = sbr.rel (%p3430) target = $region156
        $region155: #{tpu_custom_call.1} parent=147 // pred_region
          %s3433 = smul.u32 16, %s77
          %p3434 = scmp.lt.s32.totalorder %s3433, 31
          %s3435 = scalar_select %p3434, %s3433, 31
          %s3436 = smul.addr %s3435, 8
          %s3437 = scalar_lea.vmem %s61, %s3436
        $region156: #{tpu_custom_call.1} parent=147 // pred_fallthru
          _
      $region148: #{tpu_custom_call.1} parent=5 // pred_fallthru
        _
    $region6: #{tpu_custom_call.1} parent=1 // loop_footer
      %s75 = sadd.s32 1, %s71
    $region7: #{tpu_custom_call.1} parent=1 // loop_footer_branch
      %70 = sbr.rel target = $region3
    $region8: #{tpu_custom_call.1} parent=1 // loop_exit
      _
    %3438 = vsyncpa [#allocation3], 1
    %s3439 = scalar_lea.sflag [#allocation3], 1
    %3440 = vsyncpa %s3439, 1

</llo_original>
